<compile_context>
chip_gen: v5e
topology: v5e:2x2
jax: 0.10.0
libtpu: 0.0.40
codegen_flags: <defaults>
</compile_context>

<pallas_src>
import functools
import math

import jax
import jax.numpy as jnp
from jax import lax
from jax.experimental import pallas as pl
from jax.experimental.pallas import tpu as pltpu

LN_EPS = 1e-5


# ----------------------------- in-kernel helpers -----------------------------

def _normalize(v):
    # LayerNorm without the affine part (gamma/beta are folded into the
    # downstream weights at trace time).  Biased variance, eps=1e-5.
    mu = jnp.mean(v, axis=-1, keepdims=True)
    var = jnp.mean(jnp.square(v - mu), axis=-1, keepdims=True)
    return (v - mu) * lax.rsqrt(var + LN_EPS)


def _gelu_tanh(x):
    # TODO(synk): torch nn.GELU defaults to the exact erf form; Mosaic has no
    # native erf lowering, so use the tanh approximation (tanh lowers to the
    # EUP slot; |err| << 1e-3 at these activation magnitudes).
    c = math.sqrt(2.0 / math.pi)
    return 0.5 * x * (1.0 + jnp.tanh(c * (x + 0.044715 * (x * x * x))))


# ------------------------------- fused kernel --------------------------------

def _block_ref_kernel(x_ref, ref_ref,
                      wq_ref, qb_ref, wkv_ref, kvb_ref, wp_ref, bp_ref,
                      w1_ref, b1_ref, dw_ref, dwb_ref, w2_ref, b2_ref,
                      o_ref, pad_ref, *, num_heads, W, pad):
    x = x_ref[0].astype(jnp.float32)       # (N, C)
    r = ref_ref[0].astype(jnp.float32)     # (N, C)
    N, C = x.shape
    hd = C // num_heads

    # ------------------ stage 1: attention + residual ------------------
    # norm1 / norm1_Ref: affine folded into wq / wkv -> only normalize here.
    xn = _normalize(x).astype(jnp.bfloat16)
    rn = _normalize(r).astype(jnp.bfloat16)

    # Two lane-dense projection matmuls (scale + LN gamma folded into wq,
    # LN beta folded into qb/kvb).  bf16 operands, f32 accumulation.
    q = (jnp.dot(xn, wq_ref[...], preferred_element_type=jnp.float32)
         + qb_ref[...]).astype(jnp.bfloat16)                       # (N, C)
    kv = (jnp.dot(rn, wkv_ref[...], preferred_element_type=jnp.float32)
          + kvb_ref[...]).astype(jnp.bfloat16)                     # (N, 2C)

    # Per-head attention on static lane slices of the fused q/kv.
    # NOTE(perf review): the ((1,),(1,)) contraction relies on Mosaic's
    # transposed-rhs path; at hd=8 this measured fine, so no explicit
    # shared k-transpose is emitted.
    o_parts = []
    for h in range(num_heads):
        qh = q[:, h * hd:(h + 1) * hd]                             # (N, hd)
        kh = kv[:, h * hd:(h + 1) * hd]                            # (N, hd)
        vh = kv[:, C + h * hd:C + (h + 1) * hd]                    # (N, hd)

        s = lax.dot_general(qh, kh, (((1,), (1,)), ((), ())),
                            preferred_element_type=jnp.float32)    # (N, N)
        s = s - jnp.max(s, axis=-1, keepdims=True)
        p = jnp.exp(s)
        p = p * pl.reciprocal(jnp.sum(p, axis=-1, keepdims=True), approx=True)
        o_parts.append(jnp.dot(p.astype(jnp.bfloat16), vh,
                               preferred_element_type=jnp.float32))  # (N, hd)

    # Single output projection over the concatenated heads.
    o_cat = jnp.concatenate(o_parts, axis=-1).astype(jnp.bfloat16)   # (N, C)
    attn_out = jnp.dot(o_cat, wp_ref[...],
                       preferred_element_type=jnp.float32) + bp_ref[...]
    x1 = x + attn_out                                                # residual

    # --------------------- stage 2: MLP + residual ---------------------
    xn2 = _normalize(x1).astype(jnp.bfloat16)        # norm2 affine folded in w1
    h1 = (jnp.dot(xn2, w1_ref[...],
                  preferred_element_type=jnp.float32) + b1_ref[...])  # (N, Hd)
    Hd = h1.shape[1]

    # Depthwise 3x3 conv (stride 1, pad 1) over the (H, W) token grid, done in
    # token space: out[n] = sum_{dy,dx} w[dy,dx] * h1[n + dy*W + dx].
    # h1 is written once into a zero-padded VMEM scratch; each tap is a static
    # slice.  Row out-of-range falls into the zero padding automatically;
    # column wrap is masked on the OUTPUT column index (2 small masks).
    pad_ref[0:pad, :] = jnp.zeros((pad, Hd), jnp.float32)
    pad_ref[pad + N:, :] = jnp.zeros((pad, Hd), jnp.float32)
    pad_ref[pad:pad + N, :] = h1

    col = lax.broadcasted_iota(jnp.int32, (N, 1), 0) % W
    left_edge = col == 0          # dx = -1 tap invalid at output col 0
    right_edge = col == W - 1     # dx = +1 tap invalid at output col W-1

    dw = dw_ref[...]              # (9, Hd)
    acc = h1 * dw[4:5, :]         # center tap (dy=0, dx=0), no mask needed
    for dy in (-1, 0, 1):
        for dx in (-1, 0, 1):
            if dy == 0 and dx == 0:
                continue
            s_off = dy * W + dx
            widx = (dy + 1) * 3 + (dx + 1)
            tap = dw[widx:widx + 1, :]                              # (1, Hd)
            v = pad_ref[pad + s_off:pad + s_off + N, :]             # (N, Hd)
            if dx == -1:
                v = jnp.where(left_edge, 0.0, v)
            elif dx == 1:
                v = jnp.where(right_edge, 0.0, v)
            acc = acc + v * tap
    conv = acc + dwb_ref[...]

    act = _gelu_tanh(conv).astype(jnp.bfloat16)
    mlp_out = jnp.dot(act, w2_ref[...],
                      preferred_element_type=jnp.float32) + b2_ref[...]
    o_ref[0] = (x1 + mlp_out).astype(o_ref.dtype)                    # residual


# --------------------------------- wrapper -----------------------------------

def block_ref_forward(x, ref, H, W, params, num_heads):
    B, N, C = x.shape
    assert N == H * W and C % num_heads == 0
    hd = C // num_heads
    scale = hd ** (-0.5)
    Hd = params["w1"].shape[1]
    bf16 = jnp.bfloat16
    f32 = jnp.float32

    # ---------------- trace-time weight folding (zero runtime cost) ----------
    g1, b1 = params["ln1_g"][0].astype(f32), params["ln1_b"][0].astype(f32)
    gr, br = params["lnr_g"][0].astype(f32), params["lnr_b"][0].astype(f32)
    g2, b2 = params["ln2_g"][0].astype(f32), params["ln2_b"][0].astype(f32)

    wq = params["wq"].astype(f32)     # (C, C)
    wkv = params["wkv"].astype(f32)   # (C, 2C)
    w1 = params["w1"].astype(f32)     # (C, Hd)

    # q(x)   = norm(x) @ (diag(g1)·Wq·scale) + (b1 @ Wq)·scale
    # kv(r)  = norm(r) @ (diag(gr)·Wkv)      + (br @ Wkv)
    # fc1(x1)= norm(x1)@ (diag(g2)·W1)       + (b2 @ W1 + fc1.bias)
    wq_f = ((g1[:, None] * wq) * scale).astype(bf16)
    qb = ((b1 @ wq) * scale).reshape(1, C).astype(f32)
    wkv_f = (gr[:, None] * wkv).astype(bf16)
    kvb = (br @ wkv).reshape(1, 2 * C).astype(f32)
    w1_f = (g2[:, None] * w1).astype(bf16)
    b1_f = (b2 @ w1 + params["b1"][0]).reshape(1, Hd).astype(f32)

    wp = params["wp"].astype(bf16)
    w2 = params["w2"].astype(bf16)

    pad = -(-(W + 1) // 8) * 8        # >= W+1, rounded up to a sublane multiple

    operands = (x, ref,
                wq_f, qb, wkv_f, kvb, wp, params["bp"].astype(f32),
                w1_f, b1_f, params["dw"].astype(f32), params["dwb"].astype(f32),
                w2, params["b2"].astype(f32))

    tok_spec = pl.BlockSpec((1, N, C), lambda b: (b, 0, 0))

    def full(arr):
        nd = arr.ndim
        return pl.BlockSpec(arr.shape, lambda b, _nd=nd: (0,) * _nd)

    flops = 2 * B * N * (3 * C * C      # fused q + kv projections
                         + 2 * N * C    # scores + attn @ v (all heads)
                         + C * C        # output projection
                         + 2 * C * Hd   # fc1 + fc2
                         + 9 * Hd)      # depthwise 3x3
    transcendentals = B * (num_heads * N * N + N * Hd)
    bytes_accessed = int(sum(a.size * a.dtype.itemsize for a in operands)
                         + B * N * C * x.dtype.itemsize)

    fn = pl.pallas_call(
        functools.partial(_block_ref_kernel, num_heads=num_heads, W=W, pad=pad),
        out_shape=jax.ShapeDtypeStruct((B, N, C), x.dtype),
        grid=(B,),
        in_specs=[tok_spec, tok_spec] + [full(a) for a in operands[2:]],
        out_specs=tok_spec,
        scratch_shapes=[pltpu.VMEM((N + 2 * pad, Hd), jnp.float32)],
        # "parallel" so v7x's two TensorCores split the batch; on single-TC
        # v5e/v6e this is just a B-step serial loop (~0.35 us/step overhead).
        compiler_params=pltpu.CompilerParams(dimension_semantics=("parallel",)),
        cost_estimate=pl.CostEstimate(flops=int(flops),
                                      transcendentals=int(transcendentals),
                                      bytes_accessed=bytes_accessed),
    )
    return fn(*operands)


# ----------------------------- pure-JAX reference ----------------------------

def reference_forward(x, ref, H, W, p, num_heads):
    B, N, C = x.shape
    hd = C // num_heads
    scale = hd ** (-0.5)

    def ln(v, g, b):
        mu = v.mean(-1, keepdims=True)
        var = ((v - mu) ** 2).mean(-1, keepdims=True)
        return (v - mu) / jnp.sqrt(var + LN_EPS) * g[0] + b[0]

    xn = ln(x, p["ln1_g"], p["ln1_b"])
    rn = ln(ref, p["lnr_g"], p["lnr_b"])
    q = xn @ p["wq"]
    kv = rn @ p["wkv"]
    k, v = kv[..., :C], kv[..., C:]
    qh = q.reshape(B, N, num_heads, hd).transpose(0, 2, 1, 3)
    kh = k.reshape(B, N, num_heads, hd).transpose(0, 2, 1, 3)
    vh = v.reshape(B, N, num_heads, hd).transpose(0, 2, 1, 3)
    attn = jax.nn.softmax(jnp.einsum('bhnd,bhmd->bhnm', qh, kh) * scale, axis=-1)
    o = jnp.einsum('bhnm,bhmd->bhnd', attn, vh).transpose(0, 2, 1, 3).reshape(B, N, C)
    o = o @ p["wp"] + p["bp"][0]
    x = x + o

    xn2 = ln(x, p["ln2_g"], p["ln2_b"])
    h1 = xn2 @ p["w1"] + p["b1"][0]
    Hd = h1.shape[-1]
    img = h1.reshape(B, H, W, Hd)
    kern = p["dw"].reshape(3, 3, Hd)[:, :, None, :]   # HWIO, depthwise
    conv = lax.conv_general_dilated(
        img, kern, (1, 1), ((1, 1), (1, 1)),
        dimension_numbers=('NHWC', 'HWIO', 'NHWC'),
        feature_group_count=Hd) + p["dwb"][0]
    act = 0.5 * conv * (1.0 + jax.scipy.special.erf(conv / math.sqrt(2.0)))
    out = act.reshape(B, N, Hd) @ p["w2"] + p["b2"][0]
    return x + out


# ----------------------------------- main ------------------------------------

if __name__ == "__main__":
    B, H, W, C = 2, 8, 8, 32
    N = H * W
    num_heads = 4
    mlp_ratio = 4.0
    Hd = int(C * mlp_ratio)

    key = jax.random.PRNGKey(0)
    ks = jax.random.split(key, 8)

    def normal(k, shape, std):
        return (std * jax.random.normal(k, shape)).astype(jnp.float32)

    # Deterministic synthetic parameters (shapes follow Block_Ref.__init__,
    # qkv_bias=False; Linear weights stored pre-transposed as (in, out)).
    params = dict(
        ln1_g=jnp.ones((1, C), jnp.float32), ln1_b=jnp.zeros((1, C), jnp.float32),
        lnr_g=jnp.ones((1, C), jnp.float32), lnr_b=jnp.zeros((1, C), jnp.float32),
        ln2_g=jnp.ones((1, C), jnp.float32), ln2_b=jnp.zeros((1, C), jnp.float32),
        wq=normal(ks[0], (C, C), 0.02),
        wkv=normal(ks[1], (C, 2 * C), 0.02),
        wp=normal(ks[2], (C, C), 0.02), bp=jnp.zeros((1, C), jnp.float32),
        w1=normal(ks[3], (C, Hd), 0.02), b1=jnp.zeros((1, Hd), jnp.float32),
        dw=normal(ks[4], (9, Hd), math.sqrt(2.0 / 9.0)),    # dwconv fan_out = 9
        dwb=jnp.zeros((1, Hd), jnp.float32),
        w2=normal(ks[5], (Hd, C), 0.02), b2=jnp.zeros((1, C), jnp.float32),
    )

    x = jax.random.normal(ks[6], (B, N, C), jnp.float32)
    ref = jax.random.normal(ks[7], (B, N, C), jnp.float32)

    y = block_ref_forward(x, ref, H, W, params, num_heads)
    y = jax.block_until_ready(y)

    with jax.default_matmul_precision("float32"):
        y_ref = jax.block_until_ready(
            reference_forward(x, ref, H, W, params, num_heads))

    assert y.shape == (B, N, C)
    assert bool(jnp.all(jnp.isfinite(y)))
    # Tolerance accounts for bf16 matmul operands (f32 accumulation) and the
    # tanh-GELU approximation; observed error is well below this.
    assert bool(jnp.allclose(y, y_ref, atol=3e-3, rtol=3e-3)), \
        float(jnp.max(jnp.abs(y - y_ref)))

    print("KERNEL_OK")
</pallas_src>

<mosaic_0001>
module attributes {stable_mosaic.version = 11 : i64} {
  func.func @_block_ref_kernel(%arg0: i32, %arg1: memref<1x64x32xf32, #tpu.memory_space<vmem>>, %arg2: memref<1x64x32xf32, #tpu.memory_space<vmem>>, %arg3: memref<32x32xbf16, #tpu.memory_space<vmem>>, %arg4: memref<1x32xf32, #tpu.memory_space<vmem>>, %arg5: memref<32x64xbf16, #tpu.memory_space<vmem>>, %arg6: memref<1x64xf32, #tpu.memory_space<vmem>>, %arg7: memref<32x32xbf16, #tpu.memory_space<vmem>>, %arg8: memref<1x32xf32, #tpu.memory_space<vmem>>, %arg9: memref<32x128xbf16, #tpu.memory_space<vmem>>, %arg10: memref<1x128xf32, #tpu.memory_space<vmem>>, %arg11: memref<9x128xf32, #tpu.memory_space<vmem>>, %arg12: memref<1x128xf32, #tpu.memory_space<vmem>>, %arg13: memref<128x32xbf16, #tpu.memory_space<vmem>>, %arg14: memref<1x32xf32, #tpu.memory_space<vmem>>, %arg15: memref<1x64x32xf32, #tpu.memory_space<vmem>>, %arg16: memref<96x128xf32, #tpu.memory_space<vmem>>) attributes {dimension_semantics = [#tpu.dimension_semantics<parallel>], iteration_bounds = array<i64: 2>, scalar_prefetch = 0 : i64, scratch_operands = 1 : i64, tpu.core_type = #tpu.core_type<tc>, window_params = [{transform_indices = @transform_0, window_bounds = array<i64: 1, 64, 32>}, {transform_indices = @transform_1, window_bounds = array<i64: 1, 64, 32>}, {pipeline_mode = #tpu.pipeline_mode<synchronous>, transform_indices = @transform_2, window_bounds = array<i64: 32, 32>}, {pipeline_mode = #tpu.pipeline_mode<synchronous>, transform_indices = @transform_3, window_bounds = array<i64: 1, 32>}, {pipeline_mode = #tpu.pipeline_mode<synchronous>, transform_indices = @transform_4, window_bounds = array<i64: 32, 64>}, {pipeline_mode = #tpu.pipeline_mode<synchronous>, transform_indices = @transform_5, window_bounds = array<i64: 1, 64>}, {pipeline_mode = #tpu.pipeline_mode<synchronous>, transform_indices = @transform_6, window_bounds = array<i64: 32, 32>}, {pipeline_mode = #tpu.pipeline_mode<synchronous>, transform_indices = @transform_7, window_bounds = array<i64: 1, 32>}, {pipeline_mode = #tpu.pipeline_mode<synchronous>, transform_indices = @transform_8, window_bounds = array<i64: 32, 128>}, {pipeline_mode = #tpu.pipeline_mode<synchronous>, transform_indices = @transform_9, window_bounds = array<i64: 1, 128>}, {pipeline_mode = #tpu.pipeline_mode<synchronous>, transform_indices = @transform_10, window_bounds = array<i64: 9, 128>}, {pipeline_mode = #tpu.pipeline_mode<synchronous>, transform_indices = @transform_11, window_bounds = array<i64: 1, 128>}, {pipeline_mode = #tpu.pipeline_mode<synchronous>, transform_indices = @transform_12, window_bounds = array<i64: 128, 32>}, {pipeline_mode = #tpu.pipeline_mode<synchronous>, transform_indices = @transform_13, window_bounds = array<i64: 1, 32>}, {transform_indices = @transform_14, window_bounds = array<i64: 1, 64, 32>}]} {
    %c0 = arith.constant 0 : index
    %c0_0 = arith.constant 0 : index
    %c0_1 = arith.constant 0 : index
    %0 = vector.load %arg1[%c0, %c0_0, %c0_1] : memref<1x64x32xf32, #tpu.memory_space<vmem>>, vector<1x64x32xf32>
    %1 = vector.shape_cast %0 : vector<1x64x32xf32> to vector<64x32xf32>
    %c0_2 = arith.constant 0 : index
    %c0_3 = arith.constant 0 : index
    %c0_4 = arith.constant 0 : index
    %2 = vector.load %arg2[%c0_2, %c0_3, %c0_4] : memref<1x64x32xf32, #tpu.memory_space<vmem>>, vector<1x64x32xf32>
    %3 = vector.shape_cast %2 : vector<1x64x32xf32> to vector<64x32xf32>
    %cst = arith.constant dense<0.000000e+00> : vector<64xf32>
    %4 = vector.multi_reduction <add>, %1, %cst [1] : vector<64x32xf32> to vector<64xf32>
    %5 = vector.shape_cast %4 : vector<64xf32> to vector<64x1xf32>
    %cst_5 = arith.constant 3.200000e+01 : f32
    %6 = vector.broadcast %cst_5 : f32 to vector<64x1xf32>
    %7 = arith.divf %5, %6 : vector<64x1xf32>
    %8 = vector.broadcast %7 : vector<64x1xf32> to vector<64x32xf32>
    %9 = arith.subf %1, %8 : vector<64x32xf32>
    %10 = arith.mulf %9, %9 : vector<64x32xf32>
    %cst_6 = arith.constant dense<0.000000e+00> : vector<64xf32>
    %11 = vector.multi_reduction <add>, %10, %cst_6 [1] : vector<64x32xf32> to vector<64xf32>
    %12 = vector.shape_cast %11 : vector<64xf32> to vector<64x1xf32>
    %cst_7 = arith.constant 3.200000e+01 : f32
    %13 = vector.broadcast %cst_7 : f32 to vector<64x1xf32>
    %14 = arith.divf %12, %13 : vector<64x1xf32>
    %15 = vector.broadcast %7 : vector<64x1xf32> to vector<64x32xf32>
    %16 = arith.subf %1, %15 : vector<64x32xf32>
    %cst_8 = arith.constant 9.99999974E-6 : f32
    %17 = vector.broadcast %cst_8 : f32 to vector<64x1xf32>
    %18 = arith.addf %14, %17 : vector<64x1xf32>
    %19 = math.rsqrt %18 : vector<64x1xf32>
    %20 = vector.broadcast %19 : vector<64x1xf32> to vector<64x32xf32>
    %21 = arith.mulf %16, %20 : vector<64x32xf32>
    %22 = arith.truncf %21 : vector<64x32xf32> to vector<64x32xbf16>
    %cst_9 = arith.constant dense<0.000000e+00> : vector<64xf32>
    %23 = vector.multi_reduction <add>, %3, %cst_9 [1] : vector<64x32xf32> to vector<64xf32>
    %24 = vector.shape_cast %23 : vector<64xf32> to vector<64x1xf32>
    %cst_10 = arith.constant 3.200000e+01 : f32
    %25 = vector.broadcast %cst_10 : f32 to vector<64x1xf32>
    %26 = arith.divf %24, %25 : vector<64x1xf32>
    %27 = vector.broadcast %26 : vector<64x1xf32> to vector<64x32xf32>
    %28 = arith.subf %3, %27 : vector<64x32xf32>
    %29 = arith.mulf %28, %28 : vector<64x32xf32>
    %cst_11 = arith.constant dense<0.000000e+00> : vector<64xf32>
    %30 = vector.multi_reduction <add>, %29, %cst_11 [1] : vector<64x32xf32> to vector<64xf32>
    %31 = vector.shape_cast %30 : vector<64xf32> to vector<64x1xf32>
    %cst_12 = arith.constant 3.200000e+01 : f32
    %32 = vector.broadcast %cst_12 : f32 to vector<64x1xf32>
    %33 = arith.divf %31, %32 : vector<64x1xf32>
    %34 = vector.broadcast %26 : vector<64x1xf32> to vector<64x32xf32>
    %35 = arith.subf %3, %34 : vector<64x32xf32>
    %cst_13 = arith.constant 9.99999974E-6 : f32
    %36 = vector.broadcast %cst_13 : f32 to vector<64x1xf32>
    %37 = arith.addf %33, %36 : vector<64x1xf32>
    %38 = math.rsqrt %37 : vector<64x1xf32>
    %39 = vector.broadcast %38 : vector<64x1xf32> to vector<64x32xf32>
    %40 = arith.mulf %35, %39 : vector<64x32xf32>
    %41 = arith.truncf %40 : vector<64x32xf32> to vector<64x32xbf16>
    %c0_14 = arith.constant 0 : index
    %c0_15 = arith.constant 0 : index
    %42 = vector.load %arg3[%c0_14, %c0_15] : memref<32x32xbf16, #tpu.memory_space<vmem>>, vector<32x32xbf16>
    %cst_16 = arith.constant dense<0.000000e+00> : vector<64x32xf32>
    %43 = tpu.matmul %22, %42, %cst_16 {dimension_numbers = #tpu.dot_dimension_numbers<[1], [0], [0], [1], [0, 0, 1, 1], [], []>} : vector<64x32xbf16>, vector<32x32xbf16>, vector<64x32xf32> -> vector<64x32xf32>
    %c0_17 = arith.constant 0 : index
    %c0_18 = arith.constant 0 : index
    %44 = vector.load %arg4[%c0_17, %c0_18] : memref<1x32xf32, #tpu.memory_space<vmem>>, vector<1x32xf32>
    %45 = vector.broadcast %44 : vector<1x32xf32> to vector<64x32xf32>
    %46 = arith.addf %43, %45 : vector<64x32xf32>
    %47 = arith.truncf %46 : vector<64x32xf32> to vector<64x32xbf16>
    %c0_19 = arith.constant 0 : index
    %c0_20 = arith.constant 0 : index
    %48 = vector.load %arg5[%c0_19, %c0_20] : memref<32x64xbf16, #tpu.memory_space<vmem>>, vector<32x64xbf16>
    %cst_21 = arith.constant dense<0.000000e+00> : vector<64x64xf32>
    %49 = tpu.matmul %41, %48, %cst_21 {dimension_numbers = #tpu.dot_dimension_numbers<[1], [0], [0], [1], [0, 0, 1, 1], [], []>} : vector<64x32xbf16>, vector<32x64xbf16>, vector<64x64xf32> -> vector<64x64xf32>
    %c0_22 = arith.constant 0 : index
    %c0_23 = arith.constant 0 : index
    %50 = vector.load %arg6[%c0_22, %c0_23] : memref<1x64xf32, #tpu.memory_space<vmem>>, vector<1x64xf32>
    %51 = vector.broadcast %50 : vector<1x64xf32> to vector<64x64xf32>
    %52 = arith.addf %49, %51 : vector<64x64xf32>
    %53 = arith.truncf %52 : vector<64x64xf32> to vector<64x64xbf16>
    %54 = vector.extract_strided_slice %47 {offsets = [0, 0], sizes = [64, 8], strides = [1, 1]} : vector<64x32xbf16> to vector<64x8xbf16>
    %55 = vector.extract_strided_slice %53 {offsets = [0, 0], sizes = [64, 8], strides = [1, 1]} : vector<64x64xbf16> to vector<64x8xbf16>
    %56 = vector.extract_strided_slice %53 {offsets = [0, 32], sizes = [64, 8], strides = [1, 1]} : vector<64x64xbf16> to vector<64x8xbf16>
    %cst_24 = arith.constant dense<0.000000e+00> : vector<64x64xf32>
    %57 = tpu.matmul %54, %55, %cst_24 {dimension_numbers = #tpu.dot_dimension_numbers<[1], [1], [0], [0], [0, 0, 1, 0], [], []>} : vector<64x8xbf16>, vector<64x8xbf16>, vector<64x64xf32> -> vector<64x64xf32>
    %cst_25 = arith.constant dense<0xFF800000> : vector<64xf32>
    %58 = vector.multi_reduction <maximumf>, %57, %cst_25 [1] : vector<64x64xf32> to vector<64xf32>
    %59 = vector.shape_cast %58 : vector<64xf32> to vector<64x1xf32>
    %60 = vector.broadcast %59 : vector<64x1xf32> to vector<64x64xf32>
    %61 = arith.subf %57, %60 : vector<64x64xf32>
    %62 = math.exp %61 : vector<64x64xf32>
    %cst_26 = arith.constant dense<0.000000e+00> : vector<64xf32>
    %63 = vector.multi_reduction <add>, %62, %cst_26 [1] : vector<64x64xf32> to vector<64xf32>
    %64 = vector.shape_cast %63 : vector<64xf32> to vector<64x1xf32>
    %65 = tpu.reciprocal %64 {approx = true} : vector<64x1xf32> -> vector<64x1xf32>
    %66 = vector.broadcast %65 : vector<64x1xf32> to vector<64x64xf32>
    %67 = arith.mulf %62, %66 : vector<64x64xf32>
    %68 = arith.truncf %67 : vector<64x64xf32> to vector<64x64xbf16>
    %cst_27 = arith.constant dense<0.000000e+00> : vector<64x8xf32>
    %69 = tpu.matmul %68, %56, %cst_27 {dimension_numbers = #tpu.dot_dimension_numbers<[1], [0], [0], [1], [0, 0, 1, 1], [], []>} : vector<64x64xbf16>, vector<64x8xbf16>, vector<64x8xf32> -> vector<64x8xf32>
    %70 = vector.extract_strided_slice %47 {offsets = [0, 8], sizes = [64, 8], strides = [1, 1]} : vector<64x32xbf16> to vector<64x8xbf16>
    %71 = vector.extract_strided_slice %53 {offsets = [0, 8], sizes = [64, 8], strides = [1, 1]} : vector<64x64xbf16> to vector<64x8xbf16>
    %72 = vector.extract_strided_slice %53 {offsets = [0, 40], sizes = [64, 8], strides = [1, 1]} : vector<64x64xbf16> to vector<64x8xbf16>
    %cst_28 = arith.constant dense<0.000000e+00> : vector<64x64xf32>
    %73 = tpu.matmul %70, %71, %cst_28 {dimension_numbers = #tpu.dot_dimension_numbers<[1], [1], [0], [0], [0, 0, 1, 0], [], []>} : vector<64x8xbf16>, vector<64x8xbf16>, vector<64x64xf32> -> vector<64x64xf32>
    %cst_29 = arith.constant dense<0xFF800000> : vector<64xf32>
    %74 = vector.multi_reduction <maximumf>, %73, %cst_29 [1] : vector<64x64xf32> to vector<64xf32>
    %75 = vector.shape_cast %74 : vector<64xf32> to vector<64x1xf32>
    %76 = vector.broadcast %75 : vector<64x1xf32> to vector<64x64xf32>
    %77 = arith.subf %73, %76 : vector<64x64xf32>
    %78 = math.exp %77 : vector<64x64xf32>
    %cst_30 = arith.constant dense<0.000000e+00> : vector<64xf32>
    %79 = vector.multi_reduction <add>, %78, %cst_30 [1] : vector<64x64xf32> to vector<64xf32>
    %80 = vector.shape_cast %79 : vector<64xf32> to vector<64x1xf32>
    %81 = tpu.reciprocal %80 {approx = true} : vector<64x1xf32> -> vector<64x1xf32>
    %82 = vector.broadcast %81 : vector<64x1xf32> to vector<64x64xf32>
    %83 = arith.mulf %78, %82 : vector<64x64xf32>
    %84 = arith.truncf %83 : vector<64x64xf32> to vector<64x64xbf16>
    %cst_31 = arith.constant dense<0.000000e+00> : vector<64x8xf32>
    %85 = tpu.matmul %84, %72, %cst_31 {dimension_numbers = #tpu.dot_dimension_numbers<[1], [0], [0], [1], [0, 0, 1, 1], [], []>} : vector<64x64xbf16>, vector<64x8xbf16>, vector<64x8xf32> -> vector<64x8xf32>
    %86 = vector.extract_strided_slice %47 {offsets = [0, 16], sizes = [64, 8], strides = [1, 1]} : vector<64x32xbf16> to vector<64x8xbf16>
    %87 = vector.extract_strided_slice %53 {offsets = [0, 16], sizes = [64, 8], strides = [1, 1]} : vector<64x64xbf16> to vector<64x8xbf16>
    %88 = vector.extract_strided_slice %53 {offsets = [0, 48], sizes = [64, 8], strides = [1, 1]} : vector<64x64xbf16> to vector<64x8xbf16>
    %cst_32 = arith.constant dense<0.000000e+00> : vector<64x64xf32>
    %89 = tpu.matmul %86, %87, %cst_32 {dimension_numbers = #tpu.dot_dimension_numbers<[1], [1], [0], [0], [0, 0, 1, 0], [], []>} : vector<64x8xbf16>, vector<64x8xbf16>, vector<64x64xf32> -> vector<64x64xf32>
    %cst_33 = arith.constant dense<0xFF800000> : vector<64xf32>
    %90 = vector.multi_reduction <maximumf>, %89, %cst_33 [1] : vector<64x64xf32> to vector<64xf32>
    %91 = vector.shape_cast %90 : vector<64xf32> to vector<64x1xf32>
    %92 = vector.broadcast %91 : vector<64x1xf32> to vector<64x64xf32>
    %93 = arith.subf %89, %92 : vector<64x64xf32>
    %94 = math.exp %93 : vector<64x64xf32>
    %cst_34 = arith.constant dense<0.000000e+00> : vector<64xf32>
    %95 = vector.multi_reduction <add>, %94, %cst_34 [1] : vector<64x64xf32> to vector<64xf32>
    %96 = vector.shape_cast %95 : vector<64xf32> to vector<64x1xf32>
    %97 = tpu.reciprocal %96 {approx = true} : vector<64x1xf32> -> vector<64x1xf32>
    %98 = vector.broadcast %97 : vector<64x1xf32> to vector<64x64xf32>
    %99 = arith.mulf %94, %98 : vector<64x64xf32>
    %100 = arith.truncf %99 : vector<64x64xf32> to vector<64x64xbf16>
    %cst_35 = arith.constant dense<0.000000e+00> : vector<64x8xf32>
    %101 = tpu.matmul %100, %88, %cst_35 {dimension_numbers = #tpu.dot_dimension_numbers<[1], [0], [0], [1], [0, 0, 1, 1], [], []>} : vector<64x64xbf16>, vector<64x8xbf16>, vector<64x8xf32> -> vector<64x8xf32>
    %102 = vector.extract_strided_slice %47 {offsets = [0, 24], sizes = [64, 8], strides = [1, 1]} : vector<64x32xbf16> to vector<64x8xbf16>
    %103 = vector.extract_strided_slice %53 {offsets = [0, 24], sizes = [64, 8], strides = [1, 1]} : vector<64x64xbf16> to vector<64x8xbf16>
    %104 = vector.extract_strided_slice %53 {offsets = [0, 56], sizes = [64, 8], strides = [1, 1]} : vector<64x64xbf16> to vector<64x8xbf16>
    %cst_36 = arith.constant dense<0.000000e+00> : vector<64x64xf32>
    %105 = tpu.matmul %102, %103, %cst_36 {dimension_numbers = #tpu.dot_dimension_numbers<[1], [1], [0], [0], [0, 0, 1, 0], [], []>} : vector<64x8xbf16>, vector<64x8xbf16>, vector<64x64xf32> -> vector<64x64xf32>
    %cst_37 = arith.constant dense<0xFF800000> : vector<64xf32>
    %106 = vector.multi_reduction <maximumf>, %105, %cst_37 [1] : vector<64x64xf32> to vector<64xf32>
    %107 = vector.shape_cast %106 : vector<64xf32> to vector<64x1xf32>
    %108 = vector.broadcast %107 : vector<64x1xf32> to vector<64x64xf32>
    %109 = arith.subf %105, %108 : vector<64x64xf32>
    %110 = math.exp %109 : vector<64x64xf32>
    %cst_38 = arith.constant dense<0.000000e+00> : vector<64xf32>
    %111 = vector.multi_reduction <add>, %110, %cst_38 [1] : vector<64x64xf32> to vector<64xf32>
    %112 = vector.shape_cast %111 : vector<64xf32> to vector<64x1xf32>
    %113 = tpu.reciprocal %112 {approx = true} : vector<64x1xf32> -> vector<64x1xf32>
    %114 = vector.broadcast %113 : vector<64x1xf32> to vector<64x64xf32>
    %115 = arith.mulf %110, %114 : vector<64x64xf32>
    %116 = arith.truncf %115 : vector<64x64xf32> to vector<64x64xbf16>
    %cst_39 = arith.constant dense<0.000000e+00> : vector<64x8xf32>
    %117 = tpu.matmul %116, %104, %cst_39 {dimension_numbers = #tpu.dot_dimension_numbers<[1], [0], [0], [1], [0, 0, 1, 1], [], []>} : vector<64x64xbf16>, vector<64x8xbf16>, vector<64x8xf32> -> vector<64x8xf32>
    %118 = tpu.concatenate %69, %85, %101, %117 in 1 : vector<64x8xf32>, vector<64x8xf32>, vector<64x8xf32>, vector<64x8xf32> -> vector<64x32xf32>
    %119 = arith.truncf %118 : vector<64x32xf32> to vector<64x32xbf16>
    %c0_40 = arith.constant 0 : index
    %c0_41 = arith.constant 0 : index
    %120 = vector.load %arg7[%c0_40, %c0_41] : memref<32x32xbf16, #tpu.memory_space<vmem>>, vector<32x32xbf16>
    %cst_42 = arith.constant dense<0.000000e+00> : vector<64x32xf32>
    %121 = tpu.matmul %119, %120, %cst_42 {dimension_numbers = #tpu.dot_dimension_numbers<[1], [0], [0], [1], [0, 0, 1, 1], [], []>} : vector<64x32xbf16>, vector<32x32xbf16>, vector<64x32xf32> -> vector<64x32xf32>
    %c0_43 = arith.constant 0 : index
    %c0_44 = arith.constant 0 : index
    %122 = vector.load %arg8[%c0_43, %c0_44] : memref<1x32xf32, #tpu.memory_space<vmem>>, vector<1x32xf32>
    %123 = vector.broadcast %122 : vector<1x32xf32> to vector<64x32xf32>
    %124 = arith.addf %121, %123 : vector<64x32xf32>
    %125 = arith.addf %1, %124 : vector<64x32xf32>
    %cst_45 = arith.constant dense<0.000000e+00> : vector<64xf32>
    %126 = vector.multi_reduction <add>, %125, %cst_45 [1] : vector<64x32xf32> to vector<64xf32>
    %127 = vector.shape_cast %126 : vector<64xf32> to vector<64x1xf32>
    %cst_46 = arith.constant 3.200000e+01 : f32
    %128 = vector.broadcast %cst_46 : f32 to vector<64x1xf32>
    %129 = arith.divf %127, %128 : vector<64x1xf32>
    %130 = vector.broadcast %129 : vector<64x1xf32> to vector<64x32xf32>
    %131 = arith.subf %125, %130 : vector<64x32xf32>
    %132 = arith.mulf %131, %131 : vector<64x32xf32>
    %cst_47 = arith.constant dense<0.000000e+00> : vector<64xf32>
    %133 = vector.multi_reduction <add>, %132, %cst_47 [1] : vector<64x32xf32> to vector<64xf32>
    %134 = vector.shape_cast %133 : vector<64xf32> to vector<64x1xf32>
    %cst_48 = arith.constant 3.200000e+01 : f32
    %135 = vector.broadcast %cst_48 : f32 to vector<64x1xf32>
    %136 = arith.divf %134, %135 : vector<64x1xf32>
    %137 = vector.broadcast %129 : vector<64x1xf32> to vector<64x32xf32>
    %138 = arith.subf %125, %137 : vector<64x32xf32>
    %cst_49 = arith.constant 9.99999974E-6 : f32
    %139 = vector.broadcast %cst_49 : f32 to vector<64x1xf32>
    %140 = arith.addf %136, %139 : vector<64x1xf32>
    %141 = math.rsqrt %140 : vector<64x1xf32>
    %142 = vector.broadcast %141 : vector<64x1xf32> to vector<64x32xf32>
    %143 = arith.mulf %138, %142 : vector<64x32xf32>
    %144 = arith.truncf %143 : vector<64x32xf32> to vector<64x32xbf16>
    %c0_50 = arith.constant 0 : index
    %c0_51 = arith.constant 0 : index
    %145 = vector.load %arg9[%c0_50, %c0_51] : memref<32x128xbf16, #tpu.memory_space<vmem>>, vector<32x128xbf16>
    %cst_52 = arith.constant dense<0.000000e+00> : vector<64x128xf32>
    %146 = tpu.matmul %144, %145, %cst_52 {dimension_numbers = #tpu.dot_dimension_numbers<[1], [0], [0], [1], [0, 0, 1, 1], [], []>} : vector<64x32xbf16>, vector<32x128xbf16>, vector<64x128xf32> -> vector<64x128xf32>
    %c0_53 = arith.constant 0 : index
    %c0_54 = arith.constant 0 : index
    %147 = vector.load %arg10[%c0_53, %c0_54] : memref<1x128xf32, #tpu.memory_space<vmem>>, vector<1x128xf32>
    %148 = vector.broadcast %147 : vector<1x128xf32> to vector<64x128xf32>
    %149 = arith.addf %146, %148 : vector<64x128xf32>
    %cst_55 = arith.constant 0.000000e+00 : f32
    %150 = vector.broadcast %cst_55 : f32 to vector<16x128xf32>
    %c0_56 = arith.constant 0 : index
    %c0_57 = arith.constant 0 : index
    %151 = vector.load %arg16[%c0_56, %c0_57] : memref<96x128xf32, #tpu.memory_space<vmem>>, vector<16x128xf32>
    tpu.vector_store %arg16[%c0_56, %c0_57], %150 {strides = array<i32>} : memref<96x128xf32, #tpu.memory_space<vmem>>, vector<16x128xf32>,
    %cst_58 = arith.constant 0.000000e+00 : f32
    %152 = vector.broadcast %cst_58 : f32 to vector<16x128xf32>
    %c80 = arith.constant 80 : index
    %c0_59 = arith.constant 0 : index
    %153 = vector.load %arg16[%c80, %c0_59] : memref<96x128xf32, #tpu.memory_space<vmem>>, vector<16x128xf32>
    tpu.vector_store %arg16[%c80, %c0_59], %152 {strides = array<i32>} : memref<96x128xf32, #tpu.memory_space<vmem>>, vector<16x128xf32>,
    %c16 = arith.constant 16 : index
    %c0_60 = arith.constant 0 : index
    %154 = vector.load %arg16[%c16, %c0_60] : memref<96x128xf32, #tpu.memory_space<vmem>>, vector<64x128xf32>
    tpu.vector_store %arg16[%c16, %c0_60], %149 {strides = array<i32>} : memref<96x128xf32, #tpu.memory_space<vmem>>, vector<64x128xf32>,
    %155 = tpu.iota {dimensions = array<i32: 0>} : vector<64x1xi32>
    %c8_i32 = arith.constant 8 : i32
    %c0_i32 = arith.constant 0 : i32
    %156 = arith.cmpi eq, %c8_i32, %c0_i32 : i32
    %c1_i32 = arith.constant 1 : i32
    %157 = arith.select %156, %c1_i32, %c8_i32 : i32
    %158 = vector.broadcast %157 : i32 to vector<64x1xi32>
    %159 = arith.remsi %155, %158 : vector<64x1xi32>
    %c0_i32_61 = arith.constant 0 : i32
    %160 = vector.broadcast %c0_i32_61 : i32 to vector<64x1xi32>
    %161 = arith.cmpi ne, %159, %160 : vector<64x1xi32>
    %c0_i32_62 = arith.constant 0 : i32
    %162 = vector.broadcast %c0_i32_62 : i32 to vector<64x1xi32>
    %163 = arith.cmpi slt, %159, %162 : vector<64x1xi32>
    %c0_i32_63 = arith.constant 0 : i32
    %164 = arith.cmpi slt, %157, %c0_i32_63 : i32
    %165 = vector.broadcast %164 : i1 to vector<64x1xi1>
    %166 = vector.broadcast %165 : vector<64x1xi1> to vector<64x1xi1>
    %167 = arith.xori %163, %166 : vector<64x1xi1>
    %168 = arith.andi %167, %161 : vector<64x1xi1>
    %169 = vector.broadcast %157 : i32 to vector<64x1xi32>
    %170 = arith.addi %159, %169 : vector<64x1xi32>
    %171 = arith.select %168, %170, %159 : vector<64x1xi1>, vector<64x1xi32>
    %c0_i32_64 = arith.constant 0 : i32
    %172 = vector.broadcast %c0_i32_64 : i32 to vector<64x1xi32>
    %173 = arith.cmpi eq, %171, %172 : vector<64x1xi32>
    %c7_i32 = arith.constant 7 : i32
    %174 = vector.broadcast %c7_i32 : i32 to vector<64x1xi32>
    %175 = arith.cmpi eq, %171, %174 : vector<64x1xi32>
    %c0_65 = arith.constant 0 : index
    %c0_66 = arith.constant 0 : index
    %176 = vector.load %arg11[%c0_65, %c0_66] : memref<9x128xf32, #tpu.memory_space<vmem>>, vector<9x128xf32>
    %177 = vector.extract_strided_slice %176 {offsets = [4, 0], sizes = [1, 128], strides = [1, 1]} : vector<9x128xf32> to vector<1x128xf32>
    %178 = vector.broadcast %177 : vector<1x128xf32> to vector<64x128xf32>
    %179 = arith.mulf %149, %178 : vector<64x128xf32>
    %180 = vector.extract_strided_slice %176 {offsets = [0, 0], sizes = [1, 128], strides = [1, 1]} : vector<9x128xf32> to vector<1x128xf32>
    %c7 = arith.constant 7 : index
    %c0_67 = arith.constant 0 : index
    %181 = vector.load %arg16[%c7, %c0_67] : memref<96x128xf32, #tpu.memory_space<vmem>>, vector<64x128xf32>
    %cst_68 = arith.constant 0.000000e+00 : f32
    %182 = vector.shape_cast %173 : vector<64x1xi1> to vector<64x1xi1>
    %183 = vector.broadcast %182 : vector<64x1xi1> to vector<64x128xi1>
    %184 = vector.broadcast %cst_68 : f32 to vector<64x128xf32>
    %185 = arith.select %183, %184, %181 : vector<64x128xi1>, vector<64x128xf32>
    %186 = vector.broadcast %180 : vector<1x128xf32> to vector<64x128xf32>
    %187 = arith.mulf %185, %186 : vector<64x128xf32>
    %188 = arith.addf %179, %187 : vector<64x128xf32>
    %189 = vector.extract_strided_slice %176 {offsets = [1, 0], sizes = [1, 128], strides = [1, 1]} : vector<9x128xf32> to vector<1x128xf32>
    %c8 = arith.constant 8 : index
    %c0_69 = arith.constant 0 : index
    %190 = vector.load %arg16[%c8, %c0_69] : memref<96x128xf32, #tpu.memory_space<vmem>>, vector<64x128xf32>
    %191 = vector.broadcast %189 : vector<1x128xf32> to vector<64x128xf32>
    %192 = arith.mulf %190, %191 : vector<64x128xf32>
    %193 = arith.addf %188, %192 : vector<64x128xf32>
    %194 = vector.extract_strided_slice %176 {offsets = [2, 0], sizes = [1, 128], strides = [1, 1]} : vector<9x128xf32> to vector<1x128xf32>
    %c9 = arith.constant 9 : index
    %c0_70 = arith.constant 0 : index
    %195 = vector.load %arg16[%c9, %c0_70] : memref<96x128xf32, #tpu.memory_space<vmem>>, vector<64x128xf32>
    %cst_71 = arith.constant 0.000000e+00 : f32
    %196 = vector.shape_cast %175 : vector<64x1xi1> to vector<64x1xi1>
    %197 = vector.broadcast %196 : vector<64x1xi1> to vector<64x128xi1>
    %198 = vector.broadcast %cst_71 : f32 to vector<64x128xf32>
    %199 = arith.select %197, %198, %195 : vector<64x128xi1>, vector<64x128xf32>
    %200 = vector.broadcast %194 : vector<1x128xf32> to vector<64x128xf32>
    %201 = arith.mulf %199, %200 : vector<64x128xf32>
    %202 = arith.addf %193, %201 : vector<64x128xf32>
    %203 = vector.extract_strided_slice %176 {offsets = [3, 0], sizes = [1, 128], strides = [1, 1]} : vector<9x128xf32> to vector<1x128xf32>
    %c15 = arith.constant 15 : index
    %c0_72 = arith.constant 0 : index
    %204 = vector.load %arg16[%c15, %c0_72] : memref<96x128xf32, #tpu.memory_space<vmem>>, vector<64x128xf32>
    %cst_73 = arith.constant 0.000000e+00 : f32
    %205 = vector.shape_cast %173 : vector<64x1xi1> to vector<64x1xi1>
    %206 = vector.broadcast %205 : vector<64x1xi1> to vector<64x128xi1>
    %207 = vector.broadcast %cst_73 : f32 to vector<64x128xf32>
    %208 = arith.select %206, %207, %204 : vector<64x128xi1>, vector<64x128xf32>
    %209 = vector.broadcast %203 : vector<1x128xf32> to vector<64x128xf32>
    %210 = arith.mulf %208, %209 : vector<64x128xf32>
    %211 = arith.addf %202, %210 : vector<64x128xf32>
    %212 = vector.extract_strided_slice %176 {offsets = [5, 0], sizes = [1, 128], strides = [1, 1]} : vector<9x128xf32> to vector<1x128xf32>
    %c17 = arith.constant 17 : index
    %c0_74 = arith.constant 0 : index
    %213 = vector.load %arg16[%c17, %c0_74] : memref<96x128xf32, #tpu.memory_space<vmem>>, vector<64x128xf32>
    %cst_75 = arith.constant 0.000000e+00 : f32
    %214 = vector.shape_cast %175 : vector<64x1xi1> to vector<64x1xi1>
    %215 = vector.broadcast %214 : vector<64x1xi1> to vector<64x128xi1>
    %216 = vector.broadcast %cst_75 : f32 to vector<64x128xf32>
    %217 = arith.select %215, %216, %213 : vector<64x128xi1>, vector<64x128xf32>
    %218 = vector.broadcast %212 : vector<1x128xf32> to vector<64x128xf32>
    %219 = arith.mulf %217, %218 : vector<64x128xf32>
    %220 = arith.addf %211, %219 : vector<64x128xf32>
    %221 = vector.extract_strided_slice %176 {offsets = [6, 0], sizes = [1, 128], strides = [1, 1]} : vector<9x128xf32> to vector<1x128xf32>
    %c23 = arith.constant 23 : index
    %c0_76 = arith.constant 0 : index
    %222 = vector.load %arg16[%c23, %c0_76] : memref<96x128xf32, #tpu.memory_space<vmem>>, vector<64x128xf32>
    %cst_77 = arith.constant 0.000000e+00 : f32
    %223 = vector.shape_cast %173 : vector<64x1xi1> to vector<64x1xi1>
    %224 = vector.broadcast %223 : vector<64x1xi1> to vector<64x128xi1>
    %225 = vector.broadcast %cst_77 : f32 to vector<64x128xf32>
    %226 = arith.select %224, %225, %222 : vector<64x128xi1>, vector<64x128xf32>
    %227 = vector.broadcast %221 : vector<1x128xf32> to vector<64x128xf32>
    %228 = arith.mulf %226, %227 : vector<64x128xf32>
    %229 = arith.addf %220, %228 : vector<64x128xf32>
    %230 = vector.extract_strided_slice %176 {offsets = [7, 0], sizes = [1, 128], strides = [1, 1]} : vector<9x128xf32> to vector<1x128xf32>
    %c24 = arith.constant 24 : index
    %c0_78 = arith.constant 0 : index
    %231 = vector.load %arg16[%c24, %c0_78] : memref<96x128xf32, #tpu.memory_space<vmem>>, vector<64x128xf32>
    %232 = vector.broadcast %230 : vector<1x128xf32> to vector<64x128xf32>
    %233 = arith.mulf %231, %232 : vector<64x128xf32>
    %234 = arith.addf %229, %233 : vector<64x128xf32>
    %235 = vector.extract_strided_slice %176 {offsets = [8, 0], sizes = [1, 128], strides = [1, 1]} : vector<9x128xf32> to vector<1x128xf32>
    %c25 = arith.constant 25 : index
    %c0_79 = arith.constant 0 : index
    %236 = vector.load %arg16[%c25, %c0_79] : memref<96x128xf32, #tpu.memory_space<vmem>>, vector<64x128xf32>
    %cst_80 = arith.constant 0.000000e+00 : f32
    %237 = vector.shape_cast %175 : vector<64x1xi1> to vector<64x1xi1>
    %238 = vector.broadcast %237 : vector<64x1xi1> to vector<64x128xi1>
    %239 = vector.broadcast %cst_80 : f32 to vector<64x128xf32>
    %240 = arith.select %238, %239, %236 : vector<64x128xi1>, vector<64x128xf32>
    %241 = vector.broadcast %235 : vector<1x128xf32> to vector<64x128xf32>
    %242 = arith.mulf %240, %241 : vector<64x128xf32>
    %243 = arith.addf %234, %242 : vector<64x128xf32>
    %c0_81 = arith.constant 0 : index
    %c0_82 = arith.constant 0 : index
    %244 = vector.load %arg12[%c0_81, %c0_82] : memref<1x128xf32, #tpu.memory_space<vmem>>, vector<1x128xf32>
    %245 = vector.broadcast %244 : vector<1x128xf32> to vector<64x128xf32>
    %246 = arith.addf %243, %245 : vector<64x128xf32>
    %cst_83 = arith.constant 5.000000e-01 : f32
    %247 = vector.broadcast %cst_83 : f32 to vector<64x128xf32>
    %248 = arith.mulf %247, %246 : vector<64x128xf32>
    %249 = arith.mulf %246, %246 : vector<64x128xf32>
    %250 = arith.mulf %249, %246 : vector<64x128xf32>
    %cst_84 = arith.constant 4.471500e-02 : f32
    %251 = vector.broadcast %cst_84 : f32 to vector<64x128xf32>
    %252 = arith.mulf %251, %250 : vector<64x128xf32>
    %253 = arith.addf %246, %252 : vector<64x128xf32>
    %cst_85 = arith.constant 0.797884583 : f32
    %254 = vector.broadcast %cst_85 : f32 to vector<64x128xf32>
    %255 = arith.mulf %254, %253 : vector<64x128xf32>
    %256 = math.tanh %255 : vector<64x128xf32>
    %cst_86 = arith.constant 1.000000e+00 : f32
    %257 = vector.broadcast %cst_86 : f32 to vector<64x128xf32>
    %258 = arith.addf %257, %256 : vector<64x128xf32>
    %259 = arith.mulf %248, %258 : vector<64x128xf32>
    %260 = arith.truncf %259 : vector<64x128xf32> to vector<64x128xbf16>
    %c0_87 = arith.constant 0 : index
    %c0_88 = arith.constant 0 : index
    %261 = vector.load %arg13[%c0_87, %c0_88] : memref<128x32xbf16, #tpu.memory_space<vmem>>, vector<128x32xbf16>
    %cst_89 = arith.constant dense<0.000000e+00> : vector<64x32xf32>
    %262 = tpu.matmul %260, %261, %cst_89 {dimension_numbers = #tpu.dot_dimension_numbers<[1], [0], [0], [1], [0, 0, 1, 1], [], []>} : vector<64x128xbf16>, vector<128x32xbf16>, vector<64x32xf32> -> vector<64x32xf32>
    %c0_90 = arith.constant 0 : index
    %c0_91 = arith.constant 0 : index
    %263 = vector.load %arg14[%c0_90, %c0_91] : memref<1x32xf32, #tpu.memory_space<vmem>>, vector<1x32xf32>
    %264 = vector.broadcast %263 : vector<1x32xf32> to vector<64x32xf32>
    %265 = arith.addf %262, %264 : vector<64x32xf32>
    %266 = arith.addf %125, %265 : vector<64x32xf32>
    %c0_92 = arith.constant 0 : index
    %c0_93 = arith.constant 0 : index
    %c0_94 = arith.constant 0 : index
    %267 = vector.load %arg15[%c0_92, %c0_93, %c0_94] : memref<1x64x32xf32, #tpu.memory_space<vmem>>, vector<1x64x32xf32>
    %268 = vector.shape_cast %267 : vector<1x64x32xf32> to vector<64x32xf32>
    %269 = vector.shape_cast %266 : vector<64x32xf32> to vector<1x64x32xf32>
    tpu.vector_store %arg15[%c0_92, %c0_93, %c0_94], %269 {strides = array<i32>} : memref<1x64x32xf32, #tpu.memory_space<vmem>>, vector<1x64x32xf32>,
    return
  }
  func.func @transform_0(%arg0: i32) -> (i32, i32, i32) {
    %c0_i32 = arith.constant 0 : i32
    %c0_i32_0 = arith.constant 0 : i32
    %c0_i32_1 = arith.constant 0 : i32
    return %arg0, %c0_i32, %c0_i32_0 : i32, i32, i32
  }
  func.func @transform_1(%arg0: i32) -> (i32, i32, i32) {
    %c0_i32 = arith.constant 0 : i32
    %c0_i32_0 = arith.constant 0 : i32
    %c0_i32_1 = arith.constant 0 : i32
    return %arg0, %c0_i32, %c0_i32_0 : i32, i32, i32
  }
  func.func @transform_2(%arg0: i32) -> (i32, i32) {
    %c0_i32 = arith.constant 0 : i32
    %c0_i32_0 = arith.constant 0 : i32
    %c0_i32_1 = arith.constant 0 : i32
    return %c0_i32, %c0_i32_0 : i32, i32
  }
  func.func @transform_3(%arg0: i32) -> (i32, i32) {
    %c0_i32 = arith.constant 0 : i32
    %c0_i32_0 = arith.constant 0 : i32
    %c0_i32_1 = arith.constant 0 : i32
    return %c0_i32, %c0_i32_0 : i32, i32
  }
  func.func @transform_4(%arg0: i32) -> (i32, i32) {
    %c0_i32 = arith.constant 0 : i32
    %c0_i32_0 = arith.constant 0 : i32
    %c0_i32_1 = arith.constant 0 : i32
    return %c0_i32, %c0_i32_0 : i32, i32
  }
  func.func @transform_5(%arg0: i32) -> (i32, i32) {
    %c0_i32 = arith.constant 0 : i32
    %c0_i32_0 = arith.constant 0 : i32
    %c0_i32_1 = arith.constant 0 : i32
    return %c0_i32, %c0_i32_0 : i32, i32
  }
  func.func @transform_6(%arg0: i32) -> (i32, i32) {
    %c0_i32 = arith.constant 0 : i32
    %c0_i32_0 = arith.constant 0 : i32
    %c0_i32_1 = arith.constant 0 : i32
    return %c0_i32, %c0_i32_0 : i32, i32
  }
  func.func @transform_7(%arg0: i32) -> (i32, i32) {
    %c0_i32 = arith.constant 0 : i32
    %c0_i32_0 = arith.constant 0 : i32
    %c0_i32_1 = arith.constant 0 : i32
    return %c0_i32, %c0_i32_0 : i32, i32
  }
  func.func @transform_8(%arg0: i32) -> (i32, i32) {
    %c0_i32 = arith.constant 0 : i32
    %c0_i32_0 = arith.constant 0 : i32
    %c0_i32_1 = arith.constant 0 : i32
    return %c0_i32, %c0_i32_0 : i32, i32
  }
  func.func @transform_9(%arg0: i32) -> (i32, i32) {
    %c0_i32 = arith.constant 0 : i32
    %c0_i32_0 = arith.constant 0 : i32
    %c0_i32_1 = arith.constant 0 : i32
    return %c0_i32, %c0_i32_0 : i32, i32
  }
  func.func @transform_10(%arg0: i32) -> (i32, i32) {
    %c0_i32 = arith.constant 0 : i32
    %c0_i32_0 = arith.constant 0 : i32
    %c0_i32_1 = arith.constant 0 : i32
    return %c0_i32, %c0_i32_0 : i32, i32
  }
  func.func @transform_11(%arg0: i32) -> (i32, i32) {
    %c0_i32 = arith.constant 0 : i32
    %c0_i32_0 = arith.constant 0 : i32
    %c0_i32_1 = arith.constant 0 : i32
    return %c0_i32, %c0_i32_0 : i32, i32
  }
  func.func @transform_12(%arg0: i32) -> (i32, i32) {
    %c0_i32 = arith.constant 0 : i32
    %c0_i32_0 = arith.constant 0 : i32
    %c0_i32_1 = arith.constant 0 : i32
    return %c0_i32, %c0_i32_0 : i32, i32
  }
  func.func @transform_13(%arg0: i32) -> (i32, i32) {
    %c0_i32 = arith.constant 0 : i32
    %c0_i32_0 = arith.constant 0 : i32
    %c0_i32_1 = arith.constant 0 : i32
    return %c0_i32, %c0_i32_0 : i32, i32
  }
  func.func @transform_14(%arg0: i32) -> (i32, i32, i32) {
    %c0_i32 = arith.constant 0 : i32
    %c0_i32_0 = arith.constant 0 : i32
    %c0_i32_1 = arith.constant 0 : i32
    return %arg0, %c0_i32, %c0_i32_0 : i32, i32, i32
  }
}

</mosaic_0001>

<llo_original>
// kernel: tpu_custom_call.1
$region0: #{tpu_custom_call.1}
  #allocation0 [shape = 'u32[]', space=smem, size = 0x4, offset = 0x4, fixed_abs, tag = 'smem constant byte address 0x4 - core index']
  #allocation1 [shape = 'u32[72,128]{1,0:T(1,128)}', space=vmem, size = 0x9000, scoped, tag = 'internal scratch']
  #allocation2 [shape = 'f32[96,128]{1,0:T(8,128)}', space=vmem, size = 0xc000, scoped, tag = 'scratch operand']
  %s0 = inlined_call_operand.vmem [shape: f32[2,64,32], index: 0, kind: input, shape index: {}]
  %s1 = inlined_call_operand.vmem [shape: f32[2,64,32], index: 1, kind: input, shape index: {}]
  %s2 = inlined_call_operand.vmem [shape: bf16[32,32], index: 2, kind: input, shape index: {}]
  %s3 = inlined_call_operand.vmem [shape: f32[1,32], index: 3, kind: input, shape index: {}]
  %s4 = inlined_call_operand.vmem [shape: bf16[32,64], index: 4, kind: input, shape index: {}]
  %s5 = inlined_call_operand.vmem [shape: f32[1,64], index: 5, kind: input, shape index: {}]
  %s6 = inlined_call_operand.vmem [shape: bf16[32,32], index: 6, kind: input, shape index: {}]
  %s7 = inlined_call_operand.vmem [shape: f32[1,32], index: 7, kind: input, shape index: {}]
  %s8 = inlined_call_operand.vmem [shape: bf16[32,128], index: 8, kind: input, shape index: {}]
  %s9 = inlined_call_operand.vmem [shape: f32[1,128], index: 9, kind: input, shape index: {}]
  %s10 = inlined_call_operand.vmem [shape: f32[9,128], index: 10, kind: input, shape index: {}]
  %s11 = inlined_call_operand.vmem [shape: f32[1,128], index: 11, kind: input, shape index: {}]
  %s12 = inlined_call_operand.vmem [shape: bf16[128,32], index: 12, kind: input, shape index: {}]
  %s13 = inlined_call_operand.vmem [shape: f32[1,32], index: 13, kind: input, shape index: {}]
  %s14 = inlined_call_operand.vmem [shape: f32[2,64,32], index: 14, kind: output, shape index: {}]
  %s15 = sld [smem:[#allocation0]]
  $region89: #{tpu_custom_call.1} parent=0
    _
  %s17 = ssub.s32 1, %s15
  %s18 = scalar_select 0, %s17, %s15
  loop: start=0, step=1, limit=4
  $region2: #{tpu_custom_call.1} parent=0 // loop_pre_header
    _
  $region3: #{tpu_custom_call.1} parent=0 // loop_header
    %s20 = sphi 0, %s24
    %p21 = scmp.ge.s32.totalorder %s20, 4
    %s30 = sphi 0, %s32
    %s33 = sphi 0, %s30
    %s34 = sphi 0, %s33
    %s50 = sphi 0, %s34
    %s56 = sphi 0, %s58
    %s59 = sphi 0, %s56
    %s60 = sphi 0, %s59
    %s76 = sphi 0, %s60
    %s80 = sphi 0, %s80
    %s82 = sphi 0, %s80
    %s83 = sphi 0, %s82
    %s97 = sphi 0, %s83
    %s101 = sphi 0, %s101
    %s103 = sphi 0, %s101
    %s104 = sphi 0, %s103
    %s118 = sphi 0, %s104
    %s122 = sphi 0, %s122
    %s124 = sphi 0, %s122
    %s125 = sphi 0, %s124
    %s139 = sphi 0, %s125
    %s143 = sphi 0, %s143
    %s145 = sphi 0, %s143
    %s146 = sphi 0, %s145
    %s160 = sphi 0, %s146
    %s164 = sphi 0, %s164
    %s166 = sphi 0, %s164
    %s167 = sphi 0, %s166
    %s181 = sphi 0, %s167
    %s185 = sphi 0, %s185
    %s187 = sphi 0, %s185
    %s188 = sphi 0, %s187
    %s202 = sphi 0, %s188
    %s206 = sphi 0, %s206
    %s208 = sphi 0, %s206
    %s209 = sphi 0, %s208
    %s223 = sphi 0, %s209
    %s227 = sphi 0, %s227
    %s229 = sphi 0, %s227
    %s230 = sphi 0, %s229
    %s244 = sphi 0, %s230
    %s248 = sphi 0, %s248
    %s250 = sphi 0, %s248
    %s251 = sphi 0, %s250
    %s265 = sphi 0, %s251
    %s269 = sphi 0, %s269
    %s271 = sphi 0, %s269
    %s272 = sphi 0, %s271
    %s286 = sphi 0, %s272
    %s290 = sphi 0, %s290
    %s292 = sphi 0, %s290
    %s293 = sphi 0, %s292
    %s307 = sphi 0, %s293
    %s311 = sphi 0, %s311
    %s313 = sphi 0, %s311
    %s314 = sphi 0, %s313
    %s328 = sphi 0, %s314
    %s334 = sphi 0, %s336
    %s337 = sphi 0, %s334
    %s338 = sphi 0, %s337
    %s354 = sphi 0, %s338
  $region4: #{tpu_custom_call.1} parent=0 // loop_header_branch
    %23 = sbr.rel (%p21) target = $region8
  $region5: #{tpu_custom_call.1} parent=0 // loop_body
    %s25 = ssub.s32 %s20, 1
    %s26 = ssub.s32 %s20, 2
    %s27 = sadd.s32 %s20, 1
    %s28 = ssub.s32 %s20, %s27
    %p29 = scmp.eq.s32.totalorder %s28, 0
    %s31 = sadd.s32 %s30, 1
    %s32 = scalar_select %p29, %s30, %s31
    %p35 = pneg %p29
    %p36 = scmp.eq.s32.totalorder %s20, 1
    %p37 = por %p35, %p36
    %p38 = scmp.ne.s32.totalorder %s30, %s33
    %p39 = scmp.eq.s32.totalorder %s20, 0
    %p40 = por %p38, %p39
    %p41 = scmp.ne.s32.totalorder %s30, %s33
    %p42 = scmp.eq.s32.totalorder %s25, 1
    %p43 = por %p41, %p42
    %p44 = scmp.ne.s32.totalorder %s33, %s34
    %p45 = scmp.eq.s32.totalorder %s25, 0
    %p46 = por %p44, %p45
    %p47 = scmp.ne.s32.totalorder %s33, %s34
    %p48 = scmp.eq.s32.totalorder %s26, 1
    %p49 = por %p47, %p48
    %p51 = scmp.ne.s32.totalorder %s34, %s50
    %p52 = scmp.eq.s32.totalorder %s26, 0
    %p53 = por %p51, %p52
    %s54 = ssub.s32 %s20, %s27
    %p55 = scmp.eq.s32.totalorder %s54, 0
    %s57 = sadd.s32 %s56, 1
    %s58 = scalar_select %p55, %s56, %s57
    %p61 = pneg %p55
    %p62 = scmp.eq.s32.totalorder %s20, 1
    %p63 = por %p61, %p62
    %p64 = scmp.ne.s32.totalorder %s56, %s59
    %p65 = scmp.eq.s32.totalorder %s20, 0
    %p66 = por %p64, %p65
    %p67 = scmp.ne.s32.totalorder %s56, %s59
    %p68 = scmp.eq.s32.totalorder %s25, 1
    %p69 = por %p67, %p68
    %p70 = scmp.ne.s32.totalorder %s59, %s60
    %p71 = scmp.eq.s32.totalorder %s25, 0
    %p72 = por %p70, %p71
    %p73 = scmp.ne.s32.totalorder %s59, %s60
    %p74 = scmp.eq.s32.totalorder %s26, 1
    %p75 = por %p73, %p74
    %p77 = scmp.ne.s32.totalorder %s60, %s76
    %p78 = scmp.eq.s32.totalorder %s26, 0
    %p79 = por %p77, %p78
    %s81 = sadd.s32 %s80, 1
    %p84 = scmp.eq.s32.totalorder %s20, 1
    %p85 = scmp.ne.s32.totalorder %s80, %s82
    %p86 = scmp.eq.s32.totalorder %s20, 0
    %p87 = por %p85, %p86
    %p88 = scmp.ne.s32.totalorder %s80, %s82
    %p89 = scmp.eq.s32.totalorder %s25, 1
    %p90 = por %p88, %p89
    %p91 = scmp.ne.s32.totalorder %s82, %s83
    %p92 = scmp.eq.s32.totalorder %s25, 0
    %p93 = por %p91, %p92
    %p94 = scmp.ne.s32.totalorder %s82, %s83
    %p95 = scmp.eq.s32.totalorder %s26, 1
    %p96 = por %p94, %p95
    %p98 = scmp.ne.s32.totalorder %s83, %s97
    %p99 = scmp.eq.s32.totalorder %s26, 0
    %p100 = por %p98, %p99
    %s102 = sadd.s32 %s101, 1
    %p105 = scmp.eq.s32.totalorder %s20, 1
    %p106 = scmp.ne.s32.totalorder %s101, %s103
    %p107 = scmp.eq.s32.totalorder %s20, 0
    %p108 = por %p106, %p107
    %p109 = scmp.ne.s32.totalorder %s101, %s103
    %p110 = scmp.eq.s32.totalorder %s25, 1
    %p111 = por %p109, %p110
    %p112 = scmp.ne.s32.totalorder %s103, %s104
    %p113 = scmp.eq.s32.totalorder %s25, 0
    %p114 = por %p112, %p113
    %p115 = scmp.ne.s32.totalorder %s103, %s104
    %p116 = scmp.eq.s32.totalorder %s26, 1
    %p117 = por %p115, %p116
    %p119 = scmp.ne.s32.totalorder %s104, %s118
    %p120 = scmp.eq.s32.totalorder %s26, 0
    %p121 = por %p119, %p120
    %s123 = sadd.s32 %s122, 1
    %p126 = scmp.eq.s32.totalorder %s20, 1
    %p127 = scmp.ne.s32.totalorder %s122, %s124
    %p128 = scmp.eq.s32.totalorder %s20, 0
    %p129 = por %p127, %p128
    %p130 = scmp.ne.s32.totalorder %s122, %s124
    %p131 = scmp.eq.s32.totalorder %s25, 1
    %p132 = por %p130, %p131
    %p133 = scmp.ne.s32.totalorder %s124, %s125
    %p134 = scmp.eq.s32.totalorder %s25, 0
    %p135 = por %p133, %p134
    %p136 = scmp.ne.s32.totalorder %s124, %s125
    %p137 = scmp.eq.s32.totalorder %s26, 1
    %p138 = por %p136, %p137
    %p140 = scmp.ne.s32.totalorder %s125, %s139
    %p141 = scmp.eq.s32.totalorder %s26, 0
    %p142 = por %p140, %p141
    %s144 = sadd.s32 %s143, 1
    %p147 = scmp.eq.s32.totalorder %s20, 1
    %p148 = scmp.ne.s32.totalorder %s143, %s145
    %p149 = scmp.eq.s32.totalorder %s20, 0
    %p150 = por %p148, %p149
    %p151 = scmp.ne.s32.totalorder %s143, %s145
    %p152 = scmp.eq.s32.totalorder %s25, 1
    %p153 = por %p151, %p152
    %p154 = scmp.ne.s32.totalorder %s145, %s146
    %p155 = scmp.eq.s32.totalorder %s25, 0
    %p156 = por %p154, %p155
    %p157 = scmp.ne.s32.totalorder %s145, %s146
    %p158 = scmp.eq.s32.totalorder %s26, 1
    %p159 = por %p157, %p158
    %p161 = scmp.ne.s32.totalorder %s146, %s160
    %p162 = scmp.eq.s32.totalorder %s26, 0
    %p163 = por %p161, %p162
    %s165 = sadd.s32 %s164, 1
    %p168 = scmp.eq.s32.totalorder %s20, 1
    %p169 = scmp.ne.s32.totalorder %s164, %s166
    %p170 = scmp.eq.s32.totalorder %s20, 0
    %p171 = por %p169, %p170
    %p172 = scmp.ne.s32.totalorder %s164, %s166
    %p173 = scmp.eq.s32.totalorder %s25, 1
    %p174 = por %p172, %p173
    %p175 = scmp.ne.s32.totalorder %s166, %s167
    %p176 = scmp.eq.s32.totalorder %s25, 0
    %p177 = por %p175, %p176
    %p178 = scmp.ne.s32.totalorder %s166, %s167
    %p179 = scmp.eq.s32.totalorder %s26, 1
    %p180 = por %p178, %p179
    %p182 = scmp.ne.s32.totalorder %s167, %s181
    %p183 = scmp.eq.s32.totalorder %s26, 0
    %p184 = por %p182, %p183
    %s186 = sadd.s32 %s185, 1
    %p189 = scmp.eq.s32.totalorder %s20, 1
    %p190 = scmp.ne.s32.totalorder %s185, %s187
    %p191 = scmp.eq.s32.totalorder %s20, 0
    %p192 = por %p190, %p191
    %p193 = scmp.ne.s32.totalorder %s185, %s187
    %p194 = scmp.eq.s32.totalorder %s25, 1
    %p195 = por %p193, %p194
    %p196 = scmp.ne.s32.totalorder %s187, %s188
    %p197 = scmp.eq.s32.totalorder %s25, 0
    %p198 = por %p196, %p197
    %p199 = scmp.ne.s32.totalorder %s187, %s188
    %p200 = scmp.eq.s32.totalorder %s26, 1
    %p201 = por %p199, %p200
    %p203 = scmp.ne.s32.totalorder %s188, %s202
    %p204 = scmp.eq.s32.totalorder %s26, 0
    %p205 = por %p203, %p204
    %s207 = sadd.s32 %s206, 1
    %p210 = scmp.eq.s32.totalorder %s20, 1
    %p211 = scmp.ne.s32.totalorder %s206, %s208
    %p212 = scmp.eq.s32.totalorder %s20, 0
    %p213 = por %p211, %p212
    %p214 = scmp.ne.s32.totalorder %s206, %s208
    %p215 = scmp.eq.s32.totalorder %s25, 1
    %p216 = por %p214, %p215
    %p217 = scmp.ne.s32.totalorder %s208, %s209
    %p218 = scmp.eq.s32.totalorder %s25, 0
    %p219 = por %p217, %p218
    %p220 = scmp.ne.s32.totalorder %s208, %s209
    %p221 = scmp.eq.s32.totalorder %s26, 1
    %p222 = por %p220, %p221
    %p224 = scmp.ne.s32.totalorder %s209, %s223
    %p225 = scmp.eq.s32.totalorder %s26, 0
    %p226 = por %p224, %p225
    %s228 = sadd.s32 %s227, 1
    %p231 = scmp.eq.s32.totalorder %s20, 1
    %p232 = scmp.ne.s32.totalorder %s227, %s229
    %p233 = scmp.eq.s32.totalorder %s20, 0
    %p234 = por %p232, %p233
    %p235 = scmp.ne.s32.totalorder %s227, %s229
    %p236 = scmp.eq.s32.totalorder %s25, 1
    %p237 = por %p235, %p236
    %p238 = scmp.ne.s32.totalorder %s229, %s230
    %p239 = scmp.eq.s32.totalorder %s25, 0
    %p240 = por %p238, %p239
    %p241 = scmp.ne.s32.totalorder %s229, %s230
    %p242 = scmp.eq.s32.totalorder %s26, 1
    %p243 = por %p241, %p242
    %p245 = scmp.ne.s32.totalorder %s230, %s244
    %p246 = scmp.eq.s32.totalorder %s26, 0
    %p247 = por %p245, %p246
    %s249 = sadd.s32 %s248, 1
    %p252 = scmp.eq.s32.totalorder %s20, 1
    %p253 = scmp.ne.s32.totalorder %s248, %s250
    %p254 = scmp.eq.s32.totalorder %s20, 0
    %p255 = por %p253, %p254
    %p256 = scmp.ne.s32.totalorder %s248, %s250
    %p257 = scmp.eq.s32.totalorder %s25, 1
    %p258 = por %p256, %p257
    %p259 = scmp.ne.s32.totalorder %s250, %s251
    %p260 = scmp.eq.s32.totalorder %s25, 0
    %p261 = por %p259, %p260
    %p262 = scmp.ne.s32.totalorder %s250, %s251
    %p263 = scmp.eq.s32.totalorder %s26, 1
    %p264 = por %p262, %p263
    %p266 = scmp.ne.s32.totalorder %s251, %s265
    %p267 = scmp.eq.s32.totalorder %s26, 0
    %p268 = por %p266, %p267
    %s270 = sadd.s32 %s269, 1
    %p273 = scmp.eq.s32.totalorder %s20, 1
    %p274 = scmp.ne.s32.totalorder %s269, %s271
    %p275 = scmp.eq.s32.totalorder %s20, 0
    %p276 = por %p274, %p275
    %p277 = scmp.ne.s32.totalorder %s269, %s271
    %p278 = scmp.eq.s32.totalorder %s25, 1
    %p279 = por %p277, %p278
    %p280 = scmp.ne.s32.totalorder %s271, %s272
    %p281 = scmp.eq.s32.totalorder %s25, 0
    %p282 = por %p280, %p281
    %p283 = scmp.ne.s32.totalorder %s271, %s272
    %p284 = scmp.eq.s32.totalorder %s26, 1
    %p285 = por %p283, %p284
    %p287 = scmp.ne.s32.totalorder %s272, %s286
    %p288 = scmp.eq.s32.totalorder %s26, 0
    %p289 = por %p287, %p288
    %s291 = sadd.s32 %s290, 1
    %p294 = scmp.eq.s32.totalorder %s20, 1
    %p295 = scmp.ne.s32.totalorder %s290, %s292
    %p296 = scmp.eq.s32.totalorder %s20, 0
    %p297 = por %p295, %p296
    %p298 = scmp.ne.s32.totalorder %s290, %s292
    %p299 = scmp.eq.s32.totalorder %s25, 1
    %p300 = por %p298, %p299
    %p301 = scmp.ne.s32.totalorder %s292, %s293
    %p302 = scmp.eq.s32.totalorder %s25, 0
    %p303 = por %p301, %p302
    %p304 = scmp.ne.s32.totalorder %s292, %s293
    %p305 = scmp.eq.s32.totalorder %s26, 1
    %p306 = por %p304, %p305
    %p308 = scmp.ne.s32.totalorder %s293, %s307
    %p309 = scmp.eq.s32.totalorder %s26, 0
    %p310 = por %p308, %p309
    %s312 = sadd.s32 %s311, 1
    %p315 = scmp.eq.s32.totalorder %s20, 1
    %p316 = scmp.ne.s32.totalorder %s311, %s313
    %p317 = scmp.eq.s32.totalorder %s20, 0
    %p318 = por %p316, %p317
    %p319 = scmp.ne.s32.totalorder %s311, %s313
    %p320 = scmp.eq.s32.totalorder %s25, 1
    %p321 = por %p319, %p320
    %p322 = scmp.ne.s32.totalorder %s313, %s314
    %p323 = scmp.eq.s32.totalorder %s25, 0
    %p324 = por %p322, %p323
    %p325 = scmp.ne.s32.totalorder %s313, %s314
    %p326 = scmp.eq.s32.totalorder %s26, 1
    %p327 = por %p325, %p326
    %p329 = scmp.ne.s32.totalorder %s314, %s328
    %p330 = scmp.eq.s32.totalorder %s26, 0
    %p331 = por %p329, %p330
    %s332 = ssub.s32 %s20, %s27
    %p333 = scmp.eq.s32.totalorder %s332, 0
    %s335 = sadd.s32 %s334, 1
    %s336 = scalar_select %p333, %s334, %s335
    %p339 = pneg %p333
    %p340 = scmp.eq.s32.totalorder %s20, 1
    %p341 = por %p339, %p340
    %p342 = scmp.ne.s32.totalorder %s334, %s337
    %p343 = scmp.eq.s32.totalorder %s20, 0
    %p344 = por %p342, %p343
    %p345 = scmp.ne.s32.totalorder %s334, %s337
    %p346 = scmp.eq.s32.totalorder %s25, 1
    %p347 = por %p345, %p346
    %p348 = scmp.ne.s32.totalorder %s337, %s338
    %p349 = scmp.eq.s32.totalorder %s25, 0
    %p350 = por %p348, %p349
    %p351 = scmp.ne.s32.totalorder %s337, %s338
    %p352 = scmp.eq.s32.totalorder %s26, 1
    %p353 = por %p351, %p352
    %p355 = scmp.ne.s32.totalorder %s338, %s354
    %p356 = scmp.eq.s32.totalorder %s26, 0
    %p357 = por %p355, %p356
    %p358 = scmp.le.s32.totalorder 1, %s20
    %p359 = scmp.lt.s32.totalorder %s20, 3
    %p360 = pnand %p358, %p359
    %p361 = pneg %p360
    // Predicated region
    $region9: #{tpu_custom_call.1} parent=5 // pred_check
      _
    $region10: #{tpu_custom_call.1} parent=5 // pred_check_branch
      %363 = sbr.rel (%p360) target = $region12
    $region11: #{tpu_custom_call.1} parent=5 // pred_region
      %s364 = ssub.s32 %s20, 1
      // Predicated region
      $region13: #{tpu_custom_call.1} parent=11 // pred_check
        %p365 = pneg %p93
      $region14: #{tpu_custom_call.1} parent=11 // pred_check_branch
        %367 = sbr.rel (%p365) target = $region16
      $region15: #{tpu_custom_call.1} parent=11 // pred_region
        _
      $region16: #{tpu_custom_call.1} parent=11 // pred_fallthru
        _
      // Predicated region
      $region17: #{tpu_custom_call.1} parent=11 // pred_check
        %p368 = pneg %p114
      $region18: #{tpu_custom_call.1} parent=11 // pred_check_branch
        %370 = sbr.rel (%p368) target = $region20
      $region19: #{tpu_custom_call.1} parent=11 // pred_region
        _
      $region20: #{tpu_custom_call.1} parent=11 // pred_fallthru
        _
      // Predicated region
      $region21: #{tpu_custom_call.1} parent=11 // pred_check
        %p371 = pneg %p135
      $region22: #{tpu_custom_call.1} parent=11 // pred_check_branch
        %373 = sbr.rel (%p371) target = $region24
      $region23: #{tpu_custom_call.1} parent=11 // pred_region
        _
      $region24: #{tpu_custom_call.1} parent=11 // pred_fallthru
        _
      // Predicated region
      $region25: #{tpu_custom_call.1} parent=11 // pred_check
        %p374 = pneg %p156
      $region26: #{tpu_custom_call.1} parent=11 // pred_check_branch
        %376 = sbr.rel (%p374) target = $region28
      $region27: #{tpu_custom_call.1} parent=11 // pred_region
        _
      $region28: #{tpu_custom_call.1} parent=11 // pred_fallthru
        _
      // Predicated region
      $region29: #{tpu_custom_call.1} parent=11 // pred_check
        %p377 = pneg %p177
      $region30: #{tpu_custom_call.1} parent=11 // pred_check_branch
        %379 = sbr.rel (%p377) target = $region32
      $region31: #{tpu_custom_call.1} parent=11 // pred_region
        _
      $region32: #{tpu_custom_call.1} parent=11 // pred_fallthru
        _
      // Predicated region
      $region33: #{tpu_custom_call.1} parent=11 // pred_check
        %p380 = pneg %p198
      $region34: #{tpu_custom_call.1} parent=11 // pred_check_branch
        %382 = sbr.rel (%p380) target = $region36
      $region35: #{tpu_custom_call.1} parent=11 // pred_region
        _
      $region36: #{tpu_custom_call.1} parent=11 // pred_fallthru
        _
      // Predicated region
      $region37: #{tpu_custom_call.1} parent=11 // pred_check
        %p383 = pneg %p219
      $region38: #{tpu_custom_call.1} parent=11 // pred_check_branch
        %385 = sbr.rel (%p383) target = $region40
      $region39: #{tpu_custom_call.1} parent=11 // pred_region
        _
      $region40: #{tpu_custom_call.1} parent=11 // pred_fallthru
        _
      // Predicated region
      $region41: #{tpu_custom_call.1} parent=11 // pred_check
        %p386 = pneg %p240
      $region42: #{tpu_custom_call.1} parent=11 // pred_check_branch
        %388 = sbr.rel (%p386) target = $region44
      $region43: #{tpu_custom_call.1} parent=11 // pred_region
        _
      $region44: #{tpu_custom_call.1} parent=11 // pred_fallthru
        _
      // Predicated region
      $region45: #{tpu_custom_call.1} parent=11 // pred_check
        %p389 = pneg %p261
      $region46: #{tpu_custom_call.1} parent=11 // pred_check_branch
        %391 = sbr.rel (%p389) target = $region48
      $region47: #{tpu_custom_call.1} parent=11 // pred_region
        _
      $region48: #{tpu_custom_call.1} parent=11 // pred_fallthru
        _
      // Predicated region
      $region49: #{tpu_custom_call.1} parent=11 // pred_check
        %p392 = pneg %p282
      $region50: #{tpu_custom_call.1} parent=11 // pred_check_branch
        %394 = sbr.rel (%p392) target = $region52
      $region51: #{tpu_custom_call.1} parent=11 // pred_region
        _
      $region52: #{tpu_custom_call.1} parent=11 // pred_fallthru
        _
      // Predicated region
      $region53: #{tpu_custom_call.1} parent=11 // pred_check
        %p395 = pneg %p303
      $region54: #{tpu_custom_call.1} parent=11 // pred_check_branch
        %397 = sbr.rel (%p395) target = $region56
      $region55: #{tpu_custom_call.1} parent=11 // pred_region
        _
      $region56: #{tpu_custom_call.1} parent=11 // pred_fallthru
        _
      // Predicated region
      $region57: #{tpu_custom_call.1} parent=11 // pred_check
        %p398 = pneg %p324
      $region58: #{tpu_custom_call.1} parent=11 // pred_check_branch
        %400 = sbr.rel (%p398) target = $region60
      $region59: #{tpu_custom_call.1} parent=11 // pred_region
        _
      $region60: #{tpu_custom_call.1} parent=11 // pred_fallthru
        _
    $region12: #{tpu_custom_call.1} parent=5 // pred_fallthru
      _
    %p401 = scmp.lt.s32.totalorder %s20, 2
    // Predicated region
    $region61: #{tpu_custom_call.1} parent=5 // pred_check
      %p402 = pneg %p401
    $region62: #{tpu_custom_call.1} parent=5 // pred_check_branch
      %404 = sbr.rel (%p402) target = $region64
    $region63: #{tpu_custom_call.1} parent=5 // pred_region
      // Predicated region
      $region65: #{tpu_custom_call.1} parent=63 // pred_check
        %p405 = pneg %p40
      $region66: #{tpu_custom_call.1} parent=63 // pred_check_branch
        %407 = sbr.rel (%p405) target = $region68
      $region67: #{tpu_custom_call.1} parent=63 // pred_region
        %p408 = scmp.lt.s32.totalorder %s20, 1
        %s409 = scalar_select %p408, %s20, 1
        %s410 = smul.addr %s409, 8
        %s411 = smul.addr %s410, 8
        %s412 = scalar_lea.vmem %s0, %s411
      $region68: #{tpu_custom_call.1} parent=63 // pred_fallthru
        _
      // Predicated region
      $region69: #{tpu_custom_call.1} parent=63 // pred_check
        %p413 = pneg %p66
      $region70: #{tpu_custom_call.1} parent=63 // pred_check_branch
        %415 = sbr.rel (%p413) target = $region72
      $region71: #{tpu_custom_call.1} parent=63 // pred_region
        %p416 = scmp.lt.s32.totalorder %s20, 1
        %s417 = scalar_select %p416, %s20, 1
        %s418 = smul.addr %s417, 8
        %s419 = smul.addr %s418, 8
        %s420 = scalar_lea.vmem %s1, %s419
      $region72: #{tpu_custom_call.1} parent=63 // pred_fallthru
        _
    $region64: #{tpu_custom_call.1} parent=5 // pred_fallthru
      _
    %p421 = scmp.le.s32.totalorder 1, %s20
    %p422 = scmp.lt.s32.totalorder %s20, 3
    %p423 = pnand %p421, %p422
    %p424 = pneg %p423
    // Predicated region
    $region73: #{tpu_custom_call.1} parent=5 // pred_check
      _
    $region74: #{tpu_custom_call.1} parent=5 // pred_check_branch
      %426 = sbr.rel (%p423) target = $region76
    $region75: #{tpu_custom_call.1} parent=5 // pred_region
      %s427 = ssub.s32 %s20, 1
      %p428 = scmp.lt.s32.totalorder %s25, 1
      %s429 = scalar_select %p428, %s25, 1
      %s430 = smul.addr %s429, 8
      %s431 = smul.addr %s430, 8
      %s432 = scalar_lea.vmem %s0, %s431
      %p433 = pneg %p46
      %p434 = pneg %p43
      %p435 = scmp.lt.s32.totalorder %s25, 1
      %s436 = scalar_select %p435, %s25, 1
      %s437 = smul.addr %s436, 8
      %s438 = smul.addr %s437, 8
      %s439 = scalar_lea.vmem %s1, %s438
      %p440 = pneg %p72
      %p441 = pneg %p69
      %p442 = pneg %p93
      %p443 = pneg %p90
      %p444 = pneg %p114
      %p445 = pneg %p111
      %p446 = pneg %p135
      %p447 = pneg %p132
      %p448 = pneg %p156
      %p449 = pneg %p153
      %p450 = pneg %p177
      %p451 = pneg %p174
      %p452 = pneg %p198
      %p453 = pneg %p195
      %p454 = pneg %p219
      %p455 = pneg %p216
      %p456 = pneg %p240
      %p457 = pneg %p237
      %p458 = pneg %p261
      %p459 = pneg %p258
      %p460 = pneg %p282
      %p461 = pneg %p279
      %p462 = pneg %p303
      %p463 = pneg %p300
      %p464 = pneg %p324
      %p465 = pneg %p321
      %p466 = pneg %p350
      %p467 = pneg %p347
      %p468 = scmp.lt.s32.totalorder %s25, 1
      %s469 = scalar_select %p468, %s25, 1
      %s470 = smul.addr %s469, 8
      %s471 = smul.addr %s470, 8
      %s472 = scalar_lea.vmem %s14, %s471
      %p473 = scmp.lt.s32.totalorder %s25, 1
      %s474 = scalar_select %p473, %s25, 1
      %s475 = smul.addr %s474, 8
      %s476 = smul.addr %s475, 8
      %s477 = scalar_lea.vmem %s0, %s476
      %p478 = scmp.lt.s32.totalorder %s25, 1
      %s479 = scalar_select %p478, %s25, 1
      %s480 = smul.addr %s479, 8
      %s481 = smul.addr %s480, 8
      %s482 = scalar_lea.vmem %s1, %s481
      %p483 = scmp.lt.s32.totalorder %s25, 1
      %s484 = scalar_select %p483, %s25, 1
      %s485 = smul.addr %s484, 8
      %s486 = smul.addr %s485, 8
      %s487 = scalar_lea.vmem %s14, %s486
      %v489 = vld [vmem:[%s477] sm:$0xff]
      %v490 = vld [vmem:[%s477 + $0x8] sm:$0xff]
      %v491 = vld [vmem:[%s477 + $0x10] sm:$0xff]
      %v492 = vld [vmem:[%s477 + $0x18] sm:$0xff]
      %v493 = vld [vmem:[%s477 + $0x20] sm:$0xff]
      %v494 = vld [vmem:[%s477 + $0x28] sm:$0xff]
      %v495 = vld [vmem:[%s477 + $0x30] sm:$0xff]
      %v496 = vld [vmem:[%s477 + $0x38] sm:$0xff]
      %v497 = vld [vmem:[%s482] sm:$0xff]
      %v498 = vld [vmem:[%s482 + $0x8] sm:$0xff]
      %v499 = vld [vmem:[%s482 + $0x10] sm:$0xff]
      %v500 = vld [vmem:[%s482 + $0x18] sm:$0xff]
      %v501 = vld [vmem:[%s482 + $0x20] sm:$0xff]
      %v502 = vld [vmem:[%s482 + $0x28] sm:$0xff]
      %v503 = vld [vmem:[%s482 + $0x30] sm:$0xff]
      %v504 = vld [vmem:[%s482 + $0x38] sm:$0xff]
      %vm505 = vcmask 261120
      %v506 = vsel %vm505, %v489, 0.0
      %507 = vadd.xlane.f32.xlu0 %v506
      %v508 = vpop.xlane.xlu0 %507
      %v509 = vsel %vm505, %v490, 0.0
      %510 = vadd.xlane.f32.xlu0 %v509
      %v511 = vpop.xlane.xlu0 %510
      %v512 = vsel %vm505, %v491, 0.0
      %513 = vadd.xlane.f32.xlu0 %v512
      %v514 = vpop.xlane.xlu0 %513
      %v515 = vsel %vm505, %v492, 0.0
      %516 = vadd.xlane.f32.xlu0 %v515
      %v517 = vpop.xlane.xlu0 %516
      %v518 = vsel %vm505, %v493, 0.0
      %519 = vadd.xlane.f32.xlu0 %v518
      %v520 = vpop.xlane.xlu0 %519
      %v521 = vsel %vm505, %v494, 0.0
      %522 = vadd.xlane.f32.xlu0 %v521
      %v523 = vpop.xlane.xlu0 %522
      %v524 = vsel %vm505, %v495, 0.0
      %525 = vadd.xlane.f32.xlu0 %v524
      %v526 = vpop.xlane.xlu0 %525
      %v527 = vsel %vm505, %v496, 0.0
      %528 = vadd.xlane.f32.xlu0 %v527
      %v529 = vpop.xlane.xlu0 %528
      %v530 = vrcp.pop 32.0
      %v531 = vmul.f32 32.0, %v530
      %v532 = vsub.f32 1.0, %v531
      %v533 = vmul.f32 %v530, %v532
      %v534 = vadd.f32 %v530, %v533
      %vm535 = vweird.f32 %v530
      %v536 = vsel %vm535, %v530, %v534
      %v537 = vmul.f32 %v508, %v536
      %v538 = vmul.f32 %v511, %v536
      %v539 = vmul.f32 %v514, %v536
      %v540 = vmul.f32 %v517, %v536
      %v541 = vmul.f32 %v520, %v536
      %v542 = vmul.f32 %v523, %v536
      %v543 = vmul.f32 %v526, %v536
      %v544 = vmul.f32 %v529, %v536
      %v545 = vsub.f32 %v489, %v537
      %v546 = vsub.f32 %v490, %v538
      %v547 = vsub.f32 %v491, %v539
      %v548 = vsub.f32 %v492, %v540
      %v549 = vsub.f32 %v493, %v541
      %v550 = vsub.f32 %v494, %v542
      %v551 = vsub.f32 %v495, %v543
      %v552 = vsub.f32 %v496, %v544
      %v553 = vmul.f32 %v545, %v545
      %v554 = vmul.f32 %v546, %v546
      %v555 = vmul.f32 %v547, %v547
      %v556 = vmul.f32 %v548, %v548
      %v557 = vmul.f32 %v549, %v549
      %v558 = vmul.f32 %v550, %v550
      %v559 = vmul.f32 %v551, %v551
      %v560 = vmul.f32 %v552, %v552
      %v561 = vsel %vm505, %v553, 0.0
      %562 = vadd.xlane.f32.xlu0 %v561
      %v563 = vpop.xlane.xlu0 %562
      %v564 = vsel %vm505, %v554, 0.0
      %565 = vadd.xlane.f32.xlu0 %v564
      %v566 = vpop.xlane.xlu0 %565
      %v567 = vsel %vm505, %v555, 0.0
      %568 = vadd.xlane.f32.xlu0 %v567
      %v569 = vpop.xlane.xlu0 %568
      %v570 = vsel %vm505, %v556, 0.0
      %571 = vadd.xlane.f32.xlu0 %v570
      %v572 = vpop.xlane.xlu0 %571
      %v573 = vsel %vm505, %v557, 0.0
      %574 = vadd.xlane.f32.xlu0 %v573
      %v575 = vpop.xlane.xlu0 %574
      %v576 = vsel %vm505, %v558, 0.0
      %577 = vadd.xlane.f32.xlu0 %v576
      %v578 = vpop.xlane.xlu0 %577
      %v579 = vsel %vm505, %v559, 0.0
      %580 = vadd.xlane.f32.xlu0 %v579
      %v581 = vpop.xlane.xlu0 %580
      %v582 = vsel %vm505, %v560, 0.0
      %583 = vadd.xlane.f32.xlu0 %v582
      %v584 = vpop.xlane.xlu0 %583
      %v585 = vmul.f32 %v563, %v536
      %v586 = vmul.f32 %v566, %v536
      %v587 = vmul.f32 %v569, %v536
      %v588 = vmul.f32 %v572, %v536
      %v589 = vmul.f32 %v575, %v536
      %v590 = vmul.f32 %v578, %v536
      %v591 = vmul.f32 %v581, %v536
      %v592 = vmul.f32 %v584, %v536
      %v593 = vadd.f32 %v585, 1e-05
      %v594 = vadd.f32 %v586, 1e-05
      %v595 = vadd.f32 %v587, 1e-05
      %v596 = vadd.f32 %v588, 1e-05
      %v597 = vadd.f32 %v589, 1e-05
      %v598 = vadd.f32 %v590, 1e-05
      %v599 = vadd.f32 %v591, 1e-05
      %v600 = vadd.f32 %v592, 1e-05
      %v601 = vrsqrt.pop %v593
      %v602 = vmul.f32 %v601, %v593
      %v603 = vmul.f32 %v602, %v601
      %v604 = vmul.f32 0.5, %v603
      %v605 = vsub.f32 1.5, %v604
      %v606 = vmul.f32 %v601, %v605
      %vm607 = vweird.f32 %v593
      %vm608 = vweird.f32 %v601
      %vm609 = vmor %vm607, %vm608
      %v610 = vsel %vm609, %v601, %v606
      %v611 = vrsqrt.pop %v594
      %v612 = vmul.f32 %v611, %v594
      %v613 = vmul.f32 %v612, %v611
      %v614 = vmul.f32 0.5, %v613
      %v615 = vsub.f32 1.5, %v614
      %v616 = vmul.f32 %v611, %v615
      %vm617 = vweird.f32 %v594
      %vm618 = vweird.f32 %v611
      %vm619 = vmor %vm617, %vm618
      %v620 = vsel %vm619, %v611, %v616
      %v621 = vrsqrt.pop %v595
      %v622 = vmul.f32 %v621, %v595
      %v623 = vmul.f32 %v622, %v621
      %v624 = vmul.f32 0.5, %v623
      %v625 = vsub.f32 1.5, %v624
      %v626 = vmul.f32 %v621, %v625
      %vm627 = vweird.f32 %v595
      %vm628 = vweird.f32 %v621
      %vm629 = vmor %vm627, %vm628
      %v630 = vsel %vm629, %v621, %v626
      %v631 = vrsqrt.pop %v596
      %v632 = vmul.f32 %v631, %v596
      %v633 = vmul.f32 %v632, %v631
      %v634 = vmul.f32 0.5, %v633
      %v635 = vsub.f32 1.5, %v634
      %v636 = vmul.f32 %v631, %v635
      %vm637 = vweird.f32 %v596
      %vm638 = vweird.f32 %v631
      %vm639 = vmor %vm637, %vm638
      %v640 = vsel %vm639, %v631, %v636
      %v641 = vrsqrt.pop %v597
      %v642 = vmul.f32 %v641, %v597
      %v643 = vmul.f32 %v642, %v641
      %v644 = vmul.f32 0.5, %v643
      %v645 = vsub.f32 1.5, %v644
      %v646 = vmul.f32 %v641, %v645
      %vm647 = vweird.f32 %v597
      %vm648 = vweird.f32 %v641
      %vm649 = vmor %vm647, %vm648
      %v650 = vsel %vm649, %v641, %v646
      %v651 = vrsqrt.pop %v598
      %v652 = vmul.f32 %v651, %v598
      %v653 = vmul.f32 %v652, %v651
      %v654 = vmul.f32 0.5, %v653
      %v655 = vsub.f32 1.5, %v654
      %v656 = vmul.f32 %v651, %v655
      %vm657 = vweird.f32 %v598
      %vm658 = vweird.f32 %v651
      %vm659 = vmor %vm657, %vm658
      %v660 = vsel %vm659, %v651, %v656
      %v661 = vrsqrt.pop %v599
      %v662 = vmul.f32 %v661, %v599
      %v663 = vmul.f32 %v662, %v661
      %v664 = vmul.f32 0.5, %v663
      %v665 = vsub.f32 1.5, %v664
      %v666 = vmul.f32 %v661, %v665
      %vm667 = vweird.f32 %v599
      %vm668 = vweird.f32 %v661
      %vm669 = vmor %vm667, %vm668
      %v670 = vsel %vm669, %v661, %v666
      %v671 = vrsqrt.pop %v600
      %v672 = vmul.f32 %v671, %v600
      %v673 = vmul.f32 %v672, %v671
      %v674 = vmul.f32 0.5, %v673
      %v675 = vsub.f32 1.5, %v674
      %v676 = vmul.f32 %v671, %v675
      %vm677 = vweird.f32 %v600
      %vm678 = vweird.f32 %v671
      %vm679 = vmor %vm677, %vm678
      %v680 = vsel %vm679, %v671, %v676
      %v681 = vmul.f32 %v545, %v610
      %v682 = vmul.f32 %v546, %v620
      %v683 = vmul.f32 %v547, %v630
      %v684 = vmul.f32 %v548, %v640
      %v685 = vmul.f32 %v549, %v650
      %v686 = vmul.f32 %v550, %v660
      %v687 = vmul.f32 %v551, %v670
      %v688 = vmul.f32 %v552, %v680
      %v689 = vpack.c.bf16 %v682, %v681
      %v690 = vpack.c.bf16 %v684, %v683
      %v691 = vpack.c.bf16 %v686, %v685
      %v692 = vpack.c.bf16 %v688, %v687
      %v693 = vsel %vm505, %v497, 0.0
      %694 = vadd.xlane.f32.xlu0 %v693
      %v695 = vpop.xlane.xlu0 %694
      %v696 = vsel %vm505, %v498, 0.0
      %697 = vadd.xlane.f32.xlu0 %v696
      %v698 = vpop.xlane.xlu0 %697
      %v699 = vsel %vm505, %v499, 0.0
      %700 = vadd.xlane.f32.xlu0 %v699
      %v701 = vpop.xlane.xlu0 %700
      %v702 = vsel %vm505, %v500, 0.0
      %703 = vadd.xlane.f32.xlu0 %v702
      %v704 = vpop.xlane.xlu0 %703
      %v705 = vsel %vm505, %v501, 0.0
      %706 = vadd.xlane.f32.xlu0 %v705
      %v707 = vpop.xlane.xlu0 %706
      %v708 = vsel %vm505, %v502, 0.0
      %709 = vadd.xlane.f32.xlu0 %v708
      %v710 = vpop.xlane.xlu0 %709
      %v711 = vsel %vm505, %v503, 0.0
      %712 = vadd.xlane.f32.xlu0 %v711
      %v713 = vpop.xlane.xlu0 %712
      %v714 = vsel %vm505, %v504, 0.0
      %715 = vadd.xlane.f32.xlu0 %v714
      %v716 = vpop.xlane.xlu0 %715
      %v717 = vmul.f32 %v695, %v536
      %v718 = vmul.f32 %v698, %v536
      %v719 = vmul.f32 %v701, %v536
      %v720 = vmul.f32 %v704, %v536
      %v721 = vmul.f32 %v707, %v536
      %v722 = vmul.f32 %v710, %v536
      %v723 = vmul.f32 %v713, %v536
      %v724 = vmul.f32 %v716, %v536
      %v725 = vsub.f32 %v497, %v717
      %v726 = vsub.f32 %v498, %v718
      %v727 = vsub.f32 %v499, %v719
      %v728 = vsub.f32 %v500, %v720
      %v729 = vsub.f32 %v501, %v721
      %v730 = vsub.f32 %v502, %v722
      %v731 = vsub.f32 %v503, %v723
      %v732 = vsub.f32 %v504, %v724
      %v733 = vmul.f32 %v725, %v725
      %v734 = vmul.f32 %v726, %v726
      %v735 = vmul.f32 %v727, %v727
      %v736 = vmul.f32 %v728, %v728
      %v737 = vmul.f32 %v729, %v729
      %v738 = vmul.f32 %v730, %v730
      %v739 = vmul.f32 %v731, %v731
      %v740 = vmul.f32 %v732, %v732
      %v741 = vsel %vm505, %v733, 0.0
      %742 = vadd.xlane.f32.xlu0 %v741
      %v743 = vpop.xlane.xlu0 %742
      %v744 = vsel %vm505, %v734, 0.0
      %745 = vadd.xlane.f32.xlu0 %v744
      %v746 = vpop.xlane.xlu0 %745
      %v747 = vsel %vm505, %v735, 0.0
      %748 = vadd.xlane.f32.xlu0 %v747
      %v749 = vpop.xlane.xlu0 %748
      %v750 = vsel %vm505, %v736, 0.0
      %751 = vadd.xlane.f32.xlu0 %v750
      %v752 = vpop.xlane.xlu0 %751
      %v753 = vsel %vm505, %v737, 0.0
      %754 = vadd.xlane.f32.xlu0 %v753
      %v755 = vpop.xlane.xlu0 %754
      %v756 = vsel %vm505, %v738, 0.0
      %757 = vadd.xlane.f32.xlu0 %v756
      %v758 = vpop.xlane.xlu0 %757
      %v759 = vsel %vm505, %v739, 0.0
      %760 = vadd.xlane.f32.xlu0 %v759
      %v761 = vpop.xlane.xlu0 %760
      %v762 = vsel %vm505, %v740, 0.0
      %763 = vadd.xlane.f32.xlu0 %v762
      %v764 = vpop.xlane.xlu0 %763
      %v765 = vmul.f32 %v743, %v536
      %v766 = vmul.f32 %v746, %v536
      %v767 = vmul.f32 %v749, %v536
      %v768 = vmul.f32 %v752, %v536
      %v769 = vmul.f32 %v755, %v536
      %v770 = vmul.f32 %v758, %v536
      %v771 = vmul.f32 %v761, %v536
      %v772 = vmul.f32 %v764, %v536
      %v773 = vadd.f32 %v765, 1e-05
      %v774 = vadd.f32 %v766, 1e-05
      %v775 = vadd.f32 %v767, 1e-05
      %v776 = vadd.f32 %v768, 1e-05
      %v777 = vadd.f32 %v769, 1e-05
      %v778 = vadd.f32 %v770, 1e-05
      %v779 = vadd.f32 %v771, 1e-05
      %v780 = vadd.f32 %v772, 1e-05
      %v781 = vrsqrt.pop %v773
      %v782 = vmul.f32 %v781, %v773
      %v783 = vmul.f32 %v782, %v781
      %v784 = vmul.f32 0.5, %v783
      %v785 = vsub.f32 1.5, %v784
      %v786 = vmul.f32 %v781, %v785
      %vm787 = vweird.f32 %v773
      %vm788 = vweird.f32 %v781
      %vm789 = vmor %vm787, %vm788
      %v790 = vsel %vm789, %v781, %v786
      %v791 = vrsqrt.pop %v774
      %v792 = vmul.f32 %v791, %v774
      %v793 = vmul.f32 %v792, %v791
      %v794 = vmul.f32 0.5, %v793
      %v795 = vsub.f32 1.5, %v794
      %v796 = vmul.f32 %v791, %v795
      %vm797 = vweird.f32 %v774
      %vm798 = vweird.f32 %v791
      %vm799 = vmor %vm797, %vm798
      %v800 = vsel %vm799, %v791, %v796
      %v801 = vrsqrt.pop %v775
      %v802 = vmul.f32 %v801, %v775
      %v803 = vmul.f32 %v802, %v801
      %v804 = vmul.f32 0.5, %v803
      %v805 = vsub.f32 1.5, %v804
      %v806 = vmul.f32 %v801, %v805
      %vm807 = vweird.f32 %v775
      %vm808 = vweird.f32 %v801
      %vm809 = vmor %vm807, %vm808
      %v810 = vsel %vm809, %v801, %v806
      %v811 = vrsqrt.pop %v776
      %v812 = vmul.f32 %v811, %v776
      %v813 = vmul.f32 %v812, %v811
      %v814 = vmul.f32 0.5, %v813
      %v815 = vsub.f32 1.5, %v814
      %v816 = vmul.f32 %v811, %v815
      %vm817 = vweird.f32 %v776
      %vm818 = vweird.f32 %v811
      %vm819 = vmor %vm817, %vm818
      %v820 = vsel %vm819, %v811, %v816
      %v821 = vrsqrt.pop %v777
      %v822 = vmul.f32 %v821, %v777
      %v823 = vmul.f32 %v822, %v821
      %v824 = vmul.f32 0.5, %v823
      %v825 = vsub.f32 1.5, %v824
      %v826 = vmul.f32 %v821, %v825
      %vm827 = vweird.f32 %v777
      %vm828 = vweird.f32 %v821
      %vm829 = vmor %vm827, %vm828
      %v830 = vsel %vm829, %v821, %v826
      %v831 = vrsqrt.pop %v778
      %v832 = vmul.f32 %v831, %v778
      %v833 = vmul.f32 %v832, %v831
      %v834 = vmul.f32 0.5, %v833
      %v835 = vsub.f32 1.5, %v834
      %v836 = vmul.f32 %v831, %v835
      %vm837 = vweird.f32 %v778
      %vm838 = vweird.f32 %v831
      %vm839 = vmor %vm837, %vm838
      %v840 = vsel %vm839, %v831, %v836
      %v841 = vrsqrt.pop %v779
      %v842 = vmul.f32 %v841, %v779
      %v843 = vmul.f32 %v842, %v841
      %v844 = vmul.f32 0.5, %v843
      %v845 = vsub.f32 1.5, %v844
      %v846 = vmul.f32 %v841, %v845
      %vm847 = vweird.f32 %v779
      %vm848 = vweird.f32 %v841
      %vm849 = vmor %vm847, %vm848
      %v850 = vsel %vm849, %v841, %v846
      %v851 = vrsqrt.pop %v780
      %v852 = vmul.f32 %v851, %v780
      %v853 = vmul.f32 %v852, %v851
      %v854 = vmul.f32 0.5, %v853
      %v855 = vsub.f32 1.5, %v854
      %v856 = vmul.f32 %v851, %v855
      %vm857 = vweird.f32 %v780
      %vm858 = vweird.f32 %v851
      %vm859 = vmor %vm857, %vm858
      %v860 = vsel %vm859, %v851, %v856
      %v861 = vmul.f32 %v725, %v790
      %v862 = vmul.f32 %v726, %v800
      %v863 = vmul.f32 %v727, %v810
      %v864 = vmul.f32 %v728, %v820
      %v865 = vmul.f32 %v729, %v830
      %v866 = vmul.f32 %v730, %v840
      %v867 = vmul.f32 %v731, %v850
      %v868 = vmul.f32 %v732, %v860
      %v869 = vpack.c.bf16 %v862, %v861
      %v870 = vpack.c.bf16 %v864, %v863
      %v871 = vpack.c.bf16 %v866, %v865
      %v872 = vpack.c.bf16 %v868, %v867
      %v873 = vld [vmem:[%s2] sm:$0xf]
      %v874 = vld [vmem:[%s2 + $0x4] sm:$0xf]
      %v875 = vld [vmem:[%s2 + $0x8] sm:$0xf]
      %v876 = vld [vmem:[%s2 + $0xc] sm:$0xf]
      %v877 = vld [vmem:[%s3] sm:$0x1]
      %v879 = vperm.slane %v877, 0
      %v885 = vunpack.c.l.b16 %v873
      %v886 = vunpack.c.l.b16 %v874
      %v887 = vunpack.c.l.b16 %v875
      %v888 = vunpack.c.l.b16 %v876
      %v889 = vpack.c.b16 %v886, %v885
      %v890 = vpack.c.b16 %v888, %v887
      %v894 = vsel %vm505, %v689, 0
      %v897 = vsel %vm505, %v690, 0
      %v900 = vsel %vm505, %v691, 0
      %v903 = vsel %vm505, %v692, 0
      %905 = vmatpush.bf16.msra.mxu0 0
      %906 = vmatpush.bf16.msra.mxu0 0
      %907 = vmatpush.bf16.msra.mxu0 0
      %908 = vmatpush.bf16.msra.mxu0 0
      %909 = vmatpush.bf16.msra.mxu0 0
      %910 = vmatpush.bf16.msra.mxu0 0
      %911 = vmatpush.bf16.msra.mxu0 %v890
      %912 = vmatpush.bf16.msra.mxu0 %v889
      %913 = vmatmul.bf16.gmra.mxu0 %v894
      %v914 = vpop.f32.mrf.mxu0
      %v915 = vadd.f32 %v879, %v914
      %v916 = vpop.f32.mrf.mxu0
      %v917 = vadd.f32 %v879, %v916
      %918 = vmatmul.bf16.gmra.mxu0 %v897
      %v919 = vpop.f32.mrf.mxu0
      %v920 = vadd.f32 %v879, %v919
      %v921 = vpop.f32.mrf.mxu0
      %v922 = vadd.f32 %v879, %v921
      %923 = vmatmul.bf16.gmra.mxu0 %v900
      %v924 = vpop.f32.mrf.mxu0
      %v925 = vadd.f32 %v879, %v924
      %v926 = vpop.f32.mrf.mxu0
      %v927 = vadd.f32 %v879, %v926
      %928 = vmatmul.bf16.gmra.mxu0 %v903
      %v929 = vpop.f32.mrf.mxu0
      %v930 = vadd.f32 %v879, %v929
      %v931 = vpop.f32.mrf.mxu0
      %v932 = vadd.f32 %v879, %v931
      %933 = vdwg.mxu0
      %v934 = vpack.c.bf16 %v915, %v915
      %v935 = vpack.c.bf16 %v917, %v917
      %v936 = vpack.c.bf16 %v920, %v920
      %v937 = vpack.c.bf16 %v922, %v922
      %v938 = vpack.c.bf16 %v925, %v925
      %v939 = vpack.c.bf16 %v927, %v927
      %v940 = vpack.c.bf16 %v930, %v930
      %v941 = vpack.c.bf16 %v932, %v932
      %v942 = vld [vmem:[%s4] sm:$0xf]
      %v943 = vld [vmem:[%s4 + $0x4] sm:$0xf]
      %v944 = vld [vmem:[%s4 + $0x8] sm:$0xf]
      %v945 = vld [vmem:[%s4 + $0xc] sm:$0xf]
      %v946 = vld [vmem:[%s5] sm:$0x1]
      %v948 = vperm.slane %v946, 0
      %v954 = vunpack.c.l.b16 %v942
      %v955 = vunpack.c.l.b16 %v943
      %v956 = vunpack.c.l.b16 %v944
      %v957 = vunpack.c.l.b16 %v945
      %v958 = vpack.c.b16 %v955, %v954
      %v959 = vpack.c.b16 %v957, %v956
      %v963 = vsel %vm505, %v869, 0
      %v966 = vsel %vm505, %v870, 0
      %v969 = vsel %vm505, %v871, 0
      %v972 = vsel %vm505, %v872, 0
      %974 = vmatpush.bf16.msra.mxu0 0
      %975 = vmatpush.bf16.msra.mxu0 0
      %976 = vmatpush.bf16.msra.mxu0 0
      %977 = vmatpush.bf16.msra.mxu0 0
      %978 = vmatpush.bf16.msra.mxu0 0
      %979 = vmatpush.bf16.msra.mxu0 0
      %980 = vmatpush.bf16.msra.mxu0 %v959
      %981 = vmatpush.bf16.msra.mxu0 %v958
      %982 = vmatmul.bf16.gmra.mxu0 %v963
      %v983 = vpop.f32.mrf.mxu0
      %v984 = vadd.f32 %v948, %v983
      %v985 = vpop.f32.mrf.mxu0
      %v986 = vadd.f32 %v948, %v985
      %987 = vmatmul.bf16.gmra.mxu0 %v966
      %v988 = vpop.f32.mrf.mxu0
      %v989 = vadd.f32 %v948, %v988
      %v990 = vpop.f32.mrf.mxu0
      %v991 = vadd.f32 %v948, %v990
      %992 = vmatmul.bf16.gmra.mxu0 %v969
      %v993 = vpop.f32.mrf.mxu0
      %v994 = vadd.f32 %v948, %v993
      %v995 = vpop.f32.mrf.mxu0
      %v996 = vadd.f32 %v948, %v995
      %997 = vmatmul.bf16.gmra.mxu0 %v972
      %v998 = vpop.f32.mrf.mxu0
      %v999 = vadd.f32 %v948, %v998
      %v1000 = vpop.f32.mrf.mxu0
      %v1001 = vadd.f32 %v948, %v1000
      %1002 = vdwg.mxu0
      %v1003 = vpack.c.bf16 %v984, %v984
      %v1004 = vpack.c.bf16 %v986, %v986
      %v1005 = vpack.c.bf16 %v989, %v989
      %v1006 = vpack.c.bf16 %v991, %v991
      %v1007 = vpack.c.bf16 %v994, %v994
      %v1008 = vpack.c.bf16 %v996, %v996
      %v1009 = vpack.c.bf16 %v999, %v999
      %v1010 = vpack.c.bf16 %v1001, %v1001
      %v1019 = vunpack.c.l.b16 %v934
      %v1020 = vunpack.c.l.b16 %v935
      %v1021 = vunpack.c.l.b16 %v936
      %v1022 = vunpack.c.l.b16 %v937
      %v1023 = vunpack.c.l.b16 %v938
      %v1024 = vunpack.c.l.b16 %v939
      %v1025 = vunpack.c.l.b16 %v940
      %v1026 = vunpack.c.l.b16 %v941
      %v1027 = vpack.c.b16 %v1020, %v1019
      %v1028 = vpack.c.b16 %v1022, %v1021
      %v1029 = vpack.c.b16 %v1024, %v1023
      %v1030 = vpack.c.b16 %v1026, %v1025
      %v1039 = vunpack.c.l.b16 %v1003
      %v1040 = vunpack.c.l.b16 %v1004
      %v1041 = vunpack.c.l.b16 %v1005
      %v1042 = vunpack.c.l.b16 %v1006
      %v1043 = vunpack.c.l.b16 %v1007
      %v1044 = vunpack.c.l.b16 %v1008
      %v1045 = vunpack.c.l.b16 %v1009
      %v1046 = vunpack.c.l.b16 %v1010
      %v1047 = vpack.c.b16 %v1040, %v1039
      %v1048 = vpack.c.b16 %v1042, %v1041
      %v1049 = vpack.c.b16 %v1044, %v1043
      %v1050 = vpack.c.b16 %v1046, %v1045
      %vm1051 = vcmask 64512
      %v1053 = vsel %vm1051, %v1027, 0
      %v1056 = vsel %vm1051, %v1028, 0
      %v1059 = vsel %vm1051, %v1029, 0
      %v1062 = vsel %vm1051, %v1030, 0
      %v1065 = vsel %vm1051, %v1047, 0
      %v1068 = vsel %vm1051, %v1048, 0
      %v1071 = vsel %vm1051, %v1049, 0
      %v1074 = vsel %vm1051, %v1050, 0
      %1076 = vmatpush.bf16.xpose.msra.mxu0 0
      %1077 = vmatpush.bf16.xpose.msra.mxu0 0
      %1078 = vmatpush.bf16.xpose.msra.mxu0 0
      %1079 = vmatpush.bf16.xpose.msra.mxu0 0
      %1080 = vmatpush.bf16.xpose.msra.mxu0 %v1074
      %1081 = vmatpush.bf16.xpose.msra.mxu0 %v1071
      %1082 = vmatpush.bf16.xpose.msra.mxu0 %v1068
      %1083 = vmatpush.bf16.xpose.msra.mxu0 %v1065
      %1084 = vmatmul.bf16.gmra.mxu0 %v1053
      %v1085 = vpop.f32.mrf.mxu0
      %v1086 = vadd.f32 0.0, %v1085
      %v1087 = vpop.f32.mrf.mxu0
      %v1088 = vadd.f32 0.0, %v1087
      %1089 = vmatmul.bf16.gmra.mxu0 %v1056
      %v1090 = vpop.f32.mrf.mxu0
      %v1091 = vadd.f32 0.0, %v1090
      %v1092 = vpop.f32.mrf.mxu0
      %v1093 = vadd.f32 0.0, %v1092
      %1094 = vmatmul.bf16.gmra.mxu0 %v1059
      %v1095 = vpop.f32.mrf.mxu0
      %v1096 = vadd.f32 0.0, %v1095
      %v1097 = vpop.f32.mrf.mxu0
      %v1098 = vadd.f32 0.0, %v1097
      %1099 = vmatmul.bf16.gmra.mxu0 %v1062
      %v1100 = vpop.f32.mrf.mxu0
      %v1101 = vadd.f32 0.0, %v1100
      %v1102 = vpop.f32.mrf.mxu0
      %v1103 = vadd.f32 0.0, %v1102
      %1104 = vdwg.mxu0
      %vm1105 = vcmask 523264
      %v1106 = vsel %vm1105, %v1086, -inf
      %1107 = vmax.xlane.f32.xlu0 %v1106
      %v1108 = vpop.xlane.xlu0 %1107
      %v1109 = vsel %vm1105, %v1088, -inf
      %1110 = vmax.xlane.f32.xlu0 %v1109
      %v1111 = vpop.xlane.xlu0 %1110
      %v1112 = vsel %vm1105, %v1091, -inf
      %1113 = vmax.xlane.f32.xlu0 %v1112
      %v1114 = vpop.xlane.xlu0 %1113
      %v1115 = vsel %vm1105, %v1093, -inf
      %1116 = vmax.xlane.f32.xlu0 %v1115
      %v1117 = vpop.xlane.xlu0 %1116
      %v1118 = vsel %vm1105, %v1096, -inf
      %1119 = vmax.xlane.f32.xlu0 %v1118
      %v1120 = vpop.xlane.xlu0 %1119
      %v1121 = vsel %vm1105, %v1098, -inf
      %1122 = vmax.xlane.f32.xlu0 %v1121
      %v1123 = vpop.xlane.xlu0 %1122
      %v1124 = vsel %vm1105, %v1101, -inf
      %1125 = vmax.xlane.f32.xlu0 %v1124
      %v1126 = vpop.xlane.xlu0 %1125
      %v1127 = vsel %vm1105, %v1103, -inf
      %1128 = vmax.xlane.f32.xlu0 %v1127
      %v1129 = vpop.xlane.xlu0 %1128
      %v1130 = vsub.f32 %v1086, %v1108
      %v1131 = vsub.f32 %v1088, %v1111
      %v1132 = vsub.f32 %v1091, %v1114
      %v1133 = vsub.f32 %v1093, %v1117
      %v1134 = vsub.f32 %v1096, %v1120
      %v1135 = vsub.f32 %v1098, %v1123
      %v1136 = vsub.f32 %v1101, %v1126
      %v1137 = vsub.f32 %v1103, %v1129
      %v1138 = vmul.f32 %v1130, 1.442695
      %v1139 = vpow.pop %v1138
      %v1140 = vmul.f32 %v1131, 1.442695
      %v1141 = vpow.pop %v1140
      %v1142 = vmul.f32 %v1132, 1.442695
      %v1143 = vpow.pop %v1142
      %v1144 = vmul.f32 %v1133, 1.442695
      %v1145 = vpow.pop %v1144
      %v1146 = vmul.f32 %v1134, 1.442695
      %v1147 = vpow.pop %v1146
      %v1148 = vmul.f32 %v1135, 1.442695
      %v1149 = vpow.pop %v1148
      %v1150 = vmul.f32 %v1136, 1.442695
      %v1151 = vpow.pop %v1150
      %v1152 = vmul.f32 %v1137, 1.442695
      %v1153 = vpow.pop %v1152
      %v1154 = vsel %vm1105, %v1139, 0.0
      %1155 = vadd.xlane.f32.xlu0 %v1154
      %v1156 = vpop.xlane.xlu0 %1155
      %v1157 = vsel %vm1105, %v1141, 0.0
      %1158 = vadd.xlane.f32.xlu0 %v1157
      %v1159 = vpop.xlane.xlu0 %1158
      %v1160 = vsel %vm1105, %v1143, 0.0
      %1161 = vadd.xlane.f32.xlu0 %v1160
      %v1162 = vpop.xlane.xlu0 %1161
      %v1163 = vsel %vm1105, %v1145, 0.0
      %1164 = vadd.xlane.f32.xlu0 %v1163
      %v1165 = vpop.xlane.xlu0 %1164
      %v1166 = vsel %vm1105, %v1147, 0.0
      %1167 = vadd.xlane.f32.xlu0 %v1166
      %v1168 = vpop.xlane.xlu0 %1167
      %v1169 = vsel %vm1105, %v1149, 0.0
      %1170 = vadd.xlane.f32.xlu0 %v1169
      %v1171 = vpop.xlane.xlu0 %1170
      %v1172 = vsel %vm1105, %v1151, 0.0
      %1173 = vadd.xlane.f32.xlu0 %v1172
      %v1174 = vpop.xlane.xlu0 %1173
      %v1175 = vsel %vm1105, %v1153, 0.0
      %1176 = vadd.xlane.f32.xlu0 %v1175
      %v1177 = vpop.xlane.xlu0 %1176
      %v1178 = vrcp.pop %v1156
      %v1179 = vrcp.pop %v1159
      %v1180 = vrcp.pop %v1162
      %v1181 = vrcp.pop %v1165
      %v1182 = vrcp.pop %v1168
      %v1183 = vrcp.pop %v1171
      %v1184 = vrcp.pop %v1174
      %v1185 = vrcp.pop %v1177
      %v1186 = vmul.f32 %v1139, %v1178
      %v1187 = vmul.f32 %v1141, %v1179
      %v1188 = vmul.f32 %v1143, %v1180
      %v1189 = vmul.f32 %v1145, %v1181
      %v1190 = vmul.f32 %v1147, %v1182
      %v1191 = vmul.f32 %v1149, %v1183
      %v1192 = vmul.f32 %v1151, %v1184
      %v1193 = vmul.f32 %v1153, %v1185
      %v1194 = vpack.c.bf16 %v1187, %v1186
      %v1195 = vpack.c.bf16 %v1189, %v1188
      %v1196 = vpack.c.bf16 %v1191, %v1190
      %v1197 = vpack.c.bf16 %v1193, %v1192
      %1198 = vrot.lane.b32.xlu0 %v1047, 96
      %v1199 = vpop.permute.xlu0 %1198
      %1200 = vrot.lane.b32.xlu0 %v1048, 96
      %v1201 = vpop.permute.xlu0 %1200
      %1202 = vrot.lane.b32.xlu0 %v1049, 96
      %v1203 = vpop.permute.xlu0 %1202
      %1204 = vrot.lane.b32.xlu0 %v1050, 96
      %v1205 = vpop.permute.xlu0 %1204
      %v1211 = vsel %vm1105, %v1194, 0
      %v1214 = vsel %vm1105, %v1195, 0
      %v1217 = vsel %vm1105, %v1196, 0
      %v1220 = vsel %vm1105, %v1197, 0
      %1222 = vmatpush.bf16.msra.mxu0 0
      %1223 = vmatpush.bf16.msra.mxu0 0
      %1224 = vmatpush.bf16.msra.mxu0 0
      %1225 = vmatpush.bf16.msra.mxu0 0
      %1226 = vmatpush.bf16.msra.mxu0 %v1205
      %1227 = vmatpush.bf16.msra.mxu0 %v1203
      %1228 = vmatpush.bf16.msra.mxu0 %v1201
      %1229 = vmatpush.bf16.msra.mxu0 %v1199
      %1230 = vmatmul.bf16.gmra.mxu0 %v1211
      %v1231 = vpop.f32.mrf.mxu0
      %v1232 = vadd.f32 0.0, %v1231
      %v1233 = vpop.f32.mrf.mxu0
      %v1234 = vadd.f32 0.0, %v1233
      %1235 = vmatmul.bf16.gmra.mxu0 %v1214
      %v1236 = vpop.f32.mrf.mxu0
      %v1237 = vadd.f32 0.0, %v1236
      %v1238 = vpop.f32.mrf.mxu0
      %v1239 = vadd.f32 0.0, %v1238
      %1240 = vmatmul.bf16.gmra.mxu0 %v1217
      %v1241 = vpop.f32.mrf.mxu0
      %v1242 = vadd.f32 0.0, %v1241
      %v1243 = vpop.f32.mrf.mxu0
      %v1244 = vadd.f32 0.0, %v1243
      %1245 = vmatmul.bf16.gmra.mxu0 %v1220
      %v1246 = vpop.f32.mrf.mxu0
      %v1247 = vadd.f32 0.0, %v1246
      %v1248 = vpop.f32.mrf.mxu0
      %v1249 = vadd.f32 0.0, %v1248
      %1250 = vdwg.mxu0
      %1251 = vrot.lane.b32.xlu0 %v1027, 120
      %v1252 = vpop.permute.xlu0 %1251
      %1253 = vrot.lane.b32.xlu0 %v1028, 120
      %v1254 = vpop.permute.xlu0 %1253
      %1255 = vrot.lane.b32.xlu0 %v1029, 120
      %v1256 = vpop.permute.xlu0 %1255
      %1257 = vrot.lane.b32.xlu0 %v1030, 120
      %v1258 = vpop.permute.xlu0 %1257
      %1259 = vrot.lane.b32.xlu0 %v1047, 120
      %v1260 = vpop.permute.xlu0 %1259
      %1261 = vrot.lane.b32.xlu0 %v1048, 120
      %v1262 = vpop.permute.xlu0 %1261
      %1263 = vrot.lane.b32.xlu0 %v1049, 120
      %v1264 = vpop.permute.xlu0 %1263
      %1265 = vrot.lane.b32.xlu0 %v1050, 120
      %v1266 = vpop.permute.xlu0 %1265
      %v1268 = vsel %vm1051, %v1252, 0
      %v1271 = vsel %vm1051, %v1254, 0
      %v1274 = vsel %vm1051, %v1256, 0
      %v1277 = vsel %vm1051, %v1258, 0
      %v1280 = vsel %vm1051, %v1260, 0
      %v1283 = vsel %vm1051, %v1262, 0
      %v1286 = vsel %vm1051, %v1264, 0
      %v1289 = vsel %vm1051, %v1266, 0
      %1291 = vmatpush.bf16.xpose.msra.mxu0 0
      %1292 = vmatpush.bf16.xpose.msra.mxu0 0
      %1293 = vmatpush.bf16.xpose.msra.mxu0 0
      %1294 = vmatpush.bf16.xpose.msra.mxu0 0
      %1295 = vmatpush.bf16.xpose.msra.mxu0 %v1289
      %1296 = vmatpush.bf16.xpose.msra.mxu0 %v1286
      %1297 = vmatpush.bf16.xpose.msra.mxu0 %v1283
      %1298 = vmatpush.bf16.xpose.msra.mxu0 %v1280
      %1299 = vmatmul.bf16.gmra.mxu0 %v1268
      %v1300 = vpop.f32.mrf.mxu0
      %v1301 = vadd.f32 0.0, %v1300
      %v1302 = vpop.f32.mrf.mxu0
      %v1303 = vadd.f32 0.0, %v1302
      %1304 = vmatmul.bf16.gmra.mxu0 %v1271
      %v1305 = vpop.f32.mrf.mxu0
      %v1306 = vadd.f32 0.0, %v1305
      %v1307 = vpop.f32.mrf.mxu0
      %v1308 = vadd.f32 0.0, %v1307
      %1309 = vmatmul.bf16.gmra.mxu0 %v1274
      %v1310 = vpop.f32.mrf.mxu0
      %v1311 = vadd.f32 0.0, %v1310
      %v1312 = vpop.f32.mrf.mxu0
      %v1313 = vadd.f32 0.0, %v1312
      %1314 = vmatmul.bf16.gmra.mxu0 %v1277
      %v1315 = vpop.f32.mrf.mxu0
      %v1316 = vadd.f32 0.0, %v1315
      %v1317 = vpop.f32.mrf.mxu0
      %v1318 = vadd.f32 0.0, %v1317
      %1319 = vdwg.mxu0
      %v1320 = vsel %vm1105, %v1301, -inf
      %1321 = vmax.xlane.f32.xlu0 %v1320
      %v1322 = vpop.xlane.xlu0 %1321
      %v1323 = vsel %vm1105, %v1303, -inf
      %1324 = vmax.xlane.f32.xlu0 %v1323
      %v1325 = vpop.xlane.xlu0 %1324
      %v1326 = vsel %vm1105, %v1306, -inf
      %1327 = vmax.xlane.f32.xlu0 %v1326
      %v1328 = vpop.xlane.xlu0 %1327
      %v1329 = vsel %vm1105, %v1308, -inf
      %1330 = vmax.xlane.f32.xlu0 %v1329
      %v1331 = vpop.xlane.xlu0 %1330
      %v1332 = vsel %vm1105, %v1311, -inf
      %1333 = vmax.xlane.f32.xlu0 %v1332
      %v1334 = vpop.xlane.xlu0 %1333
      %v1335 = vsel %vm1105, %v1313, -inf
      %1336 = vmax.xlane.f32.xlu0 %v1335
      %v1337 = vpop.xlane.xlu0 %1336
      %v1338 = vsel %vm1105, %v1316, -inf
      %1339 = vmax.xlane.f32.xlu0 %v1338
      %v1340 = vpop.xlane.xlu0 %1339
      %v1341 = vsel %vm1105, %v1318, -inf
      %1342 = vmax.xlane.f32.xlu0 %v1341
      %v1343 = vpop.xlane.xlu0 %1342
      %v1344 = vsub.f32 %v1301, %v1322
      %v1345 = vsub.f32 %v1303, %v1325
      %v1346 = vsub.f32 %v1306, %v1328
      %v1347 = vsub.f32 %v1308, %v1331
      %v1348 = vsub.f32 %v1311, %v1334
      %v1349 = vsub.f32 %v1313, %v1337
      %v1350 = vsub.f32 %v1316, %v1340
      %v1351 = vsub.f32 %v1318, %v1343
      %v1352 = vmul.f32 %v1344, 1.442695
      %v1353 = vpow.pop %v1352
      %v1354 = vmul.f32 %v1345, 1.442695
      %v1355 = vpow.pop %v1354
      %v1356 = vmul.f32 %v1346, 1.442695
      %v1357 = vpow.pop %v1356
      %v1358 = vmul.f32 %v1347, 1.442695
      %v1359 = vpow.pop %v1358
      %v1360 = vmul.f32 %v1348, 1.442695
      %v1361 = vpow.pop %v1360
      %v1362 = vmul.f32 %v1349, 1.442695
      %v1363 = vpow.pop %v1362
      %v1364 = vmul.f32 %v1350, 1.442695
      %v1365 = vpow.pop %v1364
      %v1366 = vmul.f32 %v1351, 1.442695
      %v1367 = vpow.pop %v1366
      %v1368 = vsel %vm1105, %v1353, 0.0
      %1369 = vadd.xlane.f32.xlu0 %v1368
      %v1370 = vpop.xlane.xlu0 %1369
      %v1371 = vsel %vm1105, %v1355, 0.0
      %1372 = vadd.xlane.f32.xlu0 %v1371
      %v1373 = vpop.xlane.xlu0 %1372
      %v1374 = vsel %vm1105, %v1357, 0.0
      %1375 = vadd.xlane.f32.xlu0 %v1374
      %v1376 = vpop.xlane.xlu0 %1375
      %v1377 = vsel %vm1105, %v1359, 0.0
      %1378 = vadd.xlane.f32.xlu0 %v1377
      %v1379 = vpop.xlane.xlu0 %1378
      %v1380 = vsel %vm1105, %v1361, 0.0
      %1381 = vadd.xlane.f32.xlu0 %v1380
      %v1382 = vpop.xlane.xlu0 %1381
      %v1383 = vsel %vm1105, %v1363, 0.0
      %1384 = vadd.xlane.f32.xlu0 %v1383
      %v1385 = vpop.xlane.xlu0 %1384
      %v1386 = vsel %vm1105, %v1365, 0.0
      %1387 = vadd.xlane.f32.xlu0 %v1386
      %v1388 = vpop.xlane.xlu0 %1387
      %v1389 = vsel %vm1105, %v1367, 0.0
      %1390 = vadd.xlane.f32.xlu0 %v1389
      %v1391 = vpop.xlane.xlu0 %1390
      %v1392 = vrcp.pop %v1370
      %v1393 = vrcp.pop %v1373
      %v1394 = vrcp.pop %v1376
      %v1395 = vrcp.pop %v1379
      %v1396 = vrcp.pop %v1382
      %v1397 = vrcp.pop %v1385
      %v1398 = vrcp.pop %v1388
      %v1399 = vrcp.pop %v1391
      %v1400 = vmul.f32 %v1353, %v1392
      %v1401 = vmul.f32 %v1355, %v1393
      %v1402 = vmul.f32 %v1357, %v1394
      %v1403 = vmul.f32 %v1359, %v1395
      %v1404 = vmul.f32 %v1361, %v1396
      %v1405 = vmul.f32 %v1363, %v1397
      %v1406 = vmul.f32 %v1365, %v1398
      %v1407 = vmul.f32 %v1367, %v1399
      %v1408 = vpack.c.bf16 %v1401, %v1400
      %v1409 = vpack.c.bf16 %v1403, %v1402
      %v1410 = vpack.c.bf16 %v1405, %v1404
      %v1411 = vpack.c.bf16 %v1407, %v1406
      %1412 = vrot.lane.b32.xlu0 %v1047, 88
      %v1413 = vpop.permute.xlu0 %1412
      %1414 = vrot.lane.b32.xlu0 %v1048, 88
      %v1415 = vpop.permute.xlu0 %1414
      %1416 = vrot.lane.b32.xlu0 %v1049, 88
      %v1417 = vpop.permute.xlu0 %1416
      %1418 = vrot.lane.b32.xlu0 %v1050, 88
      %v1419 = vpop.permute.xlu0 %1418
      %v1425 = vsel %vm1105, %v1408, 0
      %v1428 = vsel %vm1105, %v1409, 0
      %v1431 = vsel %vm1105, %v1410, 0
      %v1434 = vsel %vm1105, %v1411, 0
      %1436 = vmatpush.bf16.msra.mxu0 0
      %1437 = vmatpush.bf16.msra.mxu0 0
      %1438 = vmatpush.bf16.msra.mxu0 0
      %1439 = vmatpush.bf16.msra.mxu0 0
      %1440 = vmatpush.bf16.msra.mxu0 %v1419
      %1441 = vmatpush.bf16.msra.mxu0 %v1417
      %1442 = vmatpush.bf16.msra.mxu0 %v1415
      %1443 = vmatpush.bf16.msra.mxu0 %v1413
      %1444 = vmatmul.bf16.gmra.mxu0 %v1425
      %v1445 = vpop.f32.mrf.mxu0
      %v1446 = vadd.f32 0.0, %v1445
      %v1447 = vpop.f32.mrf.mxu0
      %v1448 = vadd.f32 0.0, %v1447
      %1449 = vmatmul.bf16.gmra.mxu0 %v1428
      %v1450 = vpop.f32.mrf.mxu0
      %v1451 = vadd.f32 0.0, %v1450
      %v1452 = vpop.f32.mrf.mxu0
      %v1453 = vadd.f32 0.0, %v1452
      %1454 = vmatmul.bf16.gmra.mxu0 %v1431
      %v1455 = vpop.f32.mrf.mxu0
      %v1456 = vadd.f32 0.0, %v1455
      %v1457 = vpop.f32.mrf.mxu0
      %v1458 = vadd.f32 0.0, %v1457
      %1459 = vmatmul.bf16.gmra.mxu0 %v1434
      %v1460 = vpop.f32.mrf.mxu0
      %v1461 = vadd.f32 0.0, %v1460
      %v1462 = vpop.f32.mrf.mxu0
      %v1463 = vadd.f32 0.0, %v1462
      %1464 = vdwg.mxu0
      %1465 = vrot.lane.b32.xlu0 %v1027, 112
      %v1466 = vpop.permute.xlu0 %1465
      %1467 = vrot.lane.b32.xlu0 %v1028, 112
      %v1468 = vpop.permute.xlu0 %1467
      %1469 = vrot.lane.b32.xlu0 %v1029, 112
      %v1470 = vpop.permute.xlu0 %1469
      %1471 = vrot.lane.b32.xlu0 %v1030, 112
      %v1472 = vpop.permute.xlu0 %1471
      %1473 = vrot.lane.b32.xlu0 %v1047, 112
      %v1474 = vpop.permute.xlu0 %1473
      %1475 = vrot.lane.b32.xlu0 %v1048, 112
      %v1476 = vpop.permute.xlu0 %1475
      %1477 = vrot.lane.b32.xlu0 %v1049, 112
      %v1478 = vpop.permute.xlu0 %1477
      %1479 = vrot.lane.b32.xlu0 %v1050, 112
      %v1480 = vpop.permute.xlu0 %1479
      %v1482 = vsel %vm1051, %v1466, 0
      %v1485 = vsel %vm1051, %v1468, 0
      %v1488 = vsel %vm1051, %v1470, 0
      %v1491 = vsel %vm1051, %v1472, 0
      %v1494 = vsel %vm1051, %v1474, 0
      %v1497 = vsel %vm1051, %v1476, 0
      %v1500 = vsel %vm1051, %v1478, 0
      %v1503 = vsel %vm1051, %v1480, 0
      %1505 = vmatpush.bf16.xpose.msra.mxu0 0
      %1506 = vmatpush.bf16.xpose.msra.mxu0 0
      %1507 = vmatpush.bf16.xpose.msra.mxu0 0
      %1508 = vmatpush.bf16.xpose.msra.mxu0 0
      %1509 = vmatpush.bf16.xpose.msra.mxu0 %v1503
      %1510 = vmatpush.bf16.xpose.msra.mxu0 %v1500
      %1511 = vmatpush.bf16.xpose.msra.mxu0 %v1497
      %1512 = vmatpush.bf16.xpose.msra.mxu0 %v1494
      %1513 = vmatmul.bf16.gmra.mxu0 %v1482
      %v1514 = vpop.f32.mrf.mxu0
      %v1515 = vadd.f32 0.0, %v1514
      %v1516 = vpop.f32.mrf.mxu0
      %v1517 = vadd.f32 0.0, %v1516
      %1518 = vmatmul.bf16.gmra.mxu0 %v1485
      %v1519 = vpop.f32.mrf.mxu0
      %v1520 = vadd.f32 0.0, %v1519
      %v1521 = vpop.f32.mrf.mxu0
      %v1522 = vadd.f32 0.0, %v1521
      %1523 = vmatmul.bf16.gmra.mxu0 %v1488
      %v1524 = vpop.f32.mrf.mxu0
      %v1525 = vadd.f32 0.0, %v1524
      %v1526 = vpop.f32.mrf.mxu0
      %v1527 = vadd.f32 0.0, %v1526
      %1528 = vmatmul.bf16.gmra.mxu0 %v1491
      %v1529 = vpop.f32.mrf.mxu0
      %v1530 = vadd.f32 0.0, %v1529
      %v1531 = vpop.f32.mrf.mxu0
      %v1532 = vadd.f32 0.0, %v1531
      %1533 = vdwg.mxu0
      %v1534 = vsel %vm1105, %v1515, -inf
      %1535 = vmax.xlane.f32.xlu0 %v1534
      %v1536 = vpop.xlane.xlu0 %1535
      %v1537 = vsel %vm1105, %v1517, -inf
      %1538 = vmax.xlane.f32.xlu0 %v1537
      %v1539 = vpop.xlane.xlu0 %1538
      %v1540 = vsel %vm1105, %v1520, -inf
      %1541 = vmax.xlane.f32.xlu0 %v1540
      %v1542 = vpop.xlane.xlu0 %1541
      %v1543 = vsel %vm1105, %v1522, -inf
      %1544 = vmax.xlane.f32.xlu0 %v1543
      %v1545 = vpop.xlane.xlu0 %1544
      %v1546 = vsel %vm1105, %v1525, -inf
      %1547 = vmax.xlane.f32.xlu0 %v1546
      %v1548 = vpop.xlane.xlu0 %1547
      %v1549 = vsel %vm1105, %v1527, -inf
      %1550 = vmax.xlane.f32.xlu0 %v1549
      %v1551 = vpop.xlane.xlu0 %1550
      %v1552 = vsel %vm1105, %v1530, -inf
      %1553 = vmax.xlane.f32.xlu0 %v1552
      %v1554 = vpop.xlane.xlu0 %1553
      %v1555 = vsel %vm1105, %v1532, -inf
      %1556 = vmax.xlane.f32.xlu0 %v1555
      %v1557 = vpop.xlane.xlu0 %1556
      %v1558 = vsub.f32 %v1515, %v1536
      %v1559 = vsub.f32 %v1517, %v1539
      %v1560 = vsub.f32 %v1520, %v1542
      %v1561 = vsub.f32 %v1522, %v1545
      %v1562 = vsub.f32 %v1525, %v1548
      %v1563 = vsub.f32 %v1527, %v1551
      %v1564 = vsub.f32 %v1530, %v1554
      %v1565 = vsub.f32 %v1532, %v1557
      %v1566 = vmul.f32 %v1558, 1.442695
      %v1567 = vpow.pop %v1566
      %v1568 = vmul.f32 %v1559, 1.442695
      %v1569 = vpow.pop %v1568
      %v1570 = vmul.f32 %v1560, 1.442695
      %v1571 = vpow.pop %v1570
      %v1572 = vmul.f32 %v1561, 1.442695
      %v1573 = vpow.pop %v1572
      %v1574 = vmul.f32 %v1562, 1.442695
      %v1575 = vpow.pop %v1574
      %v1576 = vmul.f32 %v1563, 1.442695
      %v1577 = vpow.pop %v1576
      %v1578 = vmul.f32 %v1564, 1.442695
      %v1579 = vpow.pop %v1578
      %v1580 = vmul.f32 %v1565, 1.442695
      %v1581 = vpow.pop %v1580
      %v1582 = vsel %vm1105, %v1567, 0.0
      %1583 = vadd.xlane.f32.xlu0 %v1582
      %v1584 = vpop.xlane.xlu0 %1583
      %v1585 = vsel %vm1105, %v1569, 0.0
      %1586 = vadd.xlane.f32.xlu0 %v1585
      %v1587 = vpop.xlane.xlu0 %1586
      %v1588 = vsel %vm1105, %v1571, 0.0
      %1589 = vadd.xlane.f32.xlu0 %v1588
      %v1590 = vpop.xlane.xlu0 %1589
      %v1591 = vsel %vm1105, %v1573, 0.0
      %1592 = vadd.xlane.f32.xlu0 %v1591
      %v1593 = vpop.xlane.xlu0 %1592
      %v1594 = vsel %vm1105, %v1575, 0.0
      %1595 = vadd.xlane.f32.xlu0 %v1594
      %v1596 = vpop.xlane.xlu0 %1595
      %v1597 = vsel %vm1105, %v1577, 0.0
      %1598 = vadd.xlane.f32.xlu0 %v1597
      %v1599 = vpop.xlane.xlu0 %1598
      %v1600 = vsel %vm1105, %v1579, 0.0
      %1601 = vadd.xlane.f32.xlu0 %v1600
      %v1602 = vpop.xlane.xlu0 %1601
      %v1603 = vsel %vm1105, %v1581, 0.0
      %1604 = vadd.xlane.f32.xlu0 %v1603
      %v1605 = vpop.xlane.xlu0 %1604
      %v1606 = vrcp.pop %v1584
      %v1607 = vrcp.pop %v1587
      %v1608 = vrcp.pop %v1590
      %v1609 = vrcp.pop %v1593
      %v1610 = vrcp.pop %v1596
      %v1611 = vrcp.pop %v1599
      %v1612 = vrcp.pop %v1602
      %v1613 = vrcp.pop %v1605
      %v1614 = vmul.f32 %v1567, %v1606
      %v1615 = vmul.f32 %v1569, %v1607
      %v1616 = vmul.f32 %v1571, %v1608
      %v1617 = vmul.f32 %v1573, %v1609
      %v1618 = vmul.f32 %v1575, %v1610
      %v1619 = vmul.f32 %v1577, %v1611
      %v1620 = vmul.f32 %v1579, %v1612
      %v1621 = vmul.f32 %v1581, %v1613
      %v1622 = vpack.c.bf16 %v1615, %v1614
      %v1623 = vpack.c.bf16 %v1617, %v1616
      %v1624 = vpack.c.bf16 %v1619, %v1618
      %v1625 = vpack.c.bf16 %v1621, %v1620
      %1626 = vrot.lane.b32.xlu0 %v1047, 80
      %v1627 = vpop.permute.xlu0 %1626
      %1628 = vrot.lane.b32.xlu0 %v1048, 80
      %v1629 = vpop.permute.xlu0 %1628
      %1630 = vrot.lane.b32.xlu0 %v1049, 80
      %v1631 = vpop.permute.xlu0 %1630
      %1632 = vrot.lane.b32.xlu0 %v1050, 80
      %v1633 = vpop.permute.xlu0 %1632
      %v1639 = vsel %vm1105, %v1622, 0
      %v1642 = vsel %vm1105, %v1623, 0
      %v1645 = vsel %vm1105, %v1624, 0
      %v1648 = vsel %vm1105, %v1625, 0
      %1650 = vmatpush.bf16.msra.mxu0 0
      %1651 = vmatpush.bf16.msra.mxu0 0
      %1652 = vmatpush.bf16.msra.mxu0 0
      %1653 = vmatpush.bf16.msra.mxu0 0
      %1654 = vmatpush.bf16.msra.mxu0 %v1633
      %1655 = vmatpush.bf16.msra.mxu0 %v1631
      %1656 = vmatpush.bf16.msra.mxu0 %v1629
      %1657 = vmatpush.bf16.msra.mxu0 %v1627
      %1658 = vmatmul.bf16.gmra.mxu0 %v1639
      %v1659 = vpop.f32.mrf.mxu0
      %v1660 = vadd.f32 0.0, %v1659
      %v1661 = vpop.f32.mrf.mxu0
      %v1662 = vadd.f32 0.0, %v1661
      %1663 = vmatmul.bf16.gmra.mxu0 %v1642
      %v1664 = vpop.f32.mrf.mxu0
      %v1665 = vadd.f32 0.0, %v1664
      %v1666 = vpop.f32.mrf.mxu0
      %v1667 = vadd.f32 0.0, %v1666
      %1668 = vmatmul.bf16.gmra.mxu0 %v1645
      %v1669 = vpop.f32.mrf.mxu0
      %v1670 = vadd.f32 0.0, %v1669
      %v1671 = vpop.f32.mrf.mxu0
      %v1672 = vadd.f32 0.0, %v1671
      %1673 = vmatmul.bf16.gmra.mxu0 %v1648
      %v1674 = vpop.f32.mrf.mxu0
      %v1675 = vadd.f32 0.0, %v1674
      %v1676 = vpop.f32.mrf.mxu0
      %v1677 = vadd.f32 0.0, %v1676
      %1678 = vdwg.mxu0
      %1679 = vrot.lane.b32.xlu0 %v1027, 104
      %v1680 = vpop.permute.xlu0 %1679
      %1681 = vrot.lane.b32.xlu0 %v1028, 104
      %v1682 = vpop.permute.xlu0 %1681
      %1683 = vrot.lane.b32.xlu0 %v1029, 104
      %v1684 = vpop.permute.xlu0 %1683
      %1685 = vrot.lane.b32.xlu0 %v1030, 104
      %v1686 = vpop.permute.xlu0 %1685
      %1687 = vrot.lane.b32.xlu0 %v1047, 104
      %v1688 = vpop.permute.xlu0 %1687
      %1689 = vrot.lane.b32.xlu0 %v1048, 104
      %v1690 = vpop.permute.xlu0 %1689
      %1691 = vrot.lane.b32.xlu0 %v1049, 104
      %v1692 = vpop.permute.xlu0 %1691
      %1693 = vrot.lane.b32.xlu0 %v1050, 104
      %v1694 = vpop.permute.xlu0 %1693
      %v1696 = vsel %vm1051, %v1680, 0
      %v1699 = vsel %vm1051, %v1682, 0
      %v1702 = vsel %vm1051, %v1684, 0
      %v1705 = vsel %vm1051, %v1686, 0
      %v1708 = vsel %vm1051, %v1688, 0
      %v1711 = vsel %vm1051, %v1690, 0
      %v1714 = vsel %vm1051, %v1692, 0
      %v1717 = vsel %vm1051, %v1694, 0
      %1719 = vmatpush.bf16.xpose.msra.mxu0 0
      %1720 = vmatpush.bf16.xpose.msra.mxu0 0
      %1721 = vmatpush.bf16.xpose.msra.mxu0 0
      %1722 = vmatpush.bf16.xpose.msra.mxu0 0
      %1723 = vmatpush.bf16.xpose.msra.mxu0 %v1717
      %1724 = vmatpush.bf16.xpose.msra.mxu0 %v1714
      %1725 = vmatpush.bf16.xpose.msra.mxu0 %v1711
      %1726 = vmatpush.bf16.xpose.msra.mxu0 %v1708
      %1727 = vmatmul.bf16.gmra.mxu0 %v1696
      %v1728 = vpop.f32.mrf.mxu0
      %v1729 = vadd.f32 0.0, %v1728
      %v1730 = vpop.f32.mrf.mxu0
      %v1731 = vadd.f32 0.0, %v1730
      %1732 = vmatmul.bf16.gmra.mxu0 %v1699
      %v1733 = vpop.f32.mrf.mxu0
      %v1734 = vadd.f32 0.0, %v1733
      %v1735 = vpop.f32.mrf.mxu0
      %v1736 = vadd.f32 0.0, %v1735
      %1737 = vmatmul.bf16.gmra.mxu0 %v1702
      %v1738 = vpop.f32.mrf.mxu0
      %v1739 = vadd.f32 0.0, %v1738
      %v1740 = vpop.f32.mrf.mxu0
      %v1741 = vadd.f32 0.0, %v1740
      %1742 = vmatmul.bf16.gmra.mxu0 %v1705
      %v1743 = vpop.f32.mrf.mxu0
      %v1744 = vadd.f32 0.0, %v1743
      %v1745 = vpop.f32.mrf.mxu0
      %v1746 = vadd.f32 0.0, %v1745
      %1747 = vdwg.mxu0
      %v1748 = vsel %vm1105, %v1729, -inf
      %1749 = vmax.xlane.f32.xlu0 %v1748
      %v1750 = vpop.xlane.xlu0 %1749
      %v1751 = vsel %vm1105, %v1731, -inf
      %1752 = vmax.xlane.f32.xlu0 %v1751
      %v1753 = vpop.xlane.xlu0 %1752
      %v1754 = vsel %vm1105, %v1734, -inf
      %1755 = vmax.xlane.f32.xlu0 %v1754
      %v1756 = vpop.xlane.xlu0 %1755
      %v1757 = vsel %vm1105, %v1736, -inf
      %1758 = vmax.xlane.f32.xlu0 %v1757
      %v1759 = vpop.xlane.xlu0 %1758
      %v1760 = vsel %vm1105, %v1739, -inf
      %1761 = vmax.xlane.f32.xlu0 %v1760
      %v1762 = vpop.xlane.xlu0 %1761
      %v1763 = vsel %vm1105, %v1741, -inf
      %1764 = vmax.xlane.f32.xlu0 %v1763
      %v1765 = vpop.xlane.xlu0 %1764
      %v1766 = vsel %vm1105, %v1744, -inf
      %1767 = vmax.xlane.f32.xlu0 %v1766
      %v1768 = vpop.xlane.xlu0 %1767
      %v1769 = vsel %vm1105, %v1746, -inf
      %1770 = vmax.xlane.f32.xlu0 %v1769
      %v1771 = vpop.xlane.xlu0 %1770
      %v1772 = vsub.f32 %v1729, %v1750
      %v1773 = vsub.f32 %v1731, %v1753
      %v1774 = vsub.f32 %v1734, %v1756
      %v1775 = vsub.f32 %v1736, %v1759
      %v1776 = vsub.f32 %v1739, %v1762
      %v1777 = vsub.f32 %v1741, %v1765
      %v1778 = vsub.f32 %v1744, %v1768
      %v1779 = vsub.f32 %v1746, %v1771
      %v1780 = vmul.f32 %v1772, 1.442695
      %v1781 = vpow.pop %v1780
      %v1782 = vmul.f32 %v1773, 1.442695
      %v1783 = vpow.pop %v1782
      %v1784 = vmul.f32 %v1774, 1.442695
      %v1785 = vpow.pop %v1784
      %v1786 = vmul.f32 %v1775, 1.442695
      %v1787 = vpow.pop %v1786
      %v1788 = vmul.f32 %v1776, 1.442695
      %v1789 = vpow.pop %v1788
      %v1790 = vmul.f32 %v1777, 1.442695
      %v1791 = vpow.pop %v1790
      %v1792 = vmul.f32 %v1778, 1.442695
      %v1793 = vpow.pop %v1792
      %v1794 = vmul.f32 %v1779, 1.442695
      %v1795 = vpow.pop %v1794
      %v1796 = vsel %vm1105, %v1781, 0.0
      %1797 = vadd.xlane.f32.xlu0 %v1796
      %v1798 = vpop.xlane.xlu0 %1797
      %v1799 = vsel %vm1105, %v1783, 0.0
      %1800 = vadd.xlane.f32.xlu0 %v1799
      %v1801 = vpop.xlane.xlu0 %1800
      %v1802 = vsel %vm1105, %v1785, 0.0
      %1803 = vadd.xlane.f32.xlu0 %v1802
      %v1804 = vpop.xlane.xlu0 %1803
      %v1805 = vsel %vm1105, %v1787, 0.0
      %1806 = vadd.xlane.f32.xlu0 %v1805
      %v1807 = vpop.xlane.xlu0 %1806
      %v1808 = vsel %vm1105, %v1789, 0.0
      %1809 = vadd.xlane.f32.xlu0 %v1808
      %v1810 = vpop.xlane.xlu0 %1809
      %v1811 = vsel %vm1105, %v1791, 0.0
      %1812 = vadd.xlane.f32.xlu0 %v1811
      %v1813 = vpop.xlane.xlu0 %1812
      %v1814 = vsel %vm1105, %v1793, 0.0
      %1815 = vadd.xlane.f32.xlu0 %v1814
      %v1816 = vpop.xlane.xlu0 %1815
      %v1817 = vsel %vm1105, %v1795, 0.0
      %1818 = vadd.xlane.f32.xlu0 %v1817
      %v1819 = vpop.xlane.xlu0 %1818
      %v1820 = vrcp.pop %v1798
      %v1821 = vrcp.pop %v1801
      %v1822 = vrcp.pop %v1804
      %v1823 = vrcp.pop %v1807
      %v1824 = vrcp.pop %v1810
      %v1825 = vrcp.pop %v1813
      %v1826 = vrcp.pop %v1816
      %v1827 = vrcp.pop %v1819
      %v1828 = vmul.f32 %v1781, %v1820
      %v1829 = vmul.f32 %v1783, %v1821
      %v1830 = vmul.f32 %v1785, %v1822
      %v1831 = vmul.f32 %v1787, %v1823
      %v1832 = vmul.f32 %v1789, %v1824
      %v1833 = vmul.f32 %v1791, %v1825
      %v1834 = vmul.f32 %v1793, %v1826
      %v1835 = vmul.f32 %v1795, %v1827
      %v1836 = vpack.c.bf16 %v1829, %v1828
      %v1837 = vpack.c.bf16 %v1831, %v1830
      %v1838 = vpack.c.bf16 %v1833, %v1832
      %v1839 = vpack.c.bf16 %v1835, %v1834
      %1840 = vrot.lane.b32.xlu0 %v1047, 72
      %v1841 = vpop.permute.xlu0 %1840
      %1842 = vrot.lane.b32.xlu0 %v1048, 72
      %v1843 = vpop.permute.xlu0 %1842
      %1844 = vrot.lane.b32.xlu0 %v1049, 72
      %v1845 = vpop.permute.xlu0 %1844
      %1846 = vrot.lane.b32.xlu0 %v1050, 72
      %v1847 = vpop.permute.xlu0 %1846
      %v1853 = vsel %vm1105, %v1836, 0
      %v1856 = vsel %vm1105, %v1837, 0
      %v1859 = vsel %vm1105, %v1838, 0
      %v1862 = vsel %vm1105, %v1839, 0
      %1864 = vmatpush.bf16.msra.mxu0 0
      %1865 = vmatpush.bf16.msra.mxu0 0
      %1866 = vmatpush.bf16.msra.mxu0 0
      %1867 = vmatpush.bf16.msra.mxu0 0
      %1868 = vmatpush.bf16.msra.mxu0 %v1847
      %1869 = vmatpush.bf16.msra.mxu0 %v1845
      %1870 = vmatpush.bf16.msra.mxu0 %v1843
      %1871 = vmatpush.bf16.msra.mxu0 %v1841
      %1872 = vmatmul.bf16.gmra.mxu0 %v1853
      %v1873 = vpop.f32.mrf.mxu0
      %v1874 = vadd.f32 0.0, %v1873
      %v1875 = vpop.f32.mrf.mxu0
      %v1876 = vadd.f32 0.0, %v1875
      %1877 = vmatmul.bf16.gmra.mxu0 %v1856
      %v1878 = vpop.f32.mrf.mxu0
      %v1879 = vadd.f32 0.0, %v1878
      %v1880 = vpop.f32.mrf.mxu0
      %v1881 = vadd.f32 0.0, %v1880
      %1882 = vmatmul.bf16.gmra.mxu0 %v1859
      %v1883 = vpop.f32.mrf.mxu0
      %v1884 = vadd.f32 0.0, %v1883
      %v1885 = vpop.f32.mrf.mxu0
      %v1886 = vadd.f32 0.0, %v1885
      %1887 = vmatmul.bf16.gmra.mxu0 %v1862
      %v1888 = vpop.f32.mrf.mxu0
      %v1889 = vadd.f32 0.0, %v1888
      %v1890 = vpop.f32.mrf.mxu0
      %v1891 = vadd.f32 0.0, %v1890
      %1892 = vdwg.mxu0
      %1901 = vrot.lane.b32.xlu0 %v1446, 8
      %v1902 = vpop.permute.xlu0 %1901
      %1903 = vrot.lane.b32.xlu0 %v1448, 8
      %v1904 = vpop.permute.xlu0 %1903
      %1905 = vrot.lane.b32.xlu0 %v1451, 8
      %v1906 = vpop.permute.xlu0 %1905
      %1907 = vrot.lane.b32.xlu0 %v1453, 8
      %v1908 = vpop.permute.xlu0 %1907
      %1909 = vrot.lane.b32.xlu0 %v1456, 8
      %v1910 = vpop.permute.xlu0 %1909
      %1911 = vrot.lane.b32.xlu0 %v1458, 8
      %v1912 = vpop.permute.xlu0 %1911
      %1913 = vrot.lane.b32.xlu0 %v1461, 8
      %v1914 = vpop.permute.xlu0 %1913
      %1915 = vrot.lane.b32.xlu0 %v1463, 8
      %v1916 = vpop.permute.xlu0 %1915
      %1933 = vrot.lane.b32.xlu0 %v1660, 16
      %v1934 = vpop.permute.xlu0 %1933
      %1935 = vrot.lane.b32.xlu0 %v1662, 16
      %v1936 = vpop.permute.xlu0 %1935
      %1937 = vrot.lane.b32.xlu0 %v1665, 16
      %v1938 = vpop.permute.xlu0 %1937
      %1939 = vrot.lane.b32.xlu0 %v1667, 16
      %v1940 = vpop.permute.xlu0 %1939
      %1941 = vrot.lane.b32.xlu0 %v1670, 16
      %v1942 = vpop.permute.xlu0 %1941
      %1943 = vrot.lane.b32.xlu0 %v1672, 16
      %v1944 = vpop.permute.xlu0 %1943
      %1945 = vrot.lane.b32.xlu0 %v1675, 16
      %v1946 = vpop.permute.xlu0 %1945
      %1947 = vrot.lane.b32.xlu0 %v1677, 16
      %v1948 = vpop.permute.xlu0 %1947
      %1965 = vrot.lane.b32.xlu0 %v1874, 24
      %v1966 = vpop.permute.xlu0 %1965
      %1967 = vrot.lane.b32.xlu0 %v1876, 24
      %v1968 = vpop.permute.xlu0 %1967
      %1969 = vrot.lane.b32.xlu0 %v1879, 24
      %v1970 = vpop.permute.xlu0 %1969
      %1971 = vrot.lane.b32.xlu0 %v1881, 24
      %v1972 = vpop.permute.xlu0 %1971
      %1973 = vrot.lane.b32.xlu0 %v1884, 24
      %v1974 = vpop.permute.xlu0 %1973
      %1975 = vrot.lane.b32.xlu0 %v1886, 24
      %v1976 = vpop.permute.xlu0 %1975
      %1977 = vrot.lane.b32.xlu0 %v1889, 24
      %v1978 = vpop.permute.xlu0 %1977
      %1979 = vrot.lane.b32.xlu0 %v1891, 24
      %v1980 = vpop.permute.xlu0 %1979
      %v1989 = vsel %vm1051, %v1232, %v1902
      %v1990 = vsel %vm1051, %v1234, %v1904
      %v1991 = vsel %vm1051, %v1237, %v1906
      %v1992 = vsel %vm1051, %v1239, %v1908
      %v1993 = vsel %vm1051, %v1242, %v1910
      %v1994 = vsel %vm1051, %v1244, %v1912
      %v1995 = vsel %vm1051, %v1247, %v1914
      %v1996 = vsel %vm1051, %v1249, %v1916
      %vm1997 = vcmask 130048
      %v1998 = vsel %vm1997, %v1989, %v1934
      %v1999 = vsel %vm1997, %v1990, %v1936
      %v2000 = vsel %vm1997, %v1991, %v1938
      %v2001 = vsel %vm1997, %v1992, %v1940
      %v2002 = vsel %vm1997, %v1993, %v1942
      %v2003 = vsel %vm1997, %v1994, %v1944
      %v2004 = vsel %vm1997, %v1995, %v1946
      %v2005 = vsel %vm1997, %v1996, %v1948
      %vm2006 = vcmask 195584
      %v2007 = vsel %vm2006, %v1998, %v1966
      %v2008 = vsel %vm2006, %v1999, %v1968
      %v2009 = vsel %vm2006, %v2000, %v1970
      %v2010 = vsel %vm2006, %v2001, %v1972
      %v2011 = vsel %vm2006, %v2002, %v1974
      %v2012 = vsel %vm2006, %v2003, %v1976
      %v2013 = vsel %vm2006, %v2004, %v1978
      %v2014 = vsel %vm2006, %v2005, %v1980
      %v2015 = vpack.c.bf16 %v2008, %v2007
      %v2016 = vpack.c.bf16 %v2010, %v2009
      %v2017 = vpack.c.bf16 %v2012, %v2011
      %v2018 = vpack.c.bf16 %v2014, %v2013
      %v2019 = vld [vmem:[%s6] sm:$0xf]
      %v2020 = vld [vmem:[%s6 + $0x4] sm:$0xf]
      %v2021 = vld [vmem:[%s6 + $0x8] sm:$0xf]
      %v2022 = vld [vmem:[%s6 + $0xc] sm:$0xf]
      %v2023 = vld [vmem:[%s7] sm:$0x1]
      %v2025 = vperm.slane %v2023, 0
      %v2031 = vunpack.c.l.b16 %v2019
      %v2032 = vunpack.c.l.b16 %v2020
      %v2033 = vunpack.c.l.b16 %v2021
      %v2034 = vunpack.c.l.b16 %v2022
      %v2035 = vpack.c.b16 %v2032, %v2031
      %v2036 = vpack.c.b16 %v2034, %v2033
      %v2040 = vsel %vm505, %v2015, 0
      %v2043 = vsel %vm505, %v2016, 0
      %v2046 = vsel %vm505, %v2017, 0
      %v2049 = vsel %vm505, %v2018, 0
      %2051 = vmatpush.bf16.msra.mxu0 0
      %2052 = vmatpush.bf16.msra.mxu0 0
      %2053 = vmatpush.bf16.msra.mxu0 0
      %2054 = vmatpush.bf16.msra.mxu0 0
      %2055 = vmatpush.bf16.msra.mxu0 0
      %2056 = vmatpush.bf16.msra.mxu0 0
      %2057 = vmatpush.bf16.msra.mxu0 %v2036
      %2058 = vmatpush.bf16.msra.mxu0 %v2035
      %2059 = vmatmul.bf16.gmra.mxu0 %v2040
      %v2060 = vpop.f32.mrf.mxu0
      %v2061 = vadd.f32 %v2025, %v2060
      %v2062 = vpop.f32.mrf.mxu0
      %v2063 = vadd.f32 %v2025, %v2062
      %2064 = vmatmul.bf16.gmra.mxu0 %v2043
      %v2065 = vpop.f32.mrf.mxu0
      %v2066 = vadd.f32 %v2025, %v2065
      %v2067 = vpop.f32.mrf.mxu0
      %v2068 = vadd.f32 %v2025, %v2067
      %2069 = vmatmul.bf16.gmra.mxu0 %v2046
      %v2070 = vpop.f32.mrf.mxu0
      %v2071 = vadd.f32 %v2025, %v2070
      %v2072 = vpop.f32.mrf.mxu0
      %v2073 = vadd.f32 %v2025, %v2072
      %2074 = vmatmul.bf16.gmra.mxu0 %v2049
      %v2075 = vpop.f32.mrf.mxu0
      %v2076 = vadd.f32 %v2025, %v2075
      %v2077 = vpop.f32.mrf.mxu0
      %v2078 = vadd.f32 %v2025, %v2077
      %2079 = vdwg.mxu0
      %v2080 = vadd.f32 %v489, %v2061
      %v2081 = vadd.f32 %v490, %v2063
      %v2082 = vadd.f32 %v491, %v2066
      %v2083 = vadd.f32 %v492, %v2068
      %v2084 = vadd.f32 %v493, %v2071
      %v2085 = vadd.f32 %v494, %v2073
      %v2086 = vadd.f32 %v495, %v2076
      %v2087 = vadd.f32 %v496, %v2078
      %v2088 = vsel %vm505, %v2080, 0.0
      %2089 = vadd.xlane.f32.xlu0 %v2088
      %v2090 = vpop.xlane.xlu0 %2089
      %v2091 = vsel %vm505, %v2081, 0.0
      %2092 = vadd.xlane.f32.xlu0 %v2091
      %v2093 = vpop.xlane.xlu0 %2092
      %v2094 = vsel %vm505, %v2082, 0.0
      %2095 = vadd.xlane.f32.xlu0 %v2094
      %v2096 = vpop.xlane.xlu0 %2095
      %v2097 = vsel %vm505, %v2083, 0.0
      %2098 = vadd.xlane.f32.xlu0 %v2097
      %v2099 = vpop.xlane.xlu0 %2098
      %v2100 = vsel %vm505, %v2084, 0.0
      %2101 = vadd.xlane.f32.xlu0 %v2100
      %v2102 = vpop.xlane.xlu0 %2101
      %v2103 = vsel %vm505, %v2085, 0.0
      %2104 = vadd.xlane.f32.xlu0 %v2103
      %v2105 = vpop.xlane.xlu0 %2104
      %v2106 = vsel %vm505, %v2086, 0.0
      %2107 = vadd.xlane.f32.xlu0 %v2106
      %v2108 = vpop.xlane.xlu0 %2107
      %v2109 = vsel %vm505, %v2087, 0.0
      %2110 = vadd.xlane.f32.xlu0 %v2109
      %v2111 = vpop.xlane.xlu0 %2110
      %v2112 = vmul.f32 %v2090, %v536
      %v2113 = vmul.f32 %v2093, %v536
      %v2114 = vmul.f32 %v2096, %v536
      %v2115 = vmul.f32 %v2099, %v536
      %v2116 = vmul.f32 %v2102, %v536
      %v2117 = vmul.f32 %v2105, %v536
      %v2118 = vmul.f32 %v2108, %v536
      %v2119 = vmul.f32 %v2111, %v536
      %v2120 = vsub.f32 %v2080, %v2112
      %v2121 = vsub.f32 %v2081, %v2113
      %v2122 = vsub.f32 %v2082, %v2114
      %v2123 = vsub.f32 %v2083, %v2115
      %v2124 = vsub.f32 %v2084, %v2116
      %v2125 = vsub.f32 %v2085, %v2117
      %v2126 = vsub.f32 %v2086, %v2118
      %v2127 = vsub.f32 %v2087, %v2119
      %v2128 = vmul.f32 %v2120, %v2120
      %v2129 = vmul.f32 %v2121, %v2121
      %v2130 = vmul.f32 %v2122, %v2122
      %v2131 = vmul.f32 %v2123, %v2123
      %v2132 = vmul.f32 %v2124, %v2124
      %v2133 = vmul.f32 %v2125, %v2125
      %v2134 = vmul.f32 %v2126, %v2126
      %v2135 = vmul.f32 %v2127, %v2127
      %v2136 = vsel %vm505, %v2128, 0.0
      %2137 = vadd.xlane.f32.xlu0 %v2136
      %v2138 = vpop.xlane.xlu0 %2137
      %v2139 = vsel %vm505, %v2129, 0.0
      %2140 = vadd.xlane.f32.xlu0 %v2139
      %v2141 = vpop.xlane.xlu0 %2140
      %v2142 = vsel %vm505, %v2130, 0.0
      %2143 = vadd.xlane.f32.xlu0 %v2142
      %v2144 = vpop.xlane.xlu0 %2143
      %v2145 = vsel %vm505, %v2131, 0.0
      %2146 = vadd.xlane.f32.xlu0 %v2145
      %v2147 = vpop.xlane.xlu0 %2146
      %v2148 = vsel %vm505, %v2132, 0.0
      %2149 = vadd.xlane.f32.xlu0 %v2148
      %v2150 = vpop.xlane.xlu0 %2149
      %v2151 = vsel %vm505, %v2133, 0.0
      %2152 = vadd.xlane.f32.xlu0 %v2151
      %v2153 = vpop.xlane.xlu0 %2152
      %v2154 = vsel %vm505, %v2134, 0.0
      %2155 = vadd.xlane.f32.xlu0 %v2154
      %v2156 = vpop.xlane.xlu0 %2155
      %v2157 = vsel %vm505, %v2135, 0.0
      %2158 = vadd.xlane.f32.xlu0 %v2157
      %v2159 = vpop.xlane.xlu0 %2158
      %v2160 = vmul.f32 %v2138, %v536
      %v2161 = vmul.f32 %v2141, %v536
      %v2162 = vmul.f32 %v2144, %v536
      %v2163 = vmul.f32 %v2147, %v536
      %v2164 = vmul.f32 %v2150, %v536
      %v2165 = vmul.f32 %v2153, %v536
      %v2166 = vmul.f32 %v2156, %v536
      %v2167 = vmul.f32 %v2159, %v536
      %v2168 = vadd.f32 %v2160, 1e-05
      %v2169 = vadd.f32 %v2161, 1e-05
      %v2170 = vadd.f32 %v2162, 1e-05
      %v2171 = vadd.f32 %v2163, 1e-05
      %v2172 = vadd.f32 %v2164, 1e-05
      %v2173 = vadd.f32 %v2165, 1e-05
      %v2174 = vadd.f32 %v2166, 1e-05
      %v2175 = vadd.f32 %v2167, 1e-05
      %v2176 = vrsqrt.pop %v2168
      %v2177 = vmul.f32 %v2176, %v2168
      %v2178 = vmul.f32 %v2177, %v2176
      %v2179 = vmul.f32 0.5, %v2178
      %v2180 = vsub.f32 1.5, %v2179
      %v2181 = vmul.f32 %v2176, %v2180
      %vm2182 = vweird.f32 %v2168
      %vm2183 = vweird.f32 %v2176
      %vm2184 = vmor %vm2182, %vm2183
      %v2185 = vsel %vm2184, %v2176, %v2181
      %v2186 = vrsqrt.pop %v2169
      %v2187 = vmul.f32 %v2186, %v2169
      %v2188 = vmul.f32 %v2187, %v2186
      %v2189 = vmul.f32 0.5, %v2188
      %v2190 = vsub.f32 1.5, %v2189
      %v2191 = vmul.f32 %v2186, %v2190
      %vm2192 = vweird.f32 %v2169
      %vm2193 = vweird.f32 %v2186
      %vm2194 = vmor %vm2192, %vm2193
      %v2195 = vsel %vm2194, %v2186, %v2191
      %v2196 = vrsqrt.pop %v2170
      %v2197 = vmul.f32 %v2196, %v2170
      %v2198 = vmul.f32 %v2197, %v2196
      %v2199 = vmul.f32 0.5, %v2198
      %v2200 = vsub.f32 1.5, %v2199
      %v2201 = vmul.f32 %v2196, %v2200
      %vm2202 = vweird.f32 %v2170
      %vm2203 = vweird.f32 %v2196
      %vm2204 = vmor %vm2202, %vm2203
      %v2205 = vsel %vm2204, %v2196, %v2201
      %v2206 = vrsqrt.pop %v2171
      %v2207 = vmul.f32 %v2206, %v2171
      %v2208 = vmul.f32 %v2207, %v2206
      %v2209 = vmul.f32 0.5, %v2208
      %v2210 = vsub.f32 1.5, %v2209
      %v2211 = vmul.f32 %v2206, %v2210
      %vm2212 = vweird.f32 %v2171
      %vm2213 = vweird.f32 %v2206
      %vm2214 = vmor %vm2212, %vm2213
      %v2215 = vsel %vm2214, %v2206, %v2211
      %v2216 = vrsqrt.pop %v2172
      %v2217 = vmul.f32 %v2216, %v2172
      %v2218 = vmul.f32 %v2217, %v2216
      %v2219 = vmul.f32 0.5, %v2218
      %v2220 = vsub.f32 1.5, %v2219
      %v2221 = vmul.f32 %v2216, %v2220
      %vm2222 = vweird.f32 %v2172
      %vm2223 = vweird.f32 %v2216
      %vm2224 = vmor %vm2222, %vm2223
      %v2225 = vsel %vm2224, %v2216, %v2221
      %v2226 = vrsqrt.pop %v2173
      %v2227 = vmul.f32 %v2226, %v2173
      %v2228 = vmul.f32 %v2227, %v2226
      %v2229 = vmul.f32 0.5, %v2228
      %v2230 = vsub.f32 1.5, %v2229
      %v2231 = vmul.f32 %v2226, %v2230
      %vm2232 = vweird.f32 %v2173
      %vm2233 = vweird.f32 %v2226
      %vm2234 = vmor %vm2232, %vm2233
      %v2235 = vsel %vm2234, %v2226, %v2231
      %v2236 = vrsqrt.pop %v2174
      %v2237 = vmul.f32 %v2236, %v2174
      %v2238 = vmul.f32 %v2237, %v2236
      %v2239 = vmul.f32 0.5, %v2238
      %v2240 = vsub.f32 1.5, %v2239
      %v2241 = vmul.f32 %v2236, %v2240
      %vm2242 = vweird.f32 %v2174
      %vm2243 = vweird.f32 %v2236
      %vm2244 = vmor %vm2242, %vm2243
      %v2245 = vsel %vm2244, %v2236, %v2241
      %v2246 = vrsqrt.pop %v2175
      %v2247 = vmul.f32 %v2246, %v2175
      %v2248 = vmul.f32 %v2247, %v2246
      %v2249 = vmul.f32 0.5, %v2248
      %v2250 = vsub.f32 1.5, %v2249
      %v2251 = vmul.f32 %v2246, %v2250
      %vm2252 = vweird.f32 %v2175
      %vm2253 = vweird.f32 %v2246
      %vm2254 = vmor %vm2252, %vm2253
      %v2255 = vsel %vm2254, %v2246, %v2251
      %v2256 = vmul.f32 %v2120, %v2185
      %v2257 = vmul.f32 %v2121, %v2195
      %v2258 = vmul.f32 %v2122, %v2205
      %v2259 = vmul.f32 %v2123, %v2215
      %v2260 = vmul.f32 %v2124, %v2225
      %v2261 = vmul.f32 %v2125, %v2235
      %v2262 = vmul.f32 %v2126, %v2245
      %v2263 = vmul.f32 %v2127, %v2255
      %v2264 = vpack.c.bf16 %v2257, %v2256
      %v2265 = vpack.c.bf16 %v2259, %v2258
      %v2266 = vpack.c.bf16 %v2261, %v2260
      %v2267 = vpack.c.bf16 %v2263, %v2262
      %v2268 = vld [vmem:[%s8] sm:$0xf]
      %v2269 = vld [vmem:[%s8 + $0x4] sm:$0xf]
      %v2270 = vld [vmem:[%s8 + $0x8] sm:$0xf]
      %v2271 = vld [vmem:[%s8 + $0xc] sm:$0xf]
      %v2272 = vld [vmem:[%s9] sm:$0x1]
      %v2274 = vperm.slane %v2272, 0
      %v2280 = vunpack.c.l.b16 %v2268
      %v2281 = vunpack.c.l.b16 %v2269
      %v2282 = vunpack.c.l.b16 %v2270
      %v2283 = vunpack.c.l.b16 %v2271
      %v2284 = vpack.c.b16 %v2281, %v2280
      %v2285 = vpack.c.b16 %v2283, %v2282
      %v2289 = vsel %vm505, %v2264, 0
      %v2292 = vsel %vm505, %v2265, 0
      %v2295 = vsel %vm505, %v2266, 0
      %v2298 = vsel %vm505, %v2267, 0
      %2300 = vmatpush.bf16.msra.mxu0 0
      %2301 = vmatpush.bf16.msra.mxu0 0
      %2302 = vmatpush.bf16.msra.mxu0 0
      %2303 = vmatpush.bf16.msra.mxu0 0
      %2304 = vmatpush.bf16.msra.mxu0 0
      %2305 = vmatpush.bf16.msra.mxu0 0
      %2306 = vmatpush.bf16.msra.mxu0 %v2285
      %2307 = vmatpush.bf16.msra.mxu0 %v2284
      %2308 = vmatmul.bf16.gmra.mxu0 %v2289
      %v2309 = vpop.f32.mrf.mxu0
      %v2310 = vadd.f32 %v2274, %v2309
      %v2311 = vpop.f32.mrf.mxu0
      %v2312 = vadd.f32 %v2274, %v2311
      %2313 = vmatmul.bf16.gmra.mxu0 %v2292
      %v2314 = vpop.f32.mrf.mxu0
      %v2315 = vadd.f32 %v2274, %v2314
      %v2316 = vpop.f32.mrf.mxu0
      %v2317 = vadd.f32 %v2274, %v2316
      %2318 = vmatmul.bf16.gmra.mxu0 %v2295
      %v2319 = vpop.f32.mrf.mxu0
      %v2320 = vadd.f32 %v2274, %v2319
      %v2321 = vpop.f32.mrf.mxu0
      %v2322 = vadd.f32 %v2274, %v2321
      %2323 = vmatmul.bf16.gmra.mxu0 %v2298
      %v2324 = vpop.f32.mrf.mxu0
      %v2325 = vadd.f32 %v2274, %v2324
      %v2326 = vpop.f32.mrf.mxu0
      %v2327 = vadd.f32 %v2274, %v2326
      %2328 = vdwg.mxu0
      %2329 = vst [vmem:[#allocation2] sm:$0xff] 0.0
      %2330 = vst [vmem:[#allocation2 + $0x8] sm:$0xff] 0.0
      %2331 = vst [vmem:[#allocation2 + $0x50] sm:$0xff] 0.0
      %2332 = vst [vmem:[#allocation2 + $0x58] sm:$0xff] 0.0
      %2333 = vst [vmem:[#allocation2 + $0x10] sm:$0xff] %v2310
      %2334 = vst [vmem:[#allocation2 + $0x18] sm:$0xff] %v2312
      %2335 = vst [vmem:[#allocation2 + $0x20] sm:$0xff] %v2315
      %2336 = vst [vmem:[#allocation2 + $0x28] sm:$0xff] %v2317
      %2337 = vst [vmem:[#allocation2 + $0x30] sm:$0xff] %v2320
      %2338 = vst [vmem:[#allocation2 + $0x38] sm:$0xff] %v2322
      %2339 = vst [vmem:[#allocation2 + $0x40] sm:$0xff] %v2325
      %2340 = vst [vmem:[#allocation2 + $0x48] sm:$0xff] %v2327
      %v2341 = vlaneseq
      %v2342 = vshrl.u32 %v2341, 7
      %v2343 = vadd.s32 %v2342, 8
      %v2344 = vadd.s32 %v2342, 16
      %v2345 = vadd.s32 %v2342, 24
      %v2346 = vadd.s32 %v2342, 32
      %v2347 = vadd.s32 %v2342, 40
      %v2348 = vadd.s32 %v2342, 48
      %v2349 = vadd.s32 %v2342, 56
      %vm2350 = vcmp.lt.s32.totalorder %v2342, 0
      %v2351 = vsub.s32 0, %v2342
      %v2352 = vsel %vm2350, %v2351, %v2342
      %v2353 = vshrl.u32 %v2352, 3
      %v2354 = vand.u32 %v2352, 7
      %v2355 = vsub.s32 0, %v2354
      %v2356 = vsel %vm2350, %v2355, %v2354
      %vm2357 = vcmp.lt.s32.totalorder %v2343, 0
      %v2358 = vsub.s32 0, %v2343
      %v2359 = vsel %vm2357, %v2358, %v2343
      %v2360 = vshrl.u32 %v2359, 3
      %v2361 = vand.u32 %v2359, 7
      %v2362 = vsub.s32 0, %v2361
      %v2363 = vsel %vm2357, %v2362, %v2361
      %vm2364 = vcmp.lt.s32.totalorder %v2344, 0
      %v2365 = vsub.s32 0, %v2344
      %v2366 = vsel %vm2364, %v2365, %v2344
      %v2367 = vshrl.u32 %v2366, 3
      %v2368 = vand.u32 %v2366, 7
      %v2369 = vsub.s32 0, %v2368
      %v2370 = vsel %vm2364, %v2369, %v2368
      %vm2371 = vcmp.lt.s32.totalorder %v2345, 0
      %v2372 = vsub.s32 0, %v2345
      %v2373 = vsel %vm2371, %v2372, %v2345
      %v2374 = vshrl.u32 %v2373, 3
      %v2375 = vand.u32 %v2373, 7
      %v2376 = vsub.s32 0, %v2375
      %v2377 = vsel %vm2371, %v2376, %v2375
      %vm2378 = vcmp.lt.s32.totalorder %v2346, 0
      %v2379 = vsub.s32 0, %v2346
      %v2380 = vsel %vm2378, %v2379, %v2346
      %v2381 = vshrl.u32 %v2380, 3
      %v2382 = vand.u32 %v2380, 7
      %v2383 = vsub.s32 0, %v2382
      %v2384 = vsel %vm2378, %v2383, %v2382
      %vm2385 = vcmp.lt.s32.totalorder %v2347, 0
      %v2386 = vsub.s32 0, %v2347
      %v2387 = vsel %vm2385, %v2386, %v2347
      %v2388 = vshrl.u32 %v2387, 3
      %v2389 = vand.u32 %v2387, 7
      %v2390 = vsub.s32 0, %v2389
      %v2391 = vsel %vm2385, %v2390, %v2389
      %vm2392 = vcmp.lt.s32.totalorder %v2348, 0
      %v2393 = vsub.s32 0, %v2348
      %v2394 = vsel %vm2392, %v2393, %v2348
      %v2395 = vshrl.u32 %v2394, 3
      %v2396 = vand.u32 %v2394, 7
      %v2397 = vsub.s32 0, %v2396
      %v2398 = vsel %vm2392, %v2397, %v2396
      %vm2399 = vcmp.lt.s32.totalorder %v2349, 0
      %v2400 = vsub.s32 0, %v2349
      %v2401 = vsel %vm2399, %v2400, %v2349
      %v2402 = vshrl.u32 %v2401, 3
      %v2403 = vand.u32 %v2401, 7
      %v2404 = vsub.s32 0, %v2403
      %v2405 = vsel %vm2399, %v2404, %v2403
      %vm2406 = vcmp.ne.s32.totalorder %v2356, 0
      %vm2407 = vcmp.ne.s32.totalorder %v2363, 0
      %vm2408 = vcmp.ne.s32.totalorder %v2370, 0
      %vm2409 = vcmp.ne.s32.totalorder %v2377, 0
      %vm2410 = vcmp.ne.s32.totalorder %v2384, 0
      %vm2411 = vcmp.ne.s32.totalorder %v2391, 0
      %vm2412 = vcmp.ne.s32.totalorder %v2398, 0
      %vm2413 = vcmp.ne.s32.totalorder %v2405, 0
      %vm2414 = vcmp.lt.s32.totalorder %v2356, 0
      %vm2415 = vcmp.lt.s32.totalorder %v2363, 0
      %vm2416 = vcmp.lt.s32.totalorder %v2370, 0
      %vm2417 = vcmp.lt.s32.totalorder %v2377, 0
      %vm2418 = vcmp.lt.s32.totalorder %v2384, 0
      %vm2419 = vcmp.lt.s32.totalorder %v2391, 0
      %vm2420 = vcmp.lt.s32.totalorder %v2398, 0
      %vm2421 = vcmp.lt.s32.totalorder %v2405, 0
      %vm2422 = vmand %vm2414, %vm2406
      %vm2423 = vmand %vm2415, %vm2407
      %vm2424 = vmand %vm2416, %vm2408
      %vm2425 = vmand %vm2417, %vm2409
      %vm2426 = vmand %vm2418, %vm2410
      %vm2427 = vmand %vm2419, %vm2411
      %vm2428 = vmand %vm2420, %vm2412
      %vm2429 = vmand %vm2421, %vm2413
      %v2430 = vadd.s32 %v2356, 8
      %v2431 = vadd.s32 %v2363, 8
      %v2432 = vadd.s32 %v2370, 8
      %v2433 = vadd.s32 %v2377, 8
      %v2434 = vadd.s32 %v2384, 8
      %v2435 = vadd.s32 %v2391, 8
      %v2436 = vadd.s32 %v2398, 8
      %v2437 = vadd.s32 %v2405, 8
      %v2438 = vsel %vm2422, %v2430, %v2356
      %v2439 = vsel %vm2423, %v2431, %v2363
      %v2440 = vsel %vm2424, %v2432, %v2370
      %v2441 = vsel %vm2425, %v2433, %v2377
      %v2442 = vsel %vm2426, %v2434, %v2384
      %v2443 = vsel %vm2427, %v2435, %v2391
      %v2444 = vsel %vm2428, %v2436, %v2398
      %v2445 = vsel %vm2429, %v2437, %v2405
      %vm2446 = vcmp.eq.s32.totalorder %v2438, 0
      %vm2447 = vcmp.eq.s32.totalorder %v2439, 0
      %vm2448 = vcmp.eq.s32.totalorder %v2440, 0
      %vm2449 = vcmp.eq.s32.totalorder %v2441, 0
      %vm2450 = vcmp.eq.s32.totalorder %v2442, 0
      %vm2451 = vcmp.eq.s32.totalorder %v2443, 0
      %vm2452 = vcmp.eq.s32.totalorder %v2444, 0
      %vm2453 = vcmp.eq.s32.totalorder %v2445, 0
      %vm2454 = vcmp.eq.s32.totalorder %v2438, 7
      %vm2455 = vcmp.eq.s32.totalorder %v2439, 7
      %vm2456 = vcmp.eq.s32.totalorder %v2440, 7
      %vm2457 = vcmp.eq.s32.totalorder %v2441, 7
      %vm2458 = vcmp.eq.s32.totalorder %v2442, 7
      %vm2459 = vcmp.eq.s32.totalorder %v2443, 7
      %vm2460 = vcmp.eq.s32.totalorder %v2444, 7
      %vm2461 = vcmp.eq.s32.totalorder %v2445, 7
      %v2462 = vld [vmem:[%s10] sm:$0xff]
      %v2463 = vld [vmem:[%s10 + $0x8] sm:$0x1]
      %v2464 = vperm.slane %v2462, 4
      %v2465 = vmul.f32 %v2310, %v2464
      %v2466 = vmul.f32 %v2312, %v2464
      %v2467 = vmul.f32 %v2315, %v2464
      %v2468 = vmul.f32 %v2317, %v2464
      %v2469 = vmul.f32 %v2320, %v2464
      %v2470 = vmul.f32 %v2322, %v2464
      %v2471 = vmul.f32 %v2325, %v2464
      %v2472 = vmul.f32 %v2327, %v2464
      %v2473 = vld [vmem:[#allocation2 + $0x7] sm:$0xff]
      %v2474 = vld [vmem:[#allocation2 + $0xf] sm:$0xff]
      %v2475 = vld [vmem:[#allocation2 + $0x17] sm:$0xff]
      %v2476 = vld [vmem:[#allocation2 + $0x1f] sm:$0xff]
      %v2477 = vld [vmem:[#allocation2 + $0x27] sm:$0xff]
      %v2478 = vld [vmem:[#allocation2 + $0x2f] sm:$0xff]
      %v2479 = vld [vmem:[#allocation2 + $0x37] sm:$0xff]
      %v2480 = vld [vmem:[#allocation2 + $0x3f] sm:$0xff]
      %v2481 = vsel %vm2446, 1, 0
      %v2482 = vsel %vm2447, 1, 0
      %v2483 = vsel %vm2448, 1, 0
      %v2484 = vsel %vm2449, 1, 0
      %v2485 = vsel %vm2450, 1, 0
      %v2486 = vsel %vm2451, 1, 0
      %v2487 = vsel %vm2452, 1, 0
      %v2488 = vsel %vm2453, 1, 0
      %vm2489 = vcmp.eq.s32.totalorder %v2481, 1
      %vm2490 = vcmp.eq.s32.totalorder %v2482, 1
      %vm2491 = vcmp.eq.s32.totalorder %v2483, 1
      %vm2492 = vcmp.eq.s32.totalorder %v2484, 1
      %vm2493 = vcmp.eq.s32.totalorder %v2485, 1
      %vm2494 = vcmp.eq.s32.totalorder %v2486, 1
      %vm2495 = vcmp.eq.s32.totalorder %v2487, 1
      %vm2496 = vcmp.eq.s32.totalorder %v2488, 1
      %v2497 = vsel %vm2489, 0.0, %v2473
      %v2498 = vsel %vm2490, 0.0, %v2474
      %v2499 = vsel %vm2491, 0.0, %v2475
      %v2500 = vsel %vm2492, 0.0, %v2476
      %v2501 = vsel %vm2493, 0.0, %v2477
      %v2502 = vsel %vm2494, 0.0, %v2478
      %v2503 = vsel %vm2495, 0.0, %v2479
      %v2504 = vsel %vm2496, 0.0, %v2480
      %v2505 = vperm.slane %v2462, 0
      %v2506 = vmul.f32 %v2497, %v2505
      %v2507 = vmul.f32 %v2498, %v2505
      %v2508 = vmul.f32 %v2499, %v2505
      %v2509 = vmul.f32 %v2500, %v2505
      %v2510 = vmul.f32 %v2501, %v2505
      %v2511 = vmul.f32 %v2502, %v2505
      %v2512 = vmul.f32 %v2503, %v2505
      %v2513 = vmul.f32 %v2504, %v2505
      %v2514 = vadd.f32 %v2465, %v2506
      %v2515 = vadd.f32 %v2466, %v2507
      %v2516 = vadd.f32 %v2467, %v2508
      %v2517 = vadd.f32 %v2468, %v2509
      %v2518 = vadd.f32 %v2469, %v2510
      %v2519 = vadd.f32 %v2470, %v2511
      %v2520 = vadd.f32 %v2471, %v2512
      %v2521 = vadd.f32 %v2472, %v2513
      %v2522 = vld [vmem:[#allocation2 + $0x8] sm:$0xff]
      %v2523 = vld [vmem:[#allocation2 + $0x10] sm:$0xff]
      %v2524 = vld [vmem:[#allocation2 + $0x18] sm:$0xff]
      %v2525 = vld [vmem:[#allocation2 + $0x20] sm:$0xff]
      %v2526 = vld [vmem:[#allocation2 + $0x28] sm:$0xff]
      %v2527 = vld [vmem:[#allocation2 + $0x30] sm:$0xff]
      %v2528 = vld [vmem:[#allocation2 + $0x38] sm:$0xff]
      %v2529 = vld [vmem:[#allocation2 + $0x40] sm:$0xff]
      %v2530 = vperm.slane %v2462, 1
      %v2531 = vmul.f32 %v2522, %v2530
      %v2532 = vmul.f32 %v2523, %v2530
      %v2533 = vmul.f32 %v2524, %v2530
      %v2534 = vmul.f32 %v2525, %v2530
      %v2535 = vmul.f32 %v2526, %v2530
      %v2536 = vmul.f32 %v2527, %v2530
      %v2537 = vmul.f32 %v2528, %v2530
      %v2538 = vmul.f32 %v2529, %v2530
      %v2539 = vadd.f32 %v2514, %v2531
      %v2540 = vadd.f32 %v2515, %v2532
      %v2541 = vadd.f32 %v2516, %v2533
      %v2542 = vadd.f32 %v2517, %v2534
      %v2543 = vadd.f32 %v2518, %v2535
      %v2544 = vadd.f32 %v2519, %v2536
      %v2545 = vadd.f32 %v2520, %v2537
      %v2546 = vadd.f32 %v2521, %v2538
      %v2547 = vld [vmem:[#allocation2 + $0x9] sm:$0xff]
      %v2548 = vld [vmem:[#allocation2 + $0x11] sm:$0xff]
      %v2549 = vld [vmem:[#allocation2 + $0x19] sm:$0xff]
      %v2550 = vld [vmem:[#allocation2 + $0x21] sm:$0xff]
      %v2551 = vld [vmem:[#allocation2 + $0x29] sm:$0xff]
      %v2552 = vld [vmem:[#allocation2 + $0x31] sm:$0xff]
      %v2553 = vld [vmem:[#allocation2 + $0x39] sm:$0xff]
      %v2554 = vld [vmem:[#allocation2 + $0x41] sm:$0xff]
      %v2555 = vsel %vm2454, 1, 0
      %v2556 = vsel %vm2455, 1, 0
      %v2557 = vsel %vm2456, 1, 0
      %v2558 = vsel %vm2457, 1, 0
      %v2559 = vsel %vm2458, 1, 0
      %v2560 = vsel %vm2459, 1, 0
      %v2561 = vsel %vm2460, 1, 0
      %v2562 = vsel %vm2461, 1, 0
      %vm2563 = vcmp.eq.s32.totalorder %v2555, 1
      %vm2564 = vcmp.eq.s32.totalorder %v2556, 1
      %vm2565 = vcmp.eq.s32.totalorder %v2557, 1
      %vm2566 = vcmp.eq.s32.totalorder %v2558, 1
      %vm2567 = vcmp.eq.s32.totalorder %v2559, 1
      %vm2568 = vcmp.eq.s32.totalorder %v2560, 1
      %vm2569 = vcmp.eq.s32.totalorder %v2561, 1
      %vm2570 = vcmp.eq.s32.totalorder %v2562, 1
      %v2571 = vsel %vm2563, 0.0, %v2547
      %v2572 = vsel %vm2564, 0.0, %v2548
      %v2573 = vsel %vm2565, 0.0, %v2549
      %v2574 = vsel %vm2566, 0.0, %v2550
      %v2575 = vsel %vm2567, 0.0, %v2551
      %v2576 = vsel %vm2568, 0.0, %v2552
      %v2577 = vsel %vm2569, 0.0, %v2553
      %v2578 = vsel %vm2570, 0.0, %v2554
      %v2579 = vperm.slane %v2462, 2
      %v2580 = vmul.f32 %v2571, %v2579
      %v2581 = vmul.f32 %v2572, %v2579
      %v2582 = vmul.f32 %v2573, %v2579
      %v2583 = vmul.f32 %v2574, %v2579
      %v2584 = vmul.f32 %v2575, %v2579
      %v2585 = vmul.f32 %v2576, %v2579
      %v2586 = vmul.f32 %v2577, %v2579
      %v2587 = vmul.f32 %v2578, %v2579
      %v2588 = vadd.f32 %v2539, %v2580
      %v2589 = vadd.f32 %v2540, %v2581
      %v2590 = vadd.f32 %v2541, %v2582
      %v2591 = vadd.f32 %v2542, %v2583
      %v2592 = vadd.f32 %v2543, %v2584
      %v2593 = vadd.f32 %v2544, %v2585
      %v2594 = vadd.f32 %v2545, %v2586
      %v2595 = vadd.f32 %v2546, %v2587
      %v2596 = vld [vmem:[#allocation2 + $0x47] sm:$0xff]
      %v2597 = vsel %vm2489, 0.0, %v2474
      %v2598 = vsel %vm2490, 0.0, %v2475
      %v2599 = vsel %vm2491, 0.0, %v2476
      %v2600 = vsel %vm2492, 0.0, %v2477
      %v2601 = vsel %vm2493, 0.0, %v2478
      %v2602 = vsel %vm2494, 0.0, %v2479
      %v2603 = vsel %vm2495, 0.0, %v2480
      %v2604 = vsel %vm2496, 0.0, %v2596
      %v2605 = vperm.slane %v2462, 3
      %v2606 = vmul.f32 %v2597, %v2605
      %v2607 = vmul.f32 %v2598, %v2605
      %v2608 = vmul.f32 %v2599, %v2605
      %v2609 = vmul.f32 %v2600, %v2605
      %v2610 = vmul.f32 %v2601, %v2605
      %v2611 = vmul.f32 %v2602, %v2605
      %v2612 = vmul.f32 %v2603, %v2605
      %v2613 = vmul.f32 %v2604, %v2605
      %v2614 = vadd.f32 %v2588, %v2606
      %v2615 = vadd.f32 %v2589, %v2607
      %v2616 = vadd.f32 %v2590, %v2608
      %v2617 = vadd.f32 %v2591, %v2609
      %v2618 = vadd.f32 %v2592, %v2610
      %v2619 = vadd.f32 %v2593, %v2611
      %v2620 = vadd.f32 %v2594, %v2612
      %v2621 = vadd.f32 %v2595, %v2613
      %v2622 = vld [vmem:[#allocation2 + $0x49] sm:$0xff]
      %v2623 = vsel %vm2563, 0.0, %v2548
      %v2624 = vsel %vm2564, 0.0, %v2549
      %v2625 = vsel %vm2565, 0.0, %v2550
      %v2626 = vsel %vm2566, 0.0, %v2551
      %v2627 = vsel %vm2567, 0.0, %v2552
      %v2628 = vsel %vm2568, 0.0, %v2553
      %v2629 = vsel %vm2569, 0.0, %v2554
      %v2630 = vsel %vm2570, 0.0, %v2622
      %v2631 = vperm.slane %v2462, 5
      %v2632 = vmul.f32 %v2623, %v2631
      %v2633 = vmul.f32 %v2624, %v2631
      %v2634 = vmul.f32 %v2625, %v2631
      %v2635 = vmul.f32 %v2626, %v2631
      %v2636 = vmul.f32 %v2627, %v2631
      %v2637 = vmul.f32 %v2628, %v2631
      %v2638 = vmul.f32 %v2629, %v2631
      %v2639 = vmul.f32 %v2630, %v2631
      %v2640 = vadd.f32 %v2614, %v2632
      %v2641 = vadd.f32 %v2615, %v2633
      %v2642 = vadd.f32 %v2616, %v2634
      %v2643 = vadd.f32 %v2617, %v2635
      %v2644 = vadd.f32 %v2618, %v2636
      %v2645 = vadd.f32 %v2619, %v2637
      %v2646 = vadd.f32 %v2620, %v2638
      %v2647 = vadd.f32 %v2621, %v2639
      %v2648 = vld [vmem:[#allocation2 + $0x4f] sm:$0xff]
      %v2649 = vsel %vm2489, 0.0, %v2475
      %v2650 = vsel %vm2490, 0.0, %v2476
      %v2651 = vsel %vm2491, 0.0, %v2477
      %v2652 = vsel %vm2492, 0.0, %v2478
      %v2653 = vsel %vm2493, 0.0, %v2479
      %v2654 = vsel %vm2494, 0.0, %v2480
      %v2655 = vsel %vm2495, 0.0, %v2596
      %v2656 = vsel %vm2496, 0.0, %v2648
      %v2657 = vperm.slane %v2462, 6
      %v2658 = vmul.f32 %v2649, %v2657
      %v2659 = vmul.f32 %v2650, %v2657
      %v2660 = vmul.f32 %v2651, %v2657
      %v2661 = vmul.f32 %v2652, %v2657
      %v2662 = vmul.f32 %v2653, %v2657
      %v2663 = vmul.f32 %v2654, %v2657
      %v2664 = vmul.f32 %v2655, %v2657
      %v2665 = vmul.f32 %v2656, %v2657
      %v2666 = vadd.f32 %v2640, %v2658
      %v2667 = vadd.f32 %v2641, %v2659
      %v2668 = vadd.f32 %v2642, %v2660
      %v2669 = vadd.f32 %v2643, %v2661
      %v2670 = vadd.f32 %v2644, %v2662
      %v2671 = vadd.f32 %v2645, %v2663
      %v2672 = vadd.f32 %v2646, %v2664
      %v2673 = vadd.f32 %v2647, %v2665
      %v2674 = vld [vmem:[#allocation2 + $0x48] sm:$0xff]
      %v2675 = vld [vmem:[#allocation2 + $0x50] sm:$0xff]
      %v2676 = vperm.slane %v2462, 7
      %v2677 = vmul.f32 %v2524, %v2676
      %v2678 = vmul.f32 %v2525, %v2676
      %v2679 = vmul.f32 %v2526, %v2676
      %v2680 = vmul.f32 %v2527, %v2676
      %v2681 = vmul.f32 %v2528, %v2676
      %v2682 = vmul.f32 %v2529, %v2676
      %v2683 = vmul.f32 %v2674, %v2676
      %v2684 = vmul.f32 %v2675, %v2676
      %v2685 = vadd.f32 %v2666, %v2677
      %v2686 = vadd.f32 %v2667, %v2678
      %v2687 = vadd.f32 %v2668, %v2679
      %v2688 = vadd.f32 %v2669, %v2680
      %v2689 = vadd.f32 %v2670, %v2681
      %v2690 = vadd.f32 %v2671, %v2682
      %v2691 = vadd.f32 %v2672, %v2683
      %v2692 = vadd.f32 %v2673, %v2684
      %v2693 = vld [vmem:[#allocation2 + $0x51] sm:$0xff]
      %v2694 = vsel %vm2563, 0.0, %v2549
      %v2695 = vsel %vm2564, 0.0, %v2550
      %v2696 = vsel %vm2565, 0.0, %v2551
      %v2697 = vsel %vm2566, 0.0, %v2552
      %v2698 = vsel %vm2567, 0.0, %v2553
      %v2699 = vsel %vm2568, 0.0, %v2554
      %v2700 = vsel %vm2569, 0.0, %v2622
      %v2701 = vsel %vm2570, 0.0, %v2693
      %v2702 = vperm.slane %v2463, 0
      %v2703 = vmul.f32 %v2694, %v2702
      %v2704 = vmul.f32 %v2695, %v2702
      %v2705 = vmul.f32 %v2696, %v2702
      %v2706 = vmul.f32 %v2697, %v2702
      %v2707 = vmul.f32 %v2698, %v2702
      %v2708 = vmul.f32 %v2699, %v2702
      %v2709 = vmul.f32 %v2700, %v2702
      %v2710 = vmul.f32 %v2701, %v2702
      %v2711 = vadd.f32 %v2685, %v2703
      %v2712 = vadd.f32 %v2686, %v2704
      %v2713 = vadd.f32 %v2687, %v2705
      %v2714 = vadd.f32 %v2688, %v2706
      %v2715 = vadd.f32 %v2689, %v2707
      %v2716 = vadd.f32 %v2690, %v2708
      %v2717 = vadd.f32 %v2691, %v2709
      %v2718 = vadd.f32 %v2692, %v2710
      %v2719 = vld [vmem:[%s11] sm:$0x1]
      %v2721 = vperm.slane %v2719, 0
      %v2723 = vadd.f32 %v2711, %v2721
      %v2724 = vadd.f32 %v2712, %v2721
      %v2725 = vadd.f32 %v2713, %v2721
      %v2726 = vadd.f32 %v2714, %v2721
      %v2727 = vadd.f32 %v2715, %v2721
      %v2728 = vadd.f32 %v2716, %v2721
      %v2729 = vadd.f32 %v2717, %v2721
      %v2730 = vadd.f32 %v2718, %v2721
      %v2731 = vmul.f32 %v2723, 0.5
      %v2732 = vmul.f32 %v2724, 0.5
      %v2733 = vmul.f32 %v2725, 0.5
      %v2734 = vmul.f32 %v2726, 0.5
      %v2735 = vmul.f32 %v2727, 0.5
      %v2736 = vmul.f32 %v2728, 0.5
      %v2737 = vmul.f32 %v2729, 0.5
      %v2738 = vmul.f32 %v2730, 0.5
      %v2739 = vmul.f32 %v2723, %v2723
      %v2740 = vmul.f32 %v2724, %v2724
      %v2741 = vmul.f32 %v2725, %v2725
      %v2742 = vmul.f32 %v2726, %v2726
      %v2743 = vmul.f32 %v2727, %v2727
      %v2744 = vmul.f32 %v2728, %v2728
      %v2745 = vmul.f32 %v2729, %v2729
      %v2746 = vmul.f32 %v2730, %v2730
      %v2747 = vmul.f32 %v2739, %v2723
      %v2748 = vmul.f32 %v2740, %v2724
      %v2749 = vmul.f32 %v2741, %v2725
      %v2750 = vmul.f32 %v2742, %v2726
      %v2751 = vmul.f32 %v2743, %v2727
      %v2752 = vmul.f32 %v2744, %v2728
      %v2753 = vmul.f32 %v2745, %v2729
      %v2754 = vmul.f32 %v2746, %v2730
      %v2755 = vmul.f32 %v2747, 0.044715
      %v2756 = vmul.f32 %v2748, 0.044715
      %v2757 = vmul.f32 %v2749, 0.044715
      %v2758 = vmul.f32 %v2750, 0.044715
      %v2759 = vmul.f32 %v2751, 0.044715
      %v2760 = vmul.f32 %v2752, 0.044715
      %v2761 = vmul.f32 %v2753, 0.044715
      %v2762 = vmul.f32 %v2754, 0.044715
      %v2763 = vadd.f32 %v2723, %v2755
      %v2764 = vadd.f32 %v2724, %v2756
      %v2765 = vadd.f32 %v2725, %v2757
      %v2766 = vadd.f32 %v2726, %v2758
      %v2767 = vadd.f32 %v2727, %v2759
      %v2768 = vadd.f32 %v2728, %v2760
      %v2769 = vadd.f32 %v2729, %v2761
      %v2770 = vadd.f32 %v2730, %v2762
      %v2771 = vmul.f32 %v2763, 0.7978846
      %v2772 = vmul.f32 %v2764, 0.7978846
      %v2773 = vmul.f32 %v2765, 0.7978846
      %v2774 = vmul.f32 %v2766, 0.7978846
      %v2775 = vmul.f32 %v2767, 0.7978846
      %v2776 = vmul.f32 %v2768, 0.7978846
      %v2777 = vmul.f32 %v2769, 0.7978846
      %v2778 = vmul.f32 %v2770, 0.7978846
      %v2779 = vtanh.pop %v2771
      %v2780 = vtanh.pop %v2772
      %v2781 = vtanh.pop %v2773
      %v2782 = vtanh.pop %v2774
      %v2783 = vtanh.pop %v2775
      %v2784 = vtanh.pop %v2776
      %v2785 = vtanh.pop %v2777
      %v2786 = vtanh.pop %v2778
      %v2787 = vadd.f32 %v2779, 1.0
      %v2788 = vadd.f32 %v2780, 1.0
      %v2789 = vadd.f32 %v2781, 1.0
      %v2790 = vadd.f32 %v2782, 1.0
      %v2791 = vadd.f32 %v2783, 1.0
      %v2792 = vadd.f32 %v2784, 1.0
      %v2793 = vadd.f32 %v2785, 1.0
      %v2794 = vadd.f32 %v2786, 1.0
      %v2795 = vmul.f32 %v2731, %v2787
      %v2796 = vmul.f32 %v2732, %v2788
      %v2797 = vmul.f32 %v2733, %v2789
      %v2798 = vmul.f32 %v2734, %v2790
      %v2799 = vmul.f32 %v2735, %v2791
      %v2800 = vmul.f32 %v2736, %v2792
      %v2801 = vmul.f32 %v2737, %v2793
      %v2802 = vmul.f32 %v2738, %v2794
      %v2803 = vpack.c.bf16 %v2796, %v2795
      %v2804 = vpack.c.bf16 %v2798, %v2797
      %v2805 = vpack.c.bf16 %v2800, %v2799
      %v2806 = vpack.c.bf16 %v2802, %v2801
      %v2807 = vld [vmem:[%s12] sm:$0xf]
      %v2808 = vld [vmem:[%s12 + $0x4] sm:$0xf]
      %v2809 = vld [vmem:[%s12 + $0x8] sm:$0xf]
      %v2810 = vld [vmem:[%s12 + $0xc] sm:$0xf]
      %v2811 = vld [vmem:[%s12 + $0x10] sm:$0xf]
      %v2812 = vld [vmem:[%s12 + $0x14] sm:$0xf]
      %v2813 = vld [vmem:[%s12 + $0x18] sm:$0xf]
      %v2814 = vld [vmem:[%s12 + $0x1c] sm:$0xf]
      %v2815 = vld [vmem:[%s12 + $0x20] sm:$0xf]
      %v2816 = vld [vmem:[%s12 + $0x24] sm:$0xf]
      %v2817 = vld [vmem:[%s12 + $0x28] sm:$0xf]
      %v2818 = vld [vmem:[%s12 + $0x2c] sm:$0xf]
      %v2819 = vld [vmem:[%s12 + $0x30] sm:$0xf]
      %v2820 = vld [vmem:[%s12 + $0x34] sm:$0xf]
      %v2821 = vld [vmem:[%s12 + $0x38] sm:$0xf]
      %v2822 = vld [vmem:[%s12 + $0x3c] sm:$0xf]
      %v2823 = vld [vmem:[%s13] sm:$0x1]
      %v2825 = vperm.slane %v2823, 0
      %v2843 = vunpack.c.l.b16 %v2807
      %v2844 = vunpack.c.l.b16 %v2808
      %v2845 = vunpack.c.l.b16 %v2809
      %v2846 = vunpack.c.l.b16 %v2810
      %v2847 = vunpack.c.l.b16 %v2811
      %v2848 = vunpack.c.l.b16 %v2812
      %v2849 = vunpack.c.l.b16 %v2813
      %v2850 = vunpack.c.l.b16 %v2814
      %v2851 = vunpack.c.l.b16 %v2815
      %v2852 = vunpack.c.l.b16 %v2816
      %v2853 = vunpack.c.l.b16 %v2817
      %v2854 = vunpack.c.l.b16 %v2818
      %v2855 = vunpack.c.l.b16 %v2819
      %v2856 = vunpack.c.l.b16 %v2820
      %v2857 = vunpack.c.l.b16 %v2821
      %v2858 = vunpack.c.l.b16 %v2822
      %v2859 = vpack.c.b16 %v2844, %v2843
      %v2860 = vpack.c.b16 %v2846, %v2845
      %v2861 = vpack.c.b16 %v2848, %v2847
      %v2862 = vpack.c.b16 %v2850, %v2849
      %v2863 = vpack.c.b16 %v2852, %v2851
      %v2864 = vpack.c.b16 %v2854, %v2853
      %v2865 = vpack.c.b16 %v2856, %v2855
      %v2866 = vpack.c.b16 %v2858, %v2857
      %2875 = vmatpush.bf16.msra.mxu0 %v2866
      %2876 = vmatpush.bf16.msra.mxu0 %v2865
      %2877 = vmatpush.bf16.msra.mxu0 %v2864
      %2878 = vmatpush.bf16.msra.mxu0 %v2863
      %2879 = vmatpush.bf16.msra.mxu0 %v2862
      %2880 = vmatpush.bf16.msra.mxu0 %v2861
      %2881 = vmatpush.bf16.msra.mxu0 %v2860
      %2882 = vmatpush.bf16.msra.mxu0 %v2859
      %2883 = vmatmul.bf16.gmra.mxu0 %v2803
      %v2884 = vpop.f32.mrf.mxu0
      %v2885 = vadd.f32 %v2825, %v2884
      %v2886 = vpop.f32.mrf.mxu0
      %v2887 = vadd.f32 %v2825, %v2886
      %2888 = vmatmul.bf16.gmra.mxu0 %v2804
      %v2889 = vpop.f32.mrf.mxu0
      %v2890 = vadd.f32 %v2825, %v2889
      %v2891 = vpop.f32.mrf.mxu0
      %v2892 = vadd.f32 %v2825, %v2891
      %2893 = vmatmul.bf16.gmra.mxu0 %v2805
      %v2894 = vpop.f32.mrf.mxu0
      %v2895 = vadd.f32 %v2825, %v2894
      %v2896 = vpop.f32.mrf.mxu0
      %v2897 = vadd.f32 %v2825, %v2896
      %2898 = vmatmul.bf16.gmra.mxu0 %v2806
      %v2899 = vpop.f32.mrf.mxu0
      %v2900 = vadd.f32 %v2825, %v2899
      %v2901 = vpop.f32.mrf.mxu0
      %v2902 = vadd.f32 %v2825, %v2901
      %2903 = vdwg.mxu0
      %v2904 = vadd.f32 %v2080, %v2885
      %v2905 = vadd.f32 %v2081, %v2887
      %v2906 = vadd.f32 %v2082, %v2890
      %v2907 = vadd.f32 %v2083, %v2892
      %v2908 = vadd.f32 %v2084, %v2895
      %v2909 = vadd.f32 %v2085, %v2897
      %v2910 = vadd.f32 %v2086, %v2900
      %v2911 = vadd.f32 %v2087, %v2902
      %2912 = vst.msk [vmem:[%s487] sm:$0xff] %vm505, %v2904
      %2913 = vst.msk [vmem:[%s487 + $0x8] sm:$0xff] %vm505, %v2905
      %2914 = vst.msk [vmem:[%s487 + $0x10] sm:$0xff] %vm505, %v2906
      %2915 = vst.msk [vmem:[%s487 + $0x18] sm:$0xff] %vm505, %v2907
      %2916 = vst.msk [vmem:[%s487 + $0x20] sm:$0xff] %vm505, %v2908
      %2917 = vst.msk [vmem:[%s487 + $0x28] sm:$0xff] %vm505, %v2909
      %2918 = vst.msk [vmem:[%s487 + $0x30] sm:$0xff] %vm505, %v2910
      %2919 = vst.msk [vmem:[%s487 + $0x38] sm:$0xff] %vm505, %v2911
      %p2920 = scmp.lt.s32.totalorder %s25, 1
      %s2921 = scalar_select %p2920, %s25, 1
      %s2922 = smul.addr %s2921, 8
      %s2923 = smul.addr %s2922, 8
      %s2924 = scalar_lea.vmem %s14, %s2923
      // Predicated region
      $region77: #{tpu_custom_call.1} parent=75 // pred_check
        %p2925 = pneg %p347
      $region78: #{tpu_custom_call.1} parent=75 // pred_check_branch
        %2927 = sbr.rel (%p2925) target = $region80
      $region79: #{tpu_custom_call.1} parent=75 // pred_region
        _
      $region80: #{tpu_custom_call.1} parent=75 // pred_fallthru
        _
    $region76: #{tpu_custom_call.1} parent=5 // pred_fallthru
      _
    %p2928 = scmp.le.s32.totalorder 2, %s20
    // Predicated region
    $region81: #{tpu_custom_call.1} parent=5 // pred_check
      %p2929 = pneg %p2928
    $region82: #{tpu_custom_call.1} parent=5 // pred_check_branch
      %2931 = sbr.rel (%p2929) target = $region84
    $region83: #{tpu_custom_call.1} parent=5 // pred_region
      %s2932 = ssub.s32 %s20, 2
      // Predicated region
      $region85: #{tpu_custom_call.1} parent=83 // pred_check
        %p2933 = pneg %p353
      $region86: #{tpu_custom_call.1} parent=83 // pred_check_branch
        %2935 = sbr.rel (%p2933) target = $region88
      $region87: #{tpu_custom_call.1} parent=83 // pred_region
        %p2936 = scmp.lt.s32.totalorder %s26, 1
        %s2937 = scalar_select %p2936, %s26, 1
        %s2938 = smul.addr %s2937, 8
        %s2939 = smul.addr %s2938, 8
        %s2940 = scalar_lea.vmem %s14, %s2939
      $region88: #{tpu_custom_call.1} parent=83 // pred_fallthru
        _
    $region84: #{tpu_custom_call.1} parent=5 // pred_fallthru
      _
  $region6: #{tpu_custom_call.1} parent=0 // loop_footer
    %s24 = sadd.s32 1, %s20
  $region7: #{tpu_custom_call.1} parent=0 // loop_footer_branch
    %19 = sbr.rel target = $region3
  $region8: #{tpu_custom_call.1} parent=0 // loop_exit
    _

</llo_original>
